<compile_context>
chip_gen: v6e
topology: v6e:2x2x1
jax: 0.10.0
libtpu: 0.0.40
codegen_flags: <defaults>
</compile_context>

<pallas_src>
import functools

import jax
import jax.numpy as jnp
from jax.experimental import pallas as pl
from jax.experimental.pallas import tpu as pltpu

_EPS = 1e-5      # nn.BatchNorm2d default eps
_LANE = 128


def _round_up(x, m):
    return ((x + m - 1) // m) * m


# ---------------------------------------------------------------------------
# Kernel 1: conv1 (3x3, pad=1) fused with the 1x1 skip conv -> one MXU dot per
# tile, plus per-tile BN partial statistics (phase 1 of the two-phase BN).
# ---------------------------------------------------------------------------
def _conv1_skip_kernel(x_ref, wc_ref, y_ref, st_ref, *, hw, w_img, co):
    x = x_ref[0]                                    # (HW, CP), compute dtype
    r = jax.lax.broadcasted_iota(jnp.int32, (hw, 1), 0)

    # ky taps: +-1 image-row shifts are +-W-row rotations of the flattened tile
    # (XLU sublane roll) with the wrapped halo rows masked to the conv zero-pad.
    x_up = jnp.where(r >= w_img, pltpu.roll(x, shift=w_img, axis=0), 0.0)           # x[h-1]
    x_dn = jnp.where(r < hw - w_img, pltpu.roll(x, shift=hw - w_img, axis=0), 0.0)  # x[h+1]
    xcat = jnp.concatenate([x_up, x, x_dn], axis=-1)            # (HW, 3*CP)

    # One fat dot: output lanes = [conv1 kx=0 | kx=1 | kx=2 | skip], f32 accumulation.
    q = jnp.dot(xcat, wc_ref[...], preferred_element_type=jnp.float32)

    # kx partials sit in 128-aligned lane blocks; +-1 column shifts are +-1-row
    # rolls of the flattened image with the image-border columns masked.
    col = r % w_img
    p0 = jnp.where(col != 0, pltpu.roll(q[:, 0:co], shift=1, axis=0), 0.0)
    p2 = jnp.where(col != w_img - 1,
                   pltpu.roll(q[:, 2 * co:3 * co], shift=hw - 1, axis=0), 0.0)
    a1 = q[:, co:2 * co] + p0 + p2      # conv1 pre-BN (bias dropped: train-BN cancels it)
    skip = q[:, 3 * co:4 * co]          # 1x1 skip conv (bias=False in the module)

    y = jnp.concatenate([a1, skip], axis=-1)        # (HW, 2*CO)
    y_ref[0] = y

    # Per-tile partial sums for BN1 / BN_skip (combined globally in the wrapper).
    s = jnp.sum(y, axis=0, keepdims=True)
    ss = jnp.sum(y * y, axis=0, keepdims=True)
    st_ref[0] = jnp.concatenate([s, ss, jnp.zeros((6, 2 * co), jnp.float32)], axis=0)


# ---------------------------------------------------------------------------
# Kernel 2: BN1 affine + ReLU -> conv2 (3x3, pad=1) as one K=3*CO dot, plus
# per-tile BN2 partial statistics.
# ---------------------------------------------------------------------------
def _conv2_kernel(a1_ref, aff1_ref, w2_ref, a2_ref, st_ref, *, hw, w_img, co, cdt):
    a1 = a1_ref[0]                                  # (HW, CO), f32
    h1 = jnp.maximum(a1 * aff1_ref[0:1, :] + aff1_ref[1:2, :], 0.0).astype(cdt)

    r = jax.lax.broadcasted_iota(jnp.int32, (hw, 1), 0)
    h_up = jnp.where(r >= w_img, pltpu.roll(h1, shift=w_img, axis=0), 0.0)
    h_dn = jnp.where(r < hw - w_img, pltpu.roll(h1, shift=hw - w_img, axis=0), 0.0)
    hcat = jnp.concatenate([h_up, h1, h_dn], axis=-1)           # (HW, 3*CO)

    q = jnp.dot(hcat, w2_ref[...], preferred_element_type=jnp.float32)   # (HW, 3*CO)

    col = r % w_img
    p0 = jnp.where(col != 0, pltpu.roll(q[:, 0:co], shift=1, axis=0), 0.0)
    p2 = jnp.where(col != w_img - 1,
                   pltpu.roll(q[:, 2 * co:3 * co], shift=hw - 1, axis=0), 0.0)
    a2 = q[:, co:2 * co] + p0 + p2      # conv2 pre-BN (bias dropped: BN cancels it)
    a2_ref[0] = a2

    s = jnp.sum(a2, axis=0, keepdims=True)
    ss = jnp.sum(a2 * a2, axis=0, keepdims=True)
    st_ref[0] = jnp.concatenate([s, ss, jnp.zeros((6, co), jnp.float32)], axis=0)


# ---------------------------------------------------------------------------
# Kernel 3: BN2(residual) + BN_skip(skip) + add + final ReLU (pure VPU).
# ---------------------------------------------------------------------------
def _bn_add_relu_kernel(a2_ref, skip_ref, aff2_ref, affs_ref, out_ref):
    res = a2_ref[0] * aff2_ref[0:1, :] + aff2_ref[1:2, :]
    sk = skip_ref[0] * affs_ref[0:1, :] + affs_ref[1:2, :]
    out_ref[0] = jnp.maximum(res + sk, 0.0)


# ---------------------------------------------------------------------------
# Wrapper
# ---------------------------------------------------------------------------
def _pad_vec(v, c):
    return jnp.zeros((c,), jnp.float32).at[: v.shape[0]].set(v.astype(jnp.float32))


def _bn_affine(stats_tot, count, gamma, beta):
    # Phase 2 of the two-phase BN (global train-mode statistics, biased variance).
    # Note: E[x^2]-mean^2 is cancellation-prone for large-mean activations; fine at
    # these scales — switch to two-pass/Welford partials if that ever matters.
    mean = stats_tot[0] / count
    var = jnp.maximum(stats_tot[1] / count - mean * mean, 0.0)
    scale = gamma * jax.lax.rsqrt(var + _EPS)
    shift = beta - mean * scale
    c = gamma.shape[0]
    return jnp.zeros((8, c), jnp.float32).at[0].set(scale).at[1].set(shift)


def residual_block_forward(x_nchw, params, *, use_bf16_matmul=False):
    """PyTorch-shaped entry point: x is NCHW, params use torch Conv2d layouts.

    use_bf16_matmul: cast MXU inputs (activations / weights) to bf16 with f32
    accumulation and f32 BN statistics — recommended on v6e / v7x; the default
    keeps f32 parity with the PyTorch module.
    """
    n, c_in, h, w = x_nchw.shape
    c_out = params["w1"].shape[0]
    hw = h * w
    cp = _round_up(c_in, _LANE)       # lane-padded input channels
    co = _round_up(c_out, _LANE)      # lane-padded output channels
    cdt = jnp.bfloat16 if use_bf16_matmul else jnp.float32
    count = float(n * hw)

    # ---- lane-padded, flattened NHWC input (im2col happens inside the kernel) ----
    # TODO(synk): for tiny Cin the lane padding dominates HBM bytes; a sublane-packed
    # small-channel layout would avoid it.
    x_nhwc = jnp.transpose(x_nchw, (0, 2, 3, 1)).astype(jnp.float32)
    x_in = jnp.zeros((n, hw, cp), jnp.float32).at[:, :, :c_in].set(
        x_nhwc.reshape(n, hw, c_in)).astype(cdt)

    # ---- combined conv1 + skip weight: rows = [ky0 | ky1 | ky2] blocks of the padded
    #      input channels; lanes = [kx0 | kx1 | kx2 | skip] output blocks ----
    w1t = jnp.transpose(params["w1"], (2, 3, 1, 0))            # (ky, kx, Cin, Cout)
    wc = jnp.zeros((3 * cp, 4 * co), jnp.float32)
    for ky in range(3):
        for kx in range(3):
            wc = wc.at[ky * cp:ky * cp + c_in,
                       kx * co:kx * co + c_out].set(w1t[ky, kx])
    ws = jnp.transpose(params["ws"].reshape(c_out, c_in), (1, 0))   # (Cin, Cout)
    wc = wc.at[cp:cp + c_in, 3 * co:3 * co + c_out].set(ws)         # centre tap only
    wc = wc.astype(cdt)

    # ---- conv2 weight as one (3*CO, 3*CO) matrix (K=3*CO fills the 256-deep MXU) ----
    w2t = jnp.transpose(params["w2"], (2, 3, 1, 0))
    w2c = jnp.zeros((3 * co, 3 * co), jnp.float32)
    for ky in range(3):
        for kx in range(3):
            w2c = w2c.at[ky * co:ky * co + c_out,
                         kx * co:kx * co + c_out].set(w2t[ky, kx])
    w2c = w2c.astype(cdt)

    par = pltpu.CompilerParams(dimension_semantics=("parallel",))   # megacore on v7x

    # ---------------- call 1: conv1 + skip, BN partial statistics ----------------
    y1, st1 = pl.pallas_call(
        functools.partial(_conv1_skip_kernel, hw=hw, w_img=w, co=co),
        grid=(n,),
        in_specs=[pl.BlockSpec((1, hw, cp), lambda i: (i, 0, 0)),
                  pl.BlockSpec((3 * cp, 4 * co), lambda i: (0, 0))],
        out_specs=[pl.BlockSpec((1, hw, 2 * co), lambda i: (i, 0, 0)),
                   pl.BlockSpec((1, 8, 2 * co), lambda i: (i, 0, 0))],
        out_shape=[jax.ShapeDtypeStruct((n, hw, 2 * co), jnp.float32),
                   jax.ShapeDtypeStruct((n, 8, 2 * co), jnp.float32)],
        compiler_params=par,
    )(x_in, wc)

    st1_tot = jnp.sum(st1, axis=0)                                   # (8, 2*CO), tiny
    aff1 = _bn_affine(st1_tot[:, :co], count,
                      _pad_vec(params["g1"], co), _pad_vec(params["be1"], co))
    affs = _bn_affine(st1_tot[:, co:], count,
                      _pad_vec(params["gs"], co), _pad_vec(params["bes"], co))

    # ---------------- call 2: BN1 + ReLU -> conv2, BN2 partial statistics --------
    a2, st2 = pl.pallas_call(
        functools.partial(_conv2_kernel, hw=hw, w_img=w, co=co, cdt=cdt),
        grid=(n,),
        in_specs=[pl.BlockSpec((1, hw, co), lambda i: (i, 0, 0)),    # a1 lane-block of y1
                  pl.BlockSpec((8, co), lambda i: (0, 0)),
                  pl.BlockSpec((3 * co, 3 * co), lambda i: (0, 0))],
        out_specs=[pl.BlockSpec((1, hw, co), lambda i: (i, 0, 0)),
                   pl.BlockSpec((1, 8, co), lambda i: (i, 0, 0))],
        out_shape=[jax.ShapeDtypeStruct((n, hw, co), jnp.float32),
                   jax.ShapeDtypeStruct((n, 8, co), jnp.float32)],
        compiler_params=par,
    )(y1, aff1, w2c)

    aff2 = _bn_affine(jnp.sum(st2, axis=0), count,
                      _pad_vec(params["g2"], co), _pad_vec(params["be2"], co))

    # ---------------- call 3: BN2 + BN_skip + add + final ReLU -------------------
    out = pl.pallas_call(
        _bn_add_relu_kernel,
        grid=(n,),
        in_specs=[pl.BlockSpec((1, hw, co), lambda i: (i, 0, 0)),
                  pl.BlockSpec((1, hw, co), lambda i: (i, 0, 1)),    # skip lane-block of y1
                  pl.BlockSpec((8, co), lambda i: (0, 0)),
                  pl.BlockSpec((8, co), lambda i: (0, 0))],
        out_specs=pl.BlockSpec((1, hw, co), lambda i: (i, 0, 0)),
        out_shape=jax.ShapeDtypeStruct((n, hw, co), jnp.float32),
        compiler_params=par,
    )(a2, y1, aff2, affs)

    out = out[:, :, :c_out].reshape(n, h, w, c_out)
    return jnp.transpose(out, (0, 3, 1, 2))


# ---------------------------------------------------------------------------
# Pure-JAX reference (lax conv), mirroring the PyTorch module semantics
# (including the conv biases, which the kernels drop because train-BN cancels them).
# ---------------------------------------------------------------------------
def _reference_forward(x, p):
    def conv(x, w, b=None, pad=1):
        y = jax.lax.conv_general_dilated(
            x, w, window_strides=(1, 1), padding=[(pad, pad), (pad, pad)],
            dimension_numbers=("NCHW", "OIHW", "NCHW"))
        if b is not None:
            y = y + b[None, :, None, None]
        return y

    def bn(x, g, be):
        mean = jnp.mean(x, axis=(0, 2, 3), keepdims=True)
        var = jnp.mean(jnp.square(x - mean), axis=(0, 2, 3), keepdims=True)
        return ((x - mean) * jax.lax.rsqrt(var + _EPS)
                * g[None, :, None, None] + be[None, :, None, None])

    hmid = jnp.maximum(bn(conv(x, p["w1"], p["b1"]), p["g1"], p["be1"]), 0.0)
    r = bn(conv(hmid, p["w2"], p["b2"]), p["g2"], p["be2"])
    s = bn(conv(x, p["ws"], None, pad=0), p["gs"], p["bes"])
    return jnp.maximum(r + s, 0.0)


if __name__ == "__main__":
    in_dim, out_dim = 4, 8
    N, H, W = 2, 16, 16

    keys = jax.random.split(jax.random.PRNGKey(0), 12)
    params = {
        "w1": 0.1 * jax.random.normal(keys[0], (out_dim, in_dim, 3, 3), jnp.float32),
        "b1": 0.1 * jax.random.normal(keys[1], (out_dim,), jnp.float32),
        "g1": 1.0 + 0.1 * jax.random.normal(keys[2], (out_dim,), jnp.float32),
        "be1": 0.1 * jax.random.normal(keys[3], (out_dim,), jnp.float32),
        "w2": 0.1 * jax.random.normal(keys[4], (out_dim, out_dim, 3, 3), jnp.float32),
        "b2": 0.1 * jax.random.normal(keys[5], (out_dim,), jnp.float32),
        "g2": 1.0 + 0.1 * jax.random.normal(keys[6], (out_dim,), jnp.float32),
        "be2": 0.1 * jax.random.normal(keys[7], (out_dim,), jnp.float32),
        "ws": 0.1 * jax.random.normal(keys[8], (out_dim, in_dim, 1, 1), jnp.float32),
        "gs": 1.0 + 0.1 * jax.random.normal(keys[9], (out_dim,), jnp.float32),
        "bes": 0.1 * jax.random.normal(keys[10], (out_dim,), jnp.float32),
    }
    x = jax.random.normal(keys[11], (N, in_dim, H, W), jnp.float32)

    ref = jax.block_until_ready(_reference_forward(x, params))

    # f32 MXU-input path: tight check against the PyTorch-equivalent reference.
    out = jax.block_until_ready(residual_block_forward(x, params))
    assert out.shape == (N, out_dim, H, W), out.shape
    err_f32 = float(jnp.max(jnp.abs(out - ref)))
    assert jnp.allclose(out, ref, rtol=1e-3, atol=1e-3), err_f32

    # bf16 MXU-input path (recommended on v6e / v7x): looser numeric tolerance.
    out_bf16 = jax.block_until_ready(
        residual_block_forward(x, params, use_bf16_matmul=True))
    err_bf16 = float(jnp.max(jnp.abs(out_bf16 - ref)))
    assert jnp.allclose(out_bf16, ref, rtol=1e-1, atol=1e-1), err_bf16

    print("KERNEL_OK")
</pallas_src>

<mosaic_0001>
module attributes {stable_mosaic.version = 11 : i64} {
  func.func @_conv1_skip_kernel(%arg0: i32, %arg1: memref<1x256x128xf32, #tpu.memory_space<vmem>>, %arg2: memref<384x512xf32, #tpu.memory_space<vmem>>, %arg3: memref<1x256x256xf32, #tpu.memory_space<vmem>>, %arg4: memref<1x8x256xf32, #tpu.memory_space<vmem>>) attributes {dimension_semantics = [#tpu.dimension_semantics<parallel>], iteration_bounds = array<i64: 2>, scalar_prefetch = 0 : i64, scratch_operands = 0 : i64, tpu.core_type = #tpu.core_type<tc>, window_params = [{transform_indices = @transform_0, window_bounds = array<i64: 1, 256, 128>}, {pipeline_mode = #tpu.pipeline_mode<synchronous>, transform_indices = @transform_1, window_bounds = array<i64: 384, 512>}, {transform_indices = @transform_2, window_bounds = array<i64: 1, 256, 256>}, {transform_indices = @transform_3, window_bounds = array<i64: 1, 8, 256>}]} {
    %c0 = arith.constant 0 : index
    %c0_0 = arith.constant 0 : index
    %c0_1 = arith.constant 0 : index
    %0 = vector.load %arg1[%c0, %c0_0, %c0_1] : memref<1x256x128xf32, #tpu.memory_space<vmem>>, vector<1x256x128xf32>
    %1 = vector.shape_cast %0 : vector<1x256x128xf32> to vector<256x128xf32>
    %2 = tpu.iota {dimensions = array<i32: 0>} : vector<256x1xi32>
    %c16_i32 = arith.constant 16 : i32
    %3 = vector.broadcast %c16_i32 : i32 to vector<256x1xi32>
    %4 = arith.cmpi sge, %2, %3 : vector<256x1xi32>
    %c16_i32_2 = arith.constant 16 : i32
    %5 = tpu.dynamic_rotate %1 by %c16_i32_2 dim 0 : vector<256x128xf32>, i32 -> vector<256x128xf32>
    %cst = arith.constant 0.000000e+00 : f32
    %6 = vector.shape_cast %4 : vector<256x1xi1> to vector<256x1xi1>
    %7 = vector.broadcast %6 : vector<256x1xi1> to vector<256x128xi1>
    %8 = vector.broadcast %cst : f32 to vector<256x128xf32>
    %9 = arith.select %7, %5, %8 : vector<256x128xi1>, vector<256x128xf32>
    %c240_i32 = arith.constant 240 : i32
    %10 = vector.broadcast %c240_i32 : i32 to vector<256x1xi32>
    %11 = arith.cmpi slt, %2, %10 : vector<256x1xi32>
    %c240_i32_3 = arith.constant 240 : i32
    %12 = tpu.dynamic_rotate %1 by %c240_i32_3 dim 0 : vector<256x128xf32>, i32 -> vector<256x128xf32>
    %cst_4 = arith.constant 0.000000e+00 : f32
    %13 = vector.shape_cast %11 : vector<256x1xi1> to vector<256x1xi1>
    %14 = vector.broadcast %13 : vector<256x1xi1> to vector<256x128xi1>
    %15 = vector.broadcast %cst_4 : f32 to vector<256x128xf32>
    %16 = arith.select %14, %12, %15 : vector<256x128xi1>, vector<256x128xf32>
    %17 = tpu.concatenate %9, %1, %16 in 1 : vector<256x128xf32>, vector<256x128xf32>, vector<256x128xf32> -> vector<256x384xf32>
    %c0_5 = arith.constant 0 : index
    %c0_6 = arith.constant 0 : index
    %18 = vector.load %arg2[%c0_5, %c0_6] : memref<384x512xf32, #tpu.memory_space<vmem>>, vector<384x512xf32>
    %cst_7 = arith.constant dense<0.000000e+00> : vector<256x512xf32>
    %19 = tpu.matmul %17, %18, %cst_7 {dimension_numbers = #tpu.dot_dimension_numbers<[1], [0], [0], [1], [0, 0, 1, 1], [], []>} : vector<256x384xf32>, vector<384x512xf32>, vector<256x512xf32> -> vector<256x512xf32>
    %c16_i32_8 = arith.constant 16 : i32
    %c0_i32 = arith.constant 0 : i32
    %20 = arith.cmpi eq, %c16_i32_8, %c0_i32 : i32
    %c1_i32 = arith.constant 1 : i32
    %21 = arith.select %20, %c1_i32, %c16_i32_8 : i32
    %22 = vector.broadcast %21 : i32 to vector<256x1xi32>
    %23 = arith.remsi %2, %22 : vector<256x1xi32>
    %c0_i32_9 = arith.constant 0 : i32
    %24 = vector.broadcast %c0_i32_9 : i32 to vector<256x1xi32>
    %25 = arith.cmpi ne, %23, %24 : vector<256x1xi32>
    %c0_i32_10 = arith.constant 0 : i32
    %26 = vector.broadcast %c0_i32_10 : i32 to vector<256x1xi32>
    %27 = arith.cmpi slt, %23, %26 : vector<256x1xi32>
    %c0_i32_11 = arith.constant 0 : i32
    %28 = arith.cmpi slt, %21, %c0_i32_11 : i32
    %29 = vector.broadcast %28 : i1 to vector<256x1xi1>
    %30 = vector.broadcast %29 : vector<256x1xi1> to vector<256x1xi1>
    %31 = arith.xori %27, %30 : vector<256x1xi1>
    %32 = arith.andi %31, %25 : vector<256x1xi1>
    %33 = vector.broadcast %21 : i32 to vector<256x1xi32>
    %34 = arith.addi %23, %33 : vector<256x1xi32>
    %35 = arith.select %32, %34, %23 : vector<256x1xi1>, vector<256x1xi32>
    %c0_i32_12 = arith.constant 0 : i32
    %36 = vector.broadcast %c0_i32_12 : i32 to vector<256x1xi32>
    %37 = arith.cmpi ne, %35, %36 : vector<256x1xi32>
    %38 = vector.extract_strided_slice %19 {offsets = [0, 0], sizes = [256, 128], strides = [1, 1]} : vector<256x512xf32> to vector<256x128xf32>
    %c1_i32_13 = arith.constant 1 : i32
    %39 = tpu.dynamic_rotate %38 by %c1_i32_13 dim 0 : vector<256x128xf32>, i32 -> vector<256x128xf32>
    %cst_14 = arith.constant 0.000000e+00 : f32
    %40 = vector.shape_cast %37 : vector<256x1xi1> to vector<256x1xi1>
    %41 = vector.broadcast %40 : vector<256x1xi1> to vector<256x128xi1>
    %42 = vector.broadcast %cst_14 : f32 to vector<256x128xf32>
    %43 = arith.select %41, %39, %42 : vector<256x128xi1>, vector<256x128xf32>
    %c15_i32 = arith.constant 15 : i32
    %44 = vector.broadcast %c15_i32 : i32 to vector<256x1xi32>
    %45 = arith.cmpi ne, %35, %44 : vector<256x1xi32>
    %46 = vector.extract_strided_slice %19 {offsets = [0, 256], sizes = [256, 128], strides = [1, 1]} : vector<256x512xf32> to vector<256x128xf32>
    %c255_i32 = arith.constant 255 : i32
    %47 = tpu.dynamic_rotate %46 by %c255_i32 dim 0 : vector<256x128xf32>, i32 -> vector<256x128xf32>
    %cst_15 = arith.constant 0.000000e+00 : f32
    %48 = vector.shape_cast %45 : vector<256x1xi1> to vector<256x1xi1>
    %49 = vector.broadcast %48 : vector<256x1xi1> to vector<256x128xi1>
    %50 = vector.broadcast %cst_15 : f32 to vector<256x128xf32>
    %51 = arith.select %49, %47, %50 : vector<256x128xi1>, vector<256x128xf32>
    %52 = vector.extract_strided_slice %19 {offsets = [0, 128], sizes = [256, 128], strides = [1, 1]} : vector<256x512xf32> to vector<256x128xf32>
    %53 = arith.addf %52, %43 : vector<256x128xf32>
    %54 = arith.addf %53, %51 : vector<256x128xf32>
    %55 = vector.extract_strided_slice %19 {offsets = [0, 384], sizes = [256, 128], strides = [1, 1]} : vector<256x512xf32> to vector<256x128xf32>
    %56 = tpu.concatenate %54, %55 in 1 : vector<256x128xf32>, vector<256x128xf32> -> vector<256x256xf32>
    %c0_16 = arith.constant 0 : index
    %c0_17 = arith.constant 0 : index
    %c0_18 = arith.constant 0 : index
    %57 = vector.load %arg3[%c0_16, %c0_17, %c0_18] : memref<1x256x256xf32, #tpu.memory_space<vmem>>, vector<1x256x256xf32>
    %58 = vector.shape_cast %57 : vector<1x256x256xf32> to vector<256x256xf32>
    %59 = vector.shape_cast %56 : vector<256x256xf32> to vector<1x256x256xf32>
    tpu.vector_store %arg3[%c0_16, %c0_17, %c0_18], %59 {strides = array<i32>} : memref<1x256x256xf32, #tpu.memory_space<vmem>>, vector<1x256x256xf32>,
    %cst_19 = arith.constant dense<0.000000e+00> : vector<256xf32>
    %60 = vector.multi_reduction <add>, %56, %cst_19 [0] : vector<256x256xf32> to vector<256xf32>
    %61 = vector.shape_cast %60 : vector<256xf32> to vector<1x256xf32>
    %62 = arith.mulf %56, %56 : vector<256x256xf32>
    %cst_20 = arith.constant dense<0.000000e+00> : vector<256xf32>
    %63 = vector.multi_reduction <add>, %62, %cst_20 [0] : vector<256x256xf32> to vector<256xf32>
    %64 = vector.shape_cast %63 : vector<256xf32> to vector<1x256xf32>
    %cst_21 = arith.constant 0.000000e+00 : f32
    %65 = vector.broadcast %cst_21 : f32 to vector<6x256xf32>
    %66 = tpu.concatenate %61, %64, %65 in 0 : vector<1x256xf32>, vector<1x256xf32>, vector<6x256xf32> -> vector<8x256xf32>
    %c0_22 = arith.constant 0 : index
    %c0_23 = arith.constant 0 : index
    %c0_24 = arith.constant 0 : index
    %67 = vector.load %arg4[%c0_22, %c0_23, %c0_24] : memref<1x8x256xf32, #tpu.memory_space<vmem>>, vector<1x8x256xf32>
    %68 = vector.shape_cast %67 : vector<1x8x256xf32> to vector<8x256xf32>
    %69 = vector.shape_cast %66 : vector<8x256xf32> to vector<1x8x256xf32>
    tpu.vector_store %arg4[%c0_22, %c0_23, %c0_24], %69 {strides = array<i32>} : memref<1x8x256xf32, #tpu.memory_space<vmem>>, vector<1x8x256xf32>,
    return
  }
  func.func @transform_0(%arg0: i32) -> (i32, i32, i32) {
    %c0_i32 = arith.constant 0 : i32
    %c0_i32_0 = arith.constant 0 : i32
    %c0_i32_1 = arith.constant 0 : i32
    return %arg0, %c0_i32, %c0_i32_0 : i32, i32, i32
  }
  func.func @transform_1(%arg0: i32) -> (i32, i32) {
    %c0_i32 = arith.constant 0 : i32
    %c0_i32_0 = arith.constant 0 : i32
    %c0_i32_1 = arith.constant 0 : i32
    return %c0_i32, %c0_i32_0 : i32, i32
  }
  func.func @transform_2(%arg0: i32) -> (i32, i32, i32) {
    %c0_i32 = arith.constant 0 : i32
    %c0_i32_0 = arith.constant 0 : i32
    %c0_i32_1 = arith.constant 0 : i32
    return %arg0, %c0_i32, %c0_i32_0 : i32, i32, i32
  }
  func.func @transform_3(%arg0: i32) -> (i32, i32, i32) {
    %c0_i32 = arith.constant 0 : i32
    %c0_i32_0 = arith.constant 0 : i32
    %c0_i32_1 = arith.constant 0 : i32
    return %arg0, %c0_i32, %c0_i32_0 : i32, i32, i32
  }
}

</mosaic_0001>

<llo_original>
// kernel: tpu_custom_call.1
$region0: #{tpu_custom_call.1}
  #allocation0 [shape = 'u32[]', space=smem, size = 0x4, offset = 0x4, fixed_abs, tag = 'smem constant byte address 0x4 - core index']
  #allocation1 [shape = 'u32[144,128]{1,0:T(1,128)}', space=vmem, size = 0x12000, scoped, tag = 'internal scratch']
  %s0 = inlined_call_operand.hbm [shape: f32[2,256,128], index: 0, kind: input, shape index: {}]
  %s1 = inlined_call_operand.hbm [shape: f32[384,512], index: 1, kind: input, shape index: {}]
  %s2 = inlined_call_operand.hbm [shape: f32[2,256,256], index: 2, kind: output, shape index: {0}]
  %s3 = inlined_call_operand.hbm [shape: f32[2,8,256], index: 3, kind: output, shape index: {1}]
  %4 = xla_tuple %s2, %s3
  %s5 = sld [smem:[#allocation0]]
  $region57: #{tpu_custom_call.1} parent=0
    _
  %s7 = ssub.s32 1, %s5
  %s8 = scalar_select 0, %s7, %s5
  $region1: #{tpu_custom_call.1} parent=0
    #allocation2 [shape = 'u8[262144]{0}', space=vmem, size = 0x40000, scoped, tag = 'input window, operand 0']
    #allocation3 [shape = 's32[2]{0}', space=sflag, size = 0x8, scoped, tag = 'scoped memory for tpu_custom_call.1']
    #allocation4 [shape = 's32[2]{0}', space=sflag, size = 0x8, scoped, tag = 'scoped memory for tpu_custom_call.1']
    #allocation5 [shape = 'u8[786432]{0}', space=vmem, size = 0xc0000, scoped, tag = 'input window, operand 1, single buffered']
    #allocation6 [shape = 's32[1]{0}', space=sflag, size = 0x4, scoped, tag = 'scoped memory for tpu_custom_call.1']
    #allocation7 [shape = 'u8[524288]{0}', space=vmem, size = 0x80000, scoped, tag = 'output window, operand 0']
    #allocation8 [shape = 'u8[16384]{0}', space=vmem, size = 0x4000, scoped, tag = 'output window, operand 1']
    #allocation9 [shape = 's32[2]{0}', space=sflag, size = 0x8, scoped, tag = 'scoped memory for tpu_custom_call.1']
    %9 = vsyncpa [#allocation3], 0
    %s10 = scalar_lea.sflag [#allocation3], 1
    %11 = vsyncpa %s10, 0
    %12 = vsyncpa [#allocation6], 0
    %13 = vsyncpa [#allocation4], 0
    %s14 = scalar_lea.sflag [#allocation4], 1
    %15 = vsyncpa %s14, 0
    %16 = vsyncpa [#allocation9], 0
    %s17 = scalar_lea.sflag [#allocation9], 1
    %18 = vsyncpa %s17, 0
    loop: start=0, step=1, limit=4
    $region2: #{tpu_custom_call.1} parent=1 // loop_pre_header
      _
    $region3: #{tpu_custom_call.1} parent=1 // loop_header
      %s20 = sphi 0, %s24
      %p21 = scmp.ge.s32.totalorder %s20, 4
      %s30 = sphi 0, %s32
      %s33 = sphi 0, %s30
      %s34 = sphi 0, %s33
      %s50 = sphi 0, %s34
      %s54 = sphi 0, %s54
      %s56 = sphi 0, %s54
      %s57 = sphi 0, %s56
      %s71 = sphi 0, %s57
      %s77 = sphi 0, %s79
      %s80 = sphi 0, %s77
      %s81 = sphi 0, %s80
      %s97 = sphi 0, %s81
      %s103 = sphi 0, %s105
      %s106 = sphi 0, %s103
      %s107 = sphi 0, %s106
      %s123 = sphi 0, %s107
    $region4: #{tpu_custom_call.1} parent=1 // loop_header_branch
      %23 = sbr.rel (%p21) target = $region8
    $region5: #{tpu_custom_call.1} parent=1 // loop_body
      %s25 = ssub.s32 %s20, 1
      %s26 = ssub.s32 %s20, 2
      %s27 = sadd.s32 %s20, 1
      %s28 = ssub.s32 %s20, %s27
      %p29 = scmp.eq.s32.totalorder %s28, 0
      %s31 = sadd.s32 %s30, 1
      %s32 = scalar_select %p29, %s30, %s31
      %p35 = pneg %p29
      %p36 = scmp.eq.s32.totalorder %s20, 1
      %p37 = por %p35, %p36
      %p38 = scmp.ne.s32.totalorder %s30, %s33
      %p39 = scmp.eq.s32.totalorder %s20, 0
      %p40 = por %p38, %p39
      %p41 = scmp.ne.s32.totalorder %s30, %s33
      %p42 = scmp.eq.s32.totalorder %s25, 1
      %p43 = por %p41, %p42
      %p44 = scmp.ne.s32.totalorder %s33, %s34
      %p45 = scmp.eq.s32.totalorder %s25, 0
      %p46 = por %p44, %p45
      %p47 = scmp.ne.s32.totalorder %s33, %s34
      %p48 = scmp.eq.s32.totalorder %s26, 1
      %p49 = por %p47, %p48
      %p51 = scmp.ne.s32.totalorder %s34, %s50
      %p52 = scmp.eq.s32.totalorder %s26, 0
      %p53 = por %p51, %p52
      %s55 = sadd.s32 %s54, 1
      %p58 = scmp.eq.s32.totalorder %s20, 1
      %p59 = scmp.ne.s32.totalorder %s54, %s56
      %p60 = scmp.eq.s32.totalorder %s20, 0
      %p61 = por %p59, %p60
      %p62 = scmp.ne.s32.totalorder %s54, %s56
      %p63 = scmp.eq.s32.totalorder %s25, 1
      %p64 = por %p62, %p63
      %p65 = scmp.ne.s32.totalorder %s56, %s57
      %p66 = scmp.eq.s32.totalorder %s25, 0
      %p67 = por %p65, %p66
      %p68 = scmp.ne.s32.totalorder %s56, %s57
      %p69 = scmp.eq.s32.totalorder %s26, 1
      %p70 = por %p68, %p69
      %p72 = scmp.ne.s32.totalorder %s57, %s71
      %p73 = scmp.eq.s32.totalorder %s26, 0
      %p74 = por %p72, %p73
      %s75 = ssub.s32 %s20, %s27
      %p76 = scmp.eq.s32.totalorder %s75, 0
      %s78 = sadd.s32 %s77, 1
      %s79 = scalar_select %p76, %s77, %s78
      %p82 = pneg %p76
      %p83 = scmp.eq.s32.totalorder %s20, 1
      %p84 = por %p82, %p83
      %p85 = scmp.ne.s32.totalorder %s77, %s80
      %p86 = scmp.eq.s32.totalorder %s20, 0
      %p87 = por %p85, %p86
      %p88 = scmp.ne.s32.totalorder %s77, %s80
      %p89 = scmp.eq.s32.totalorder %s25, 1
      %p90 = por %p88, %p89
      %p91 = scmp.ne.s32.totalorder %s80, %s81
      %p92 = scmp.eq.s32.totalorder %s25, 0
      %p93 = por %p91, %p92
      %p94 = scmp.ne.s32.totalorder %s80, %s81
      %p95 = scmp.eq.s32.totalorder %s26, 1
      %p96 = por %p94, %p95
      %p98 = scmp.ne.s32.totalorder %s81, %s97
      %p99 = scmp.eq.s32.totalorder %s26, 0
      %p100 = por %p98, %p99
      %s101 = ssub.s32 %s20, %s27
      %p102 = scmp.eq.s32.totalorder %s101, 0
      %s104 = sadd.s32 %s103, 1
      %s105 = scalar_select %p102, %s103, %s104
      %p108 = pneg %p102
      %p109 = scmp.eq.s32.totalorder %s20, 1
      %p110 = por %p108, %p109
      %p111 = scmp.ne.s32.totalorder %s103, %s106
      %p112 = scmp.eq.s32.totalorder %s20, 0
      %p113 = por %p111, %p112
      %p114 = scmp.ne.s32.totalorder %s103, %s106
      %p115 = scmp.eq.s32.totalorder %s25, 1
      %p116 = por %p114, %p115
      %p117 = scmp.ne.s32.totalorder %s106, %s107
      %p118 = scmp.eq.s32.totalorder %s25, 0
      %p119 = por %p117, %p118
      %p120 = scmp.ne.s32.totalorder %s106, %s107
      %p121 = scmp.eq.s32.totalorder %s26, 1
      %p122 = por %p120, %p121
      %p124 = scmp.ne.s32.totalorder %s107, %s123
      %p125 = scmp.eq.s32.totalorder %s26, 0
      %p126 = por %p124, %p125
      %p127 = scmp.le.s32.totalorder 1, %s20
      %p128 = scmp.lt.s32.totalorder %s20, 3
      %p129 = pnand %p127, %p128
      %p130 = pneg %p129
      // Predicated region
      $region9: #{tpu_custom_call.1} parent=5 // pred_check
        _
      $region10: #{tpu_custom_call.1} parent=5 // pred_check_branch
        %132 = sbr.rel (%p129) target = $region12
      $region11: #{tpu_custom_call.1} parent=5 // pred_region
        %s133 = ssub.s32 %s20, 1
        // Predicated region
        $region13: #{tpu_custom_call.1} parent=11 // pred_check
          %p134 = pneg %p67
        $region14: #{tpu_custom_call.1} parent=11 // pred_check_branch
          %136 = sbr.rel (%p134) target = $region16
        $region15: #{tpu_custom_call.1} parent=11 // pred_region
          %s138 = ssub.s32 24576, 24576
          %139 = vsyncadd [#allocation6], %s138
          %s140 = sshll.u32 [#allocation5], 4
          %s141 = int_to_ptr.vmem [resolvable:$true] %s140
          %146 = dma.hbm_to_vmem [thread:$0]  %s1, 24576, %s141, [#allocation6], 512, 512, 32
        $region16: #{tpu_custom_call.1} parent=11 // pred_fallthru
          _
      $region12: #{tpu_custom_call.1} parent=5 // pred_fallthru
        _
      %p147 = scmp.lt.s32.totalorder %s20, 2
      // Predicated region
      $region17: #{tpu_custom_call.1} parent=5 // pred_check
        %p148 = pneg %p147
      $region18: #{tpu_custom_call.1} parent=5 // pred_check_branch
        %150 = sbr.rel (%p148) target = $region20
      $region19: #{tpu_custom_call.1} parent=5 // pred_region
        // Predicated region
        $region21: #{tpu_custom_call.1} parent=19 // pred_check
          %p151 = pneg %p40
        $region22: #{tpu_custom_call.1} parent=19 // pred_check_branch
          %153 = sbr.rel (%p151) target = $region24
        $region23: #{tpu_custom_call.1} parent=19 // pred_region
          %s154 = sand.u32 %s30, 1
          %s155 = scalar_lea.sflag [#allocation3], %s154
          %s156 = sand.u32 %s30, 1
          %s157 = smul.addr %s156, 256
          %s158 = scalar_lea.vmem [#allocation2], %s157
          %s160 = ssub.s32 4096, 4096
          %161 = vsyncadd %s155, %s160
          %s162 = smul.addr %s20, 32
          %s163 = smul.addr %s162, 128
          %s164 = scalar_lea.hbm %s0, %s163
          %s165 = sshll.u32 %s158, 4
          %s166 = int_to_ptr.vmem [resolvable:$true] %s165
          %171 = dma.hbm_to_vmem [thread:$0]  %s164, 4096, %s166, %s155, 128, 128, 8
        $region24: #{tpu_custom_call.1} parent=19 // pred_fallthru
          _
      $region20: #{tpu_custom_call.1} parent=5 // pred_fallthru
        _
      %p172 = scmp.le.s32.totalorder 1, %s20
      %p173 = scmp.lt.s32.totalorder %s20, 3
      %p174 = pnand %p172, %p173
      %p175 = pneg %p174
      // Predicated region
      $region25: #{tpu_custom_call.1} parent=5 // pred_check
        _
      $region26: #{tpu_custom_call.1} parent=5 // pred_check_branch
        %177 = sbr.rel (%p174) target = $region28
      $region27: #{tpu_custom_call.1} parent=5 // pred_region
        %s178 = ssub.s32 %s20, 1
        %s179 = sand.u32 %s33, 1
        %s180 = scalar_lea.sflag [#allocation3], %s179
        %s181 = sand.u32 %s33, 1
        %s182 = smul.addr %s181, 256
        %s183 = scalar_lea.vmem [#allocation2], %s182
        // Predicated region
        $region29: #{tpu_custom_call.1} parent=27 // pred_check
          %p184 = pneg %p46
        $region30: #{tpu_custom_call.1} parent=27 // pred_check_branch
          %186 = sbr.rel (%p184) target = $region32
        $region31: #{tpu_custom_call.1} parent=27 // pred_region
          %187 = dma.done %s180, 4096
        $region32: #{tpu_custom_call.1} parent=27 // pred_fallthru
          _
        // Predicated region
        $region33: #{tpu_custom_call.1} parent=27 // pred_check
          %p188 = pneg %p67
        $region34: #{tpu_custom_call.1} parent=27 // pred_check_branch
          %190 = sbr.rel (%p188) target = $region36
        $region35: #{tpu_custom_call.1} parent=27 // pred_region
          %191 = dma.done [#allocation6], 24576
        $region36: #{tpu_custom_call.1} parent=27 // pred_fallthru
          _
        %s192 = sand.u32 %s33, 1
        %s193 = scalar_lea.sflag [#allocation3], %s192
        %s194 = sand.u32 %s33, 1
        %s195 = smul.addr %s194, 256
        %s196 = scalar_lea.vmem [#allocation2], %s195
        %p197 = pneg %p46
        %p198 = pneg %p43
        %p199 = pneg %p67
        %p200 = pneg %p64
        %p201 = pneg %p93
        %p202 = pneg %p90
        %s203 = sand.u32 %s80, 1
        %s204 = scalar_lea.sflag [#allocation4], %s203
        %s205 = sand.u32 %s80, 1
        %s206 = smul.addr %s205, 512
        %s207 = scalar_lea.vmem [#allocation7], %s206
        %p208 = pneg %p119
        %p209 = pneg %p116
        %s210 = sand.u32 %s106, 1
        %s211 = scalar_lea.sflag [#allocation9], %s210
        %s212 = sand.u32 %s106, 1
        %s213 = smul.addr %s212, 16
        %s214 = scalar_lea.vmem [#allocation8], %s213
        %v215 = vld [vmem:[%s183] sm:$0xff]
        %v216 = vld [vmem:[%s183 + $0x8] sm:$0xff]
        %v217 = vld [vmem:[%s183 + $0x10] sm:$0xff]
        %v218 = vld [vmem:[%s183 + $0x18] sm:$0xff]
        %v219 = vld [vmem:[%s183 + $0x20] sm:$0xff]
        %v220 = vld [vmem:[%s183 + $0x28] sm:$0xff]
        %v221 = vld [vmem:[%s183 + $0x30] sm:$0xff]
        %v222 = vld [vmem:[%s183 + $0x38] sm:$0xff]
        %v223 = vld [vmem:[%s183 + $0x40] sm:$0xff]
        %v224 = vld [vmem:[%s183 + $0x48] sm:$0xff]
        %v225 = vld [vmem:[%s183 + $0x50] sm:$0xff]
        %v226 = vld [vmem:[%s183 + $0x58] sm:$0xff]
        %v227 = vld [vmem:[%s183 + $0x60] sm:$0xff]
        %v228 = vld [vmem:[%s183 + $0x68] sm:$0xff]
        %v229 = vld [vmem:[%s183 + $0x70] sm:$0xff]
        %v230 = vld [vmem:[%s183 + $0x78] sm:$0xff]
        %v231 = vld [vmem:[%s183 + $0x80] sm:$0xff]
        %v232 = vld [vmem:[%s183 + $0x88] sm:$0xff]
        %v233 = vld [vmem:[%s183 + $0x90] sm:$0xff]
        %v234 = vld [vmem:[%s183 + $0x98] sm:$0xff]
        %v235 = vld [vmem:[%s183 + $0xa0] sm:$0xff]
        %v236 = vld [vmem:[%s183 + $0xa8] sm:$0xff]
        %v237 = vld [vmem:[%s183 + $0xb0] sm:$0xff]
        %v238 = vld [vmem:[%s183 + $0xb8] sm:$0xff]
        %v239 = vld [vmem:[%s183 + $0xc0] sm:$0xff]
        %v240 = vld [vmem:[%s183 + $0xc8] sm:$0xff]
        %v241 = vld [vmem:[%s183 + $0xd0] sm:$0xff]
        %v242 = vld [vmem:[%s183 + $0xd8] sm:$0xff]
        %v243 = vld [vmem:[%s183 + $0xe0] sm:$0xff]
        %v244 = vld [vmem:[%s183 + $0xe8] sm:$0xff]
        %v245 = vld [vmem:[%s183 + $0xf0] sm:$0xff]
        %v246 = vld [vmem:[%s183 + $0xf8] sm:$0xff]
        %v247 = vlaneseq
        %v248 = vshrl.u32 %v247, 7
        %v249 = vadd.s32 %v248, 8
        %v250 = vadd.s32 %v248, 16
        %v251 = vadd.s32 %v248, 24
        %v252 = vadd.s32 %v248, 32
        %v253 = vadd.s32 %v248, 40
        %v254 = vadd.s32 %v248, 48
        %v255 = vadd.s32 %v248, 56
        %v256 = vadd.s32 %v248, 64
        %v257 = vadd.s32 %v248, 72
        %v258 = vadd.s32 %v248, 80
        %v259 = vadd.s32 %v248, 88
        %v260 = vadd.s32 %v248, 96
        %v261 = vadd.s32 %v248, 104
        %v262 = vadd.s32 %v248, 112
        %v263 = vadd.s32 %v248, 120
        %v264 = vadd.s32 %v248, 128
        %v265 = vadd.s32 %v248, 136
        %v266 = vadd.s32 %v248, 144
        %v267 = vadd.s32 %v248, 152
        %v268 = vadd.s32 %v248, 160
        %v269 = vadd.s32 %v248, 168
        %v270 = vadd.s32 %v248, 176
        %v271 = vadd.s32 %v248, 184
        %v272 = vadd.s32 %v248, 192
        %v273 = vadd.s32 %v248, 200
        %v274 = vadd.s32 %v248, 208
        %v275 = vadd.s32 %v248, 216
        %v276 = vadd.s32 %v248, 224
        %v277 = vadd.s32 %v248, 232
        %v278 = vadd.s32 %v248, 240
        %v279 = vadd.s32 %v248, 248
        %vm280 = vcmp.ge.s32.totalorder %v248, 16
        %vm281 = vcmp.ge.s32.totalorder %v249, 16
        %vm282 = vcmp.ge.s32.totalorder %v250, 16
        %vm283 = vcmp.ge.s32.totalorder %v251, 16
        %vm284 = vcmp.ge.s32.totalorder %v252, 16
        %vm285 = vcmp.ge.s32.totalorder %v253, 16
        %vm286 = vcmp.ge.s32.totalorder %v254, 16
        %vm287 = vcmp.ge.s32.totalorder %v255, 16
        %vm288 = vcmp.ge.s32.totalorder %v256, 16
        %vm289 = vcmp.ge.s32.totalorder %v257, 16
        %vm290 = vcmp.ge.s32.totalorder %v258, 16
        %vm291 = vcmp.ge.s32.totalorder %v259, 16
        %vm292 = vcmp.ge.s32.totalorder %v260, 16
        %vm293 = vcmp.ge.s32.totalorder %v261, 16
        %vm294 = vcmp.ge.s32.totalorder %v262, 16
        %vm295 = vcmp.ge.s32.totalorder %v263, 16
        %vm296 = vcmp.ge.s32.totalorder %v264, 16
        %vm297 = vcmp.ge.s32.totalorder %v265, 16
        %vm298 = vcmp.ge.s32.totalorder %v266, 16
        %vm299 = vcmp.ge.s32.totalorder %v267, 16
        %vm300 = vcmp.ge.s32.totalorder %v268, 16
        %vm301 = vcmp.ge.s32.totalorder %v269, 16
        %vm302 = vcmp.ge.s32.totalorder %v270, 16
        %vm303 = vcmp.ge.s32.totalorder %v271, 16
        %vm304 = vcmp.ge.s32.totalorder %v272, 16
        %vm305 = vcmp.ge.s32.totalorder %v273, 16
        %vm306 = vcmp.ge.s32.totalorder %v274, 16
        %vm307 = vcmp.ge.s32.totalorder %v275, 16
        %vm308 = vcmp.ge.s32.totalorder %v276, 16
        %vm309 = vcmp.ge.s32.totalorder %v277, 16
        %vm310 = vcmp.ge.s32.totalorder %v278, 16
        %vm311 = vcmp.ge.s32.totalorder %v279, 16
        %v312 = vsel %vm280, 1, 0
        %v313 = vsel %vm281, 1, 0
        %v314 = vsel %vm282, 1, 0
        %v315 = vsel %vm283, 1, 0
        %v316 = vsel %vm284, 1, 0
        %v317 = vsel %vm285, 1, 0
        %v318 = vsel %vm286, 1, 0
        %v319 = vsel %vm287, 1, 0
        %v320 = vsel %vm288, 1, 0
        %v321 = vsel %vm289, 1, 0
        %v322 = vsel %vm290, 1, 0
        %v323 = vsel %vm291, 1, 0
        %v324 = vsel %vm292, 1, 0
        %v325 = vsel %vm293, 1, 0
        %v326 = vsel %vm294, 1, 0
        %v327 = vsel %vm295, 1, 0
        %v328 = vsel %vm296, 1, 0
        %v329 = vsel %vm297, 1, 0
        %v330 = vsel %vm298, 1, 0
        %v331 = vsel %vm299, 1, 0
        %v332 = vsel %vm300, 1, 0
        %v333 = vsel %vm301, 1, 0
        %v334 = vsel %vm302, 1, 0
        %v335 = vsel %vm303, 1, 0
        %v336 = vsel %vm304, 1, 0
        %v337 = vsel %vm305, 1, 0
        %v338 = vsel %vm306, 1, 0
        %v339 = vsel %vm307, 1, 0
        %v340 = vsel %vm308, 1, 0
        %v341 = vsel %vm309, 1, 0
        %v342 = vsel %vm310, 1, 0
        %v343 = vsel %vm311, 1, 0
        %vm344 = vcmp.eq.s32.totalorder %v312, 1
        %vm345 = vcmp.eq.s32.totalorder %v313, 1
        %vm346 = vcmp.eq.s32.totalorder %v314, 1
        %vm347 = vcmp.eq.s32.totalorder %v315, 1
        %vm348 = vcmp.eq.s32.totalorder %v316, 1
        %vm349 = vcmp.eq.s32.totalorder %v317, 1
        %vm350 = vcmp.eq.s32.totalorder %v318, 1
        %vm351 = vcmp.eq.s32.totalorder %v319, 1
        %vm352 = vcmp.eq.s32.totalorder %v320, 1
        %vm353 = vcmp.eq.s32.totalorder %v321, 1
        %vm354 = vcmp.eq.s32.totalorder %v322, 1
        %vm355 = vcmp.eq.s32.totalorder %v323, 1
        %vm356 = vcmp.eq.s32.totalorder %v324, 1
        %vm357 = vcmp.eq.s32.totalorder %v325, 1
        %vm358 = vcmp.eq.s32.totalorder %v326, 1
        %vm359 = vcmp.eq.s32.totalorder %v327, 1
        %vm360 = vcmp.eq.s32.totalorder %v328, 1
        %vm361 = vcmp.eq.s32.totalorder %v329, 1
        %vm362 = vcmp.eq.s32.totalorder %v330, 1
        %vm363 = vcmp.eq.s32.totalorder %v331, 1
        %vm364 = vcmp.eq.s32.totalorder %v332, 1
        %vm365 = vcmp.eq.s32.totalorder %v333, 1
        %vm366 = vcmp.eq.s32.totalorder %v334, 1
        %vm367 = vcmp.eq.s32.totalorder %v335, 1
        %vm368 = vcmp.eq.s32.totalorder %v336, 1
        %vm369 = vcmp.eq.s32.totalorder %v337, 1
        %vm370 = vcmp.eq.s32.totalorder %v338, 1
        %vm371 = vcmp.eq.s32.totalorder %v339, 1
        %vm372 = vcmp.eq.s32.totalorder %v340, 1
        %vm373 = vcmp.eq.s32.totalorder %v341, 1
        %vm374 = vcmp.eq.s32.totalorder %v342, 1
        %vm375 = vcmp.eq.s32.totalorder %v343, 1
        %v376 = vsel %vm344, %v245, 0.0
        %v377 = vsel %vm345, %v246, 0.0
        %v378 = vsel %vm346, %v215, 0.0
        %v379 = vsel %vm347, %v216, 0.0
        %v380 = vsel %vm348, %v217, 0.0
        %v381 = vsel %vm349, %v218, 0.0
        %v382 = vsel %vm350, %v219, 0.0
        %v383 = vsel %vm351, %v220, 0.0
        %v384 = vsel %vm352, %v221, 0.0
        %v385 = vsel %vm353, %v222, 0.0
        %v386 = vsel %vm354, %v223, 0.0
        %v387 = vsel %vm355, %v224, 0.0
        %v388 = vsel %vm356, %v225, 0.0
        %v389 = vsel %vm357, %v226, 0.0
        %v390 = vsel %vm358, %v227, 0.0
        %v391 = vsel %vm359, %v228, 0.0
        %v392 = vsel %vm360, %v229, 0.0
        %v393 = vsel %vm361, %v230, 0.0
        %v394 = vsel %vm362, %v231, 0.0
        %v395 = vsel %vm363, %v232, 0.0
        %v396 = vsel %vm364, %v233, 0.0
        %v397 = vsel %vm365, %v234, 0.0
        %v398 = vsel %vm366, %v235, 0.0
        %v399 = vsel %vm367, %v236, 0.0
        %v400 = vsel %vm368, %v237, 0.0
        %v401 = vsel %vm369, %v238, 0.0
        %v402 = vsel %vm370, %v239, 0.0
        %v403 = vsel %vm371, %v240, 0.0
        %v404 = vsel %vm372, %v241, 0.0
        %v405 = vsel %vm373, %v242, 0.0
        %v406 = vsel %vm374, %v243, 0.0
        %v407 = vsel %vm375, %v244, 0.0
        %vm408 = vcmp.lt.s32.totalorder %v248, 240
        %vm409 = vcmp.lt.s32.totalorder %v249, 240
        %vm410 = vcmp.lt.s32.totalorder %v250, 240
        %vm411 = vcmp.lt.s32.totalorder %v251, 240
        %vm412 = vcmp.lt.s32.totalorder %v252, 240
        %vm413 = vcmp.lt.s32.totalorder %v253, 240
        %vm414 = vcmp.lt.s32.totalorder %v254, 240
        %vm415 = vcmp.lt.s32.totalorder %v255, 240
        %vm416 = vcmp.lt.s32.totalorder %v256, 240
        %vm417 = vcmp.lt.s32.totalorder %v257, 240
        %vm418 = vcmp.lt.s32.totalorder %v258, 240
        %vm419 = vcmp.lt.s32.totalorder %v259, 240
        %vm420 = vcmp.lt.s32.totalorder %v260, 240
        %vm421 = vcmp.lt.s32.totalorder %v261, 240
        %vm422 = vcmp.lt.s32.totalorder %v262, 240
        %vm423 = vcmp.lt.s32.totalorder %v263, 240
        %vm424 = vcmp.lt.s32.totalorder %v264, 240
        %vm425 = vcmp.lt.s32.totalorder %v265, 240
        %vm426 = vcmp.lt.s32.totalorder %v266, 240
        %vm427 = vcmp.lt.s32.totalorder %v267, 240
        %vm428 = vcmp.lt.s32.totalorder %v268, 240
        %vm429 = vcmp.lt.s32.totalorder %v269, 240
        %vm430 = vcmp.lt.s32.totalorder %v270, 240
        %vm431 = vcmp.lt.s32.totalorder %v271, 240
        %vm432 = vcmp.lt.s32.totalorder %v272, 240
        %vm433 = vcmp.lt.s32.totalorder %v273, 240
        %vm434 = vcmp.lt.s32.totalorder %v274, 240
        %vm435 = vcmp.lt.s32.totalorder %v275, 240
        %vm436 = vcmp.lt.s32.totalorder %v276, 240
        %vm437 = vcmp.lt.s32.totalorder %v277, 240
        %vm438 = vcmp.lt.s32.totalorder %v278, 240
        %vm439 = vcmp.lt.s32.totalorder %v279, 240
        %v440 = vsel %vm408, 1, 0
        %v441 = vsel %vm409, 1, 0
        %v442 = vsel %vm410, 1, 0
        %v443 = vsel %vm411, 1, 0
        %v444 = vsel %vm412, 1, 0
        %v445 = vsel %vm413, 1, 0
        %v446 = vsel %vm414, 1, 0
        %v447 = vsel %vm415, 1, 0
        %v448 = vsel %vm416, 1, 0
        %v449 = vsel %vm417, 1, 0
        %v450 = vsel %vm418, 1, 0
        %v451 = vsel %vm419, 1, 0
        %v452 = vsel %vm420, 1, 0
        %v453 = vsel %vm421, 1, 0
        %v454 = vsel %vm422, 1, 0
        %v455 = vsel %vm423, 1, 0
        %v456 = vsel %vm424, 1, 0
        %v457 = vsel %vm425, 1, 0
        %v458 = vsel %vm426, 1, 0
        %v459 = vsel %vm427, 1, 0
        %v460 = vsel %vm428, 1, 0
        %v461 = vsel %vm429, 1, 0
        %v462 = vsel %vm430, 1, 0
        %v463 = vsel %vm431, 1, 0
        %v464 = vsel %vm432, 1, 0
        %v465 = vsel %vm433, 1, 0
        %v466 = vsel %vm434, 1, 0
        %v467 = vsel %vm435, 1, 0
        %v468 = vsel %vm436, 1, 0
        %v469 = vsel %vm437, 1, 0
        %v470 = vsel %vm438, 1, 0
        %v471 = vsel %vm439, 1, 0
        %vm472 = vcmp.eq.s32.totalorder %v440, 1
        %vm473 = vcmp.eq.s32.totalorder %v441, 1
        %vm474 = vcmp.eq.s32.totalorder %v442, 1
        %vm475 = vcmp.eq.s32.totalorder %v443, 1
        %vm476 = vcmp.eq.s32.totalorder %v444, 1
        %vm477 = vcmp.eq.s32.totalorder %v445, 1
        %vm478 = vcmp.eq.s32.totalorder %v446, 1
        %vm479 = vcmp.eq.s32.totalorder %v447, 1
        %vm480 = vcmp.eq.s32.totalorder %v448, 1
        %vm481 = vcmp.eq.s32.totalorder %v449, 1
        %vm482 = vcmp.eq.s32.totalorder %v450, 1
        %vm483 = vcmp.eq.s32.totalorder %v451, 1
        %vm484 = vcmp.eq.s32.totalorder %v452, 1
        %vm485 = vcmp.eq.s32.totalorder %v453, 1
        %vm486 = vcmp.eq.s32.totalorder %v454, 1
        %vm487 = vcmp.eq.s32.totalorder %v455, 1
        %vm488 = vcmp.eq.s32.totalorder %v456, 1
        %vm489 = vcmp.eq.s32.totalorder %v457, 1
        %vm490 = vcmp.eq.s32.totalorder %v458, 1
        %vm491 = vcmp.eq.s32.totalorder %v459, 1
        %vm492 = vcmp.eq.s32.totalorder %v460, 1
        %vm493 = vcmp.eq.s32.totalorder %v461, 1
        %vm494 = vcmp.eq.s32.totalorder %v462, 1
        %vm495 = vcmp.eq.s32.totalorder %v463, 1
        %vm496 = vcmp.eq.s32.totalorder %v464, 1
        %vm497 = vcmp.eq.s32.totalorder %v465, 1
        %vm498 = vcmp.eq.s32.totalorder %v466, 1
        %vm499 = vcmp.eq.s32.totalorder %v467, 1
        %vm500 = vcmp.eq.s32.totalorder %v468, 1
        %vm501 = vcmp.eq.s32.totalorder %v469, 1
        %vm502 = vcmp.eq.s32.totalorder %v470, 1
        %vm503 = vcmp.eq.s32.totalorder %v471, 1
        %v504 = vsel %vm472, %v217, 0.0
        %v505 = vsel %vm473, %v218, 0.0
        %v506 = vsel %vm474, %v219, 0.0
        %v507 = vsel %vm475, %v220, 0.0
        %v508 = vsel %vm476, %v221, 0.0
        %v509 = vsel %vm477, %v222, 0.0
        %v510 = vsel %vm478, %v223, 0.0
        %v511 = vsel %vm479, %v224, 0.0
        %v512 = vsel %vm480, %v225, 0.0
        %v513 = vsel %vm481, %v226, 0.0
        %v514 = vsel %vm482, %v227, 0.0
        %v515 = vsel %vm483, %v228, 0.0
        %v516 = vsel %vm484, %v229, 0.0
        %v517 = vsel %vm485, %v230, 0.0
        %v518 = vsel %vm486, %v231, 0.0
        %v519 = vsel %vm487, %v232, 0.0
        %v520 = vsel %vm488, %v233, 0.0
        %v521 = vsel %vm489, %v234, 0.0
        %v522 = vsel %vm490, %v235, 0.0
        %v523 = vsel %vm491, %v236, 0.0
        %v524 = vsel %vm492, %v237, 0.0
        %v525 = vsel %vm493, %v238, 0.0
        %v526 = vsel %vm494, %v239, 0.0
        %v527 = vsel %vm495, %v240, 0.0
        %v528 = vsel %vm496, %v241, 0.0
        %v529 = vsel %vm497, %v242, 0.0
        %v530 = vsel %vm498, %v243, 0.0
        %v531 = vsel %vm499, %v244, 0.0
        %v532 = vsel %vm500, %v245, 0.0
        %v533 = vsel %vm501, %v246, 0.0
        %v534 = vsel %vm502, %v215, 0.0
        %v535 = vsel %vm503, %v216, 0.0
        %v536 = vld [vmem:[#allocation5] sm:$0xff]
        %v537 = vld [vmem:[#allocation5 + $0x8] sm:$0xff]
        %v538 = vld [vmem:[#allocation5 + $0x10] sm:$0xff]
        %v539 = vld [vmem:[#allocation5 + $0x18] sm:$0xff]
        %v540 = vld [vmem:[#allocation5 + $0x20] sm:$0xff]
        %v541 = vld [vmem:[#allocation5 + $0x28] sm:$0xff]
        %v542 = vld [vmem:[#allocation5 + $0x30] sm:$0xff]
        %v543 = vld [vmem:[#allocation5 + $0x38] sm:$0xff]
        %v544 = vld [vmem:[#allocation5 + $0x40] sm:$0xff]
        %v545 = vld [vmem:[#allocation5 + $0x48] sm:$0xff]
        %v546 = vld [vmem:[#allocation5 + $0x50] sm:$0xff]
        %v547 = vld [vmem:[#allocation5 + $0x58] sm:$0xff]
        %v548 = vld [vmem:[#allocation5 + $0x60] sm:$0xff]
        %v549 = vld [vmem:[#allocation5 + $0x68] sm:$0xff]
        %v550 = vld [vmem:[#allocation5 + $0x70] sm:$0xff]
        %v551 = vld [vmem:[#allocation5 + $0x78] sm:$0xff]
        %v552 = vld [vmem:[#allocation5 + $0x80] sm:$0xff]
        %v553 = vld [vmem:[#allocation5 + $0x88] sm:$0xff]
        %v554 = vld [vmem:[#allocation5 + $0x90] sm:$0xff]
        %v555 = vld [vmem:[#allocation5 + $0x98] sm:$0xff]
        %v556 = vld [vmem:[#allocation5 + $0xa0] sm:$0xff]
        %v557 = vld [vmem:[#allocation5 + $0xa8] sm:$0xff]
        %v558 = vld [vmem:[#allocation5 + $0xb0] sm:$0xff]
        %v559 = vld [vmem:[#allocation5 + $0xb8] sm:$0xff]
        %v560 = vld [vmem:[#allocation5 + $0xc0] sm:$0xff]
        %v561 = vld [vmem:[#allocation5 + $0xc8] sm:$0xff]
        %v562 = vld [vmem:[#allocation5 + $0xd0] sm:$0xff]
        %v563 = vld [vmem:[#allocation5 + $0xd8] sm:$0xff]
        %v564 = vld [vmem:[#allocation5 + $0xe0] sm:$0xff]
        %v565 = vld [vmem:[#allocation5 + $0xe8] sm:$0xff]
        %v566 = vld [vmem:[#allocation5 + $0xf0] sm:$0xff]
        %v567 = vld [vmem:[#allocation5 + $0xf8] sm:$0xff]
        %v568 = vld [vmem:[#allocation5 + $0x100] sm:$0xff]
        %v569 = vld [vmem:[#allocation5 + $0x108] sm:$0xff]
        %v570 = vld [vmem:[#allocation5 + $0x110] sm:$0xff]
        %v571 = vld [vmem:[#allocation5 + $0x118] sm:$0xff]
        %v572 = vld [vmem:[#allocation5 + $0x120] sm:$0xff]
        %v573 = vld [vmem:[#allocation5 + $0x128] sm:$0xff]
        %v574 = vld [vmem:[#allocation5 + $0x130] sm:$0xff]
        %v575 = vld [vmem:[#allocation5 + $0x138] sm:$0xff]
        %v576 = vld [vmem:[#allocation5 + $0x140] sm:$0xff]
        %v577 = vld [vmem:[#allocation5 + $0x148] sm:$0xff]
        %v578 = vld [vmem:[#allocation5 + $0x150] sm:$0xff]
        %v579 = vld [vmem:[#allocation5 + $0x158] sm:$0xff]
        %v580 = vld [vmem:[#allocation5 + $0x160] sm:$0xff]
        %v581 = vld [vmem:[#allocation5 + $0x168] sm:$0xff]
        %v582 = vld [vmem:[#allocation5 + $0x170] sm:$0xff]
        %v583 = vld [vmem:[#allocation5 + $0x178] sm:$0xff]
        %v584 = vld [vmem:[#allocation5 + $0x180] sm:$0xff]
        %v585 = vld [vmem:[#allocation5 + $0x188] sm:$0xff]
        %v586 = vld [vmem:[#allocation5 + $0x190] sm:$0xff]
        %v587 = vld [vmem:[#allocation5 + $0x198] sm:$0xff]
        %v588 = vld [vmem:[#allocation5 + $0x1a0] sm:$0xff]
        %v589 = vld [vmem:[#allocation5 + $0x1a8] sm:$0xff]
        %v590 = vld [vmem:[#allocation5 + $0x1b0] sm:$0xff]
        %v591 = vld [vmem:[#allocation5 + $0x1b8] sm:$0xff]
        %v592 = vld [vmem:[#allocation5 + $0x1c0] sm:$0xff]
        %v593 = vld [vmem:[#allocation5 + $0x1c8] sm:$0xff]
        %v594 = vld [vmem:[#allocation5 + $0x1d0] sm:$0xff]
        %v595 = vld [vmem:[#allocation5 + $0x1d8] sm:$0xff]
        %v596 = vld [vmem:[#allocation5 + $0x1e0] sm:$0xff]
        %v597 = vld [vmem:[#allocation5 + $0x1e8] sm:$0xff]
        %v598 = vld [vmem:[#allocation5 + $0x1f0] sm:$0xff]
        %v599 = vld [vmem:[#allocation5 + $0x1f8] sm:$0xff]
        %v600 = vld [vmem:[#allocation5 + $0x200] sm:$0xff]
        %v601 = vld [vmem:[#allocation5 + $0x208] sm:$0xff]
        %v602 = vld [vmem:[#allocation5 + $0x210] sm:$0xff]
        %v603 = vld [vmem:[#allocation5 + $0x218] sm:$0xff]
        %v604 = vld [vmem:[#allocation5 + $0x220] sm:$0xff]
        %v605 = vld [vmem:[#allocation5 + $0x228] sm:$0xff]
        %v606 = vld [vmem:[#allocation5 + $0x230] sm:$0xff]
        %v607 = vld [vmem:[#allocation5 + $0x238] sm:$0xff]
        %v608 = vld [vmem:[#allocation5 + $0x240] sm:$0xff]
        %v609 = vld [vmem:[#allocation5 + $0x248] sm:$0xff]
        %v610 = vld [vmem:[#allocation5 + $0x250] sm:$0xff]
        %v611 = vld [vmem:[#allocation5 + $0x258] sm:$0xff]
        %v612 = vld [vmem:[#allocation5 + $0x260] sm:$0xff]
        %v613 = vld [vmem:[#allocation5 + $0x268] sm:$0xff]
        %v614 = vld [vmem:[#allocation5 + $0x270] sm:$0xff]
        %v615 = vld [vmem:[#allocation5 + $0x278] sm:$0xff]
        %v616 = vld [vmem:[#allocation5 + $0x280] sm:$0xff]
        %v617 = vld [vmem:[#allocation5 + $0x288] sm:$0xff]
        %v618 = vld [vmem:[#allocation5 + $0x290] sm:$0xff]
        %v619 = vld [vmem:[#allocation5 + $0x298] sm:$0xff]
        %v620 = vld [vmem:[#allocation5 + $0x2a0] sm:$0xff]
        %v621 = vld [vmem:[#allocation5 + $0x2a8] sm:$0xff]
        %v622 = vld [vmem:[#allocation5 + $0x2b0] sm:$0xff]
        %v623 = vld [vmem:[#allocation5 + $0x2b8] sm:$0xff]
        %v624 = vld [vmem:[#allocation5 + $0x2c0] sm:$0xff]
        %v625 = vld [vmem:[#allocation5 + $0x2c8] sm:$0xff]
        %v626 = vld [vmem:[#allocation5 + $0x2d0] sm:$0xff]
        %v627 = vld [vmem:[#allocation5 + $0x2d8] sm:$0xff]
        %v628 = vld [vmem:[#allocation5 + $0x2e0] sm:$0xff]
        %v629 = vld [vmem:[#allocation5 + $0x2e8] sm:$0xff]
        %v630 = vld [vmem:[#allocation5 + $0x2f0] sm:$0xff]
        %v631 = vld [vmem:[#allocation5 + $0x2f8] sm:$0xff]
        %v632 = vld [vmem:[#allocation5 + $0x300] sm:$0xff]
        %v633 = vld [vmem:[#allocation5 + $0x308] sm:$0xff]
        %v634 = vld [vmem:[#allocation5 + $0x310] sm:$0xff]
        %v635 = vld [vmem:[#allocation5 + $0x318] sm:$0xff]
        %v636 = vld [vmem:[#allocation5 + $0x320] sm:$0xff]
        %v637 = vld [vmem:[#allocation5 + $0x328] sm:$0xff]
        %v638 = vld [vmem:[#allocation5 + $0x330] sm:$0xff]
        %v639 = vld [vmem:[#allocation5 + $0x338] sm:$0xff]
        %v640 = vld [vmem:[#allocation5 + $0x340] sm:$0xff]
        %v641 = vld [vmem:[#allocation5 + $0x348] sm:$0xff]
        %v642 = vld [vmem:[#allocation5 + $0x350] sm:$0xff]
        %v643 = vld [vmem:[#allocation5 + $0x358] sm:$0xff]
        %v644 = vld [vmem:[#allocation5 + $0x360] sm:$0xff]
        %v645 = vld [vmem:[#allocation5 + $0x368] sm:$0xff]
        %v646 = vld [vmem:[#allocation5 + $0x370] sm:$0xff]
        %v647 = vld [vmem:[#allocation5 + $0x378] sm:$0xff]
        %v648 = vld [vmem:[#allocation5 + $0x380] sm:$0xff]
        %v649 = vld [vmem:[#allocation5 + $0x388] sm:$0xff]
        %v650 = vld [vmem:[#allocation5 + $0x390] sm:$0xff]
        %v651 = vld [vmem:[#allocation5 + $0x398] sm:$0xff]
        %v652 = vld [vmem:[#allocation5 + $0x3a0] sm:$0xff]
        %v653 = vld [vmem:[#allocation5 + $0x3a8] sm:$0xff]
        %v654 = vld [vmem:[#allocation5 + $0x3b0] sm:$0xff]
        %v655 = vld [vmem:[#allocation5 + $0x3b8] sm:$0xff]
        %v656 = vld [vmem:[#allocation5 + $0x3c0] sm:$0xff]
        %v657 = vld [vmem:[#allocation5 + $0x3c8] sm:$0xff]
        %v658 = vld [vmem:[#allocation5 + $0x3d0] sm:$0xff]
        %v659 = vld [vmem:[#allocation5 + $0x3d8] sm:$0xff]
        %v660 = vld [vmem:[#allocation5 + $0x3e0] sm:$0xff]
        %v661 = vld [vmem:[#allocation5 + $0x3e8] sm:$0xff]
        %v662 = vld [vmem:[#allocation5 + $0x3f0] sm:$0xff]
        %v663 = vld [vmem:[#allocation5 + $0x3f8] sm:$0xff]
        %v664 = vld [vmem:[#allocation5 + $0x400] sm:$0xff]
        %v665 = vld [vmem:[#allocation5 + $0x408] sm:$0xff]
        %v666 = vld [vmem:[#allocation5 + $0x410] sm:$0xff]
        %v667 = vld [vmem:[#allocation5 + $0x418] sm:$0xff]
        %v668 = vld [vmem:[#allocation5 + $0x420] sm:$0xff]
        %v669 = vld [vmem:[#allocation5 + $0x428] sm:$0xff]
        %v670 = vld [vmem:[#allocation5 + $0x430] sm:$0xff]
        %v671 = vld [vmem:[#allocation5 + $0x438] sm:$0xff]
        %v672 = vld [vmem:[#allocation5 + $0x440] sm:$0xff]
        %v673 = vld [vmem:[#allocation5 + $0x448] sm:$0xff]
        %v674 = vld [vmem:[#allocation5 + $0x450] sm:$0xff]
        %v675 = vld [vmem:[#allocation5 + $0x458] sm:$0xff]
        %v676 = vld [vmem:[#allocation5 + $0x460] sm:$0xff]
        %v677 = vld [vmem:[#allocation5 + $0x468] sm:$0xff]
        %v678 = vld [vmem:[#allocation5 + $0x470] sm:$0xff]
        %v679 = vld [vmem:[#allocation5 + $0x478] sm:$0xff]
        %v680 = vld [vmem:[#allocation5 + $0x480] sm:$0xff]
        %v681 = vld [vmem:[#allocation5 + $0x488] sm:$0xff]
        %v682 = vld [vmem:[#allocation5 + $0x490] sm:$0xff]
        %v683 = vld [vmem:[#allocation5 + $0x498] sm:$0xff]
        %v684 = vld [vmem:[#allocation5 + $0x4a0] sm:$0xff]
        %v685 = vld [vmem:[#allocation5 + $0x4a8] sm:$0xff]
        %v686 = vld [vmem:[#allocation5 + $0x4b0] sm:$0xff]
        %v687 = vld [vmem:[#allocation5 + $0x4b8] sm:$0xff]
        %v688 = vld [vmem:[#allocation5 + $0x4c0] sm:$0xff]
        %v689 = vld [vmem:[#allocation5 + $0x4c8] sm:$0xff]
        %v690 = vld [vmem:[#allocation5 + $0x4d0] sm:$0xff]
        %v691 = vld [vmem:[#allocation5 + $0x4d8] sm:$0xff]
        %v692 = vld [vmem:[#allocation5 + $0x4e0] sm:$0xff]
        %v693 = vld [vmem:[#allocation5 + $0x4e8] sm:$0xff]
        %v694 = vld [vmem:[#allocation5 + $0x4f0] sm:$0xff]
        %v695 = vld [vmem:[#allocation5 + $0x4f8] sm:$0xff]
        %v696 = vld [vmem:[#allocation5 + $0x500] sm:$0xff]
        %v697 = vld [vmem:[#allocation5 + $0x508] sm:$0xff]
        %v698 = vld [vmem:[#allocation5 + $0x510] sm:$0xff]
        %v699 = vld [vmem:[#allocation5 + $0x518] sm:$0xff]
        %v700 = vld [vmem:[#allocation5 + $0x520] sm:$0xff]
        %v701 = vld [vmem:[#allocation5 + $0x528] sm:$0xff]
        %v702 = vld [vmem:[#allocation5 + $0x530] sm:$0xff]
        %v703 = vld [vmem:[#allocation5 + $0x538] sm:$0xff]
        %v704 = vld [vmem:[#allocation5 + $0x540] sm:$0xff]
        %v705 = vld [vmem:[#allocation5 + $0x548] sm:$0xff]
        %v706 = vld [vmem:[#allocation5 + $0x550] sm:$0xff]
        %v707 = vld [vmem:[#allocation5 + $0x558] sm:$0xff]
        %v708 = vld [vmem:[#allocation5 + $0x560] sm:$0xff]
        %v709 = vld [vmem:[#allocation5 + $0x568] sm:$0xff]
        %v710 = vld [vmem:[#allocation5 + $0x570] sm:$0xff]
        %v711 = vld [vmem:[#allocation5 + $0x578] sm:$0xff]
        %v712 = vld [vmem:[#allocation5 + $0x580] sm:$0xff]
        %v713 = vld [vmem:[#allocation5 + $0x588] sm:$0xff]
        %v714 = vld [vmem:[#allocation5 + $0x590] sm:$0xff]
        %v715 = vld [vmem:[#allocation5 + $0x598] sm:$0xff]
        %v716 = vld [vmem:[#allocation5 + $0x5a0] sm:$0xff]
        %v717 = vld [vmem:[#allocation5 + $0x5a8] sm:$0xff]
        %v718 = vld [vmem:[#allocation5 + $0x5b0] sm:$0xff]
        %v719 = vld [vmem:[#allocation5 + $0x5b8] sm:$0xff]
        %v720 = vld [vmem:[#allocation5 + $0x5c0] sm:$0xff]
        %v721 = vld [vmem:[#allocation5 + $0x5c8] sm:$0xff]
        %v722 = vld [vmem:[#allocation5 + $0x5d0] sm:$0xff]
        %v723 = vld [vmem:[#allocation5 + $0x5d8] sm:$0xff]
        %v724 = vld [vmem:[#allocation5 + $0x5e0] sm:$0xff]
        %v725 = vld [vmem:[#allocation5 + $0x5e8] sm:$0xff]
        %v726 = vld [vmem:[#allocation5 + $0x5f0] sm:$0xff]
        %v727 = vld [vmem:[#allocation5 + $0x5f8] sm:$0xff]
        %728 = vmatprep.subr.mxu0 %v597
        %729 = vmatpush1.msra.mxu0 %v596
        %730 = vmatprep.subr.mxu0 %v593
        %731 = vmatpush1.msra.mxu0 %v592
        %732 = vmatprep.subr.mxu0 %v589
        %733 = vmatpush1.msra.mxu0 %v588
        %734 = vmatprep.subr.mxu0 %v585
        %735 = vmatpush1.msra.mxu0 %v584
        %736 = vmatprep.subr.mxu0 %v581
        %737 = vmatpush1.msra.mxu0 %v580
        %738 = vmatprep.subr.mxu0 %v577
        %739 = vmatpush1.msra.mxu0 %v576
        %740 = vmatprep.subr.mxu0 %v573
        %741 = vmatpush1.msra.mxu0 %v572
        %742 = vmatprep.subr.mxu0 %v569
        %743 = vmatpush1.msra.mxu0 %v568
        %744 = vmatprep.subr.mxu0 %v565
        %745 = vmatpush1.msra.mxu0 %v564
        %746 = vmatprep.subr.mxu0 %v561
        %747 = vmatpush1.msra.mxu0 %v560
        %748 = vmatprep.subr.mxu0 %v557
        %749 = vmatpush1.msra.mxu0 %v556
        %750 = vmatprep.subr.mxu0 %v553
        %751 = vmatpush1.msra.mxu0 %v552
        %752 = vmatprep.subr.mxu0 %v549
        %753 = vmatpush1.msra.mxu0 %v548
        %754 = vmatprep.subr.mxu0 %v545
        %755 = vmatpush1.msra.mxu0 %v544
        %756 = vmatprep.subr.mxu0 %v541
        %757 = vmatpush1.msra.mxu0 %v540
        %758 = vmatprep.subr.mxu0 %v537
        %759 = vmatpush1.msra.mxu0 %v536
        %760 = vmatprep.subr.mxu0 %v661
        %761 = vmatpush2.msra.mxu0 %v660
        %762 = vmatprep.subr.mxu0 %v657
        %763 = vmatpush2.msra.mxu0 %v656
        %764 = vmatprep.subr.mxu0 %v653
        %765 = vmatpush2.msra.mxu0 %v652
        %766 = vmatprep.subr.mxu0 %v649
        %767 = vmatpush2.msra.mxu0 %v648
        %768 = vmatprep.subr.mxu0 %v645
        %769 = vmatpush2.msra.mxu0 %v644
        %770 = vmatprep.subr.mxu0 %v641
        %771 = vmatpush2.msra.mxu0 %v640
        %772 = vmatprep.subr.mxu0 %v637
        %773 = vmatpush2.msra.mxu0 %v636
        %774 = vmatprep.subr.mxu0 %v633
        %775 = vmatpush2.msra.mxu0 %v632
        %776 = vmatprep.subr.mxu0 %v629
        %777 = vmatpush2.msra.mxu0 %v628
        %778 = vmatprep.subr.mxu0 %v625
        %779 = vmatpush2.msra.mxu0 %v624
        %780 = vmatprep.subr.mxu0 %v621
        %781 = vmatpush2.msra.mxu0 %v620
        %782 = vmatprep.subr.mxu0 %v617
        %783 = vmatpush2.msra.mxu0 %v616
        %784 = vmatprep.subr.mxu0 %v613
        %785 = vmatpush2.msra.mxu0 %v612
        %786 = vmatprep.subr.mxu0 %v609
        %787 = vmatpush2.msra.mxu0 %v608
        %788 = vmatprep.subr.mxu0 %v605
        %789 = vmatpush2.msra.mxu0 %v604
        %790 = vmatprep.subr.mxu0 %v601
        %791 = vmatpush2.msra.mxu0 %v600
        %792 = vmatprep.mubr.f32.mxu0 %v215
        %793 = vmatmul.mubr.f32.gmra.mxu0 %v376
        %v794 = vpop.f32.mrf.mxu0
        %v795 = vadd.f32 0.0, %v794
        %v796 = vpop.f32.mrf.mxu0
        %v797 = vadd.f32 0.0, %v796
        %798 = vmatprep.mubr.f32.mxu0 %v216
        %799 = vmatmul.mubr.f32.gmra.mxu0 %v377
        %v800 = vpop.f32.mrf.mxu0
        %v801 = vadd.f32 0.0, %v800
        %v802 = vpop.f32.mrf.mxu0
        %v803 = vadd.f32 0.0, %v802
        %804 = vmatprep.mubr.f32.mxu0 %v217
        %805 = vmatmul.mubr.f32.gmra.mxu0 %v378
        %v806 = vpop.f32.mrf.mxu0
        %v807 = vadd.f32 0.0, %v806
        %v808 = vpop.f32.mrf.mxu0
        %v809 = vadd.f32 0.0, %v808
        %810 = vmatprep.mubr.f32.mxu0 %v218
        %811 = vmatmul.mubr.f32.gmra.mxu0 %v379
        %v812 = vpop.f32.mrf.mxu0
        %v813 = vadd.f32 0.0, %v812
        %v814 = vpop.f32.mrf.mxu0
        %v815 = vadd.f32 0.0, %v814
        %816 = vmatprep.mubr.f32.mxu0 %v219
        %817 = vmatmul.mubr.f32.gmra.mxu0 %v380
        %v818 = vpop.f32.mrf.mxu0
        %v819 = vadd.f32 0.0, %v818
        %v820 = vpop.f32.mrf.mxu0
        %v821 = vadd.f32 0.0, %v820
        %822 = vmatprep.mubr.f32.mxu0 %v220
        %823 = vmatmul.mubr.f32.gmra.mxu0 %v381
        %v824 = vpop.f32.mrf.mxu0
        %v825 = vadd.f32 0.0, %v824
        %v826 = vpop.f32.mrf.mxu0
        %v827 = vadd.f32 0.0, %v826
        %828 = vmatprep.mubr.f32.mxu0 %v221
        %829 = vmatmul.mubr.f32.gmra.mxu0 %v382
        %v830 = vpop.f32.mrf.mxu0
        %v831 = vadd.f32 0.0, %v830
        %v832 = vpop.f32.mrf.mxu0
        %v833 = vadd.f32 0.0, %v832
        %834 = vmatprep.mubr.f32.mxu0 %v222
        %835 = vmatmul.mubr.f32.gmra.mxu0 %v383
        %v836 = vpop.f32.mrf.mxu0
        %v837 = vadd.f32 0.0, %v836
        %v838 = vpop.f32.mrf.mxu0
        %v839 = vadd.f32 0.0, %v838
        %840 = vmatprep.mubr.f32.mxu0 %v223
        %841 = vmatmul.mubr.f32.gmra.mxu0 %v384
        %v842 = vpop.f32.mrf.mxu0
        %v843 = vadd.f32 0.0, %v842
        %v844 = vpop.f32.mrf.mxu0
        %v845 = vadd.f32 0.0, %v844
        %846 = vmatprep.mubr.f32.mxu0 %v224
        %847 = vmatmul.mubr.f32.gmra.mxu0 %v385
        %v848 = vpop.f32.mrf.mxu0
        %v849 = vadd.f32 0.0, %v848
        %v850 = vpop.f32.mrf.mxu0
        %v851 = vadd.f32 0.0, %v850
        %852 = vmatprep.mubr.f32.mxu0 %v225
        %853 = vmatmul.mubr.f32.gmra.mxu0 %v386
        %v854 = vpop.f32.mrf.mxu0
        %v855 = vadd.f32 0.0, %v854
        %v856 = vpop.f32.mrf.mxu0
        %v857 = vadd.f32 0.0, %v856
        %858 = vmatprep.mubr.f32.mxu0 %v226
        %859 = vmatmul.mubr.f32.gmra.mxu0 %v387
        %v860 = vpop.f32.mrf.mxu0
        %v861 = vadd.f32 0.0, %v860
        %v862 = vpop.f32.mrf.mxu0
        %v863 = vadd.f32 0.0, %v862
        %864 = vmatprep.mubr.f32.mxu0 %v227
        %865 = vmatmul.mubr.f32.gmra.mxu0 %v388
        %v866 = vpop.f32.mrf.mxu0
        %v867 = vadd.f32 0.0, %v866
        %v868 = vpop.f32.mrf.mxu0
        %v869 = vadd.f32 0.0, %v868
        %870 = vmatprep.mubr.f32.mxu0 %v228
        %871 = vmatmul.mubr.f32.gmra.mxu0 %v389
        %v872 = vpop.f32.mrf.mxu0
        %v873 = vadd.f32 0.0, %v872
        %v874 = vpop.f32.mrf.mxu0
        %v875 = vadd.f32 0.0, %v874
        %876 = vmatprep.mubr.f32.mxu0 %v229
        %877 = vmatmul.mubr.f32.gmra.mxu0 %v390
        %v878 = vpop.f32.mrf.mxu0
        %v879 = vadd.f32 0.0, %v878
        %v880 = vpop.f32.mrf.mxu0
        %v881 = vadd.f32 0.0, %v880
        %882 = vmatprep.mubr.f32.mxu0 %v230
        %883 = vmatmul.mubr.f32.gmra.mxu0 %v391
        %v884 = vpop.f32.mrf.mxu0
        %v885 = vadd.f32 0.0, %v884
        %v886 = vpop.f32.mrf.mxu0
        %v887 = vadd.f32 0.0, %v886
        %888 = vmatprep.mubr.f32.mxu0 %v231
        %889 = vmatmul.mubr.f32.gmra.mxu0 %v392
        %v890 = vpop.f32.mrf.mxu0
        %v891 = vadd.f32 0.0, %v890
        %v892 = vpop.f32.mrf.mxu0
        %v893 = vadd.f32 0.0, %v892
        %894 = vmatprep.mubr.f32.mxu0 %v232
        %895 = vmatmul.mubr.f32.gmra.mxu0 %v393
        %v896 = vpop.f32.mrf.mxu0
        %v897 = vadd.f32 0.0, %v896
        %v898 = vpop.f32.mrf.mxu0
        %v899 = vadd.f32 0.0, %v898
        %900 = vmatprep.mubr.f32.mxu0 %v233
        %901 = vmatmul.mubr.f32.gmra.mxu0 %v394
        %v902 = vpop.f32.mrf.mxu0
        %v903 = vadd.f32 0.0, %v902
        %v904 = vpop.f32.mrf.mxu0
        %v905 = vadd.f32 0.0, %v904
        %906 = vmatprep.mubr.f32.mxu0 %v234
        %907 = vmatmul.mubr.f32.gmra.mxu0 %v395
        %v908 = vpop.f32.mrf.mxu0
        %v909 = vadd.f32 0.0, %v908
        %v910 = vpop.f32.mrf.mxu0
        %v911 = vadd.f32 0.0, %v910
        %912 = vmatprep.mubr.f32.mxu0 %v235
        %913 = vmatmul.mubr.f32.gmra.mxu0 %v396
        %v914 = vpop.f32.mrf.mxu0
        %v915 = vadd.f32 0.0, %v914
        %v916 = vpop.f32.mrf.mxu0
        %v917 = vadd.f32 0.0, %v916
        %918 = vmatprep.mubr.f32.mxu0 %v236
        %919 = vmatmul.mubr.f32.gmra.mxu0 %v397
        %v920 = vpop.f32.mrf.mxu0
        %v921 = vadd.f32 0.0, %v920
        %v922 = vpop.f32.mrf.mxu0
        %v923 = vadd.f32 0.0, %v922
        %924 = vmatprep.mubr.f32.mxu0 %v237
        %925 = vmatmul.mubr.f32.gmra.mxu0 %v398
        %v926 = vpop.f32.mrf.mxu0
        %v927 = vadd.f32 0.0, %v926
        %v928 = vpop.f32.mrf.mxu0
        %v929 = vadd.f32 0.0, %v928
        %930 = vmatprep.mubr.f32.mxu0 %v238
        %931 = vmatmul.mubr.f32.gmra.mxu0 %v399
        %v932 = vpop.f32.mrf.mxu0
        %v933 = vadd.f32 0.0, %v932
        %v934 = vpop.f32.mrf.mxu0
        %v935 = vadd.f32 0.0, %v934
        %936 = vmatprep.mubr.f32.mxu0 %v239
        %937 = vmatmul.mubr.f32.gmra.mxu0 %v400
        %v938 = vpop.f32.mrf.mxu0
        %v939 = vadd.f32 0.0, %v938
        %v940 = vpop.f32.mrf.mxu0
        %v941 = vadd.f32 0.0, %v940
        %942 = vmatprep.mubr.f32.mxu0 %v240
        %943 = vmatmul.mubr.f32.gmra.mxu0 %v401
        %v944 = vpop.f32.mrf.mxu0
        %v945 = vadd.f32 0.0, %v944
        %v946 = vpop.f32.mrf.mxu0
        %v947 = vadd.f32 0.0, %v946
        %948 = vmatprep.mubr.f32.mxu0 %v241
        %949 = vmatmul.mubr.f32.gmra.mxu0 %v402
        %v950 = vpop.f32.mrf.mxu0
        %v951 = vadd.f32 0.0, %v950
        %v952 = vpop.f32.mrf.mxu0
        %v953 = vadd.f32 0.0, %v952
        %954 = vmatprep.mubr.f32.mxu0 %v242
        %955 = vmatmul.mubr.f32.gmra.mxu0 %v403
        %v956 = vpop.f32.mrf.mxu0
        %v957 = vadd.f32 0.0, %v956
        %v958 = vpop.f32.mrf.mxu0
        %v959 = vadd.f32 0.0, %v958
        %960 = vmatprep.mubr.f32.mxu0 %v243
        %961 = vmatmul.mubr.f32.gmra.mxu0 %v404
        %v962 = vpop.f32.mrf.mxu0
        %v963 = vadd.f32 0.0, %v962
        %v964 = vpop.f32.mrf.mxu0
        %v965 = vadd.f32 0.0, %v964
        %966 = vmatprep.mubr.f32.mxu0 %v244
        %967 = vmatmul.mubr.f32.gmra.mxu0 %v405
        %v968 = vpop.f32.mrf.mxu0
        %v969 = vadd.f32 0.0, %v968
        %v970 = vpop.f32.mrf.mxu0
        %v971 = vadd.f32 0.0, %v970
        %972 = vmatprep.mubr.f32.mxu0 %v245
        %973 = vmatmul.mubr.f32.gmra.mxu0 %v406
        %v974 = vpop.f32.mrf.mxu0
        %v975 = vadd.f32 0.0, %v974
        %v976 = vpop.f32.mrf.mxu0
        %v977 = vadd.f32 0.0, %v976
        %978 = vmatprep.mubr.f32.mxu0 %v246
        %979 = vmatmul.mubr.f32.gmra.mxu0 %v407
        %v980 = vpop.f32.mrf.mxu0
        %v981 = vadd.f32 0.0, %v980
        %v982 = vpop.f32.mrf.mxu0
        %v983 = vadd.f32 0.0, %v982
        %984 = vdwg.mxu0
        %985 = vmatprep.subr.mxu0 %v725
        %986 = vmatpush1.msra.mxu0 %v724
        %987 = vmatprep.subr.mxu0 %v721
        %988 = vmatpush1.msra.mxu0 %v720
        %989 = vmatprep.subr.mxu0 %v717
        %990 = vmatpush1.msra.mxu0 %v716
        %991 = vmatprep.subr.mxu0 %v713
        %992 = vmatpush1.msra.mxu0 %v712
        %993 = vmatprep.subr.mxu0 %v709
        %994 = vmatpush1.msra.mxu0 %v708
        %995 = vmatprep.subr.mxu0 %v705
        %996 = vmatpush1.msra.mxu0 %v704
        %997 = vmatprep.subr.mxu0 %v701
        %998 = vmatpush1.msra.mxu0 %v700
        %999 = vmatprep.subr.mxu0 %v697
        %1000 = vmatpush1.msra.mxu0 %v696
        %1001 = vmatprep.subr.mxu0 %v693
        %1002 = vmatpush1.msra.mxu0 %v692
        %1003 = vmatprep.subr.mxu0 %v689
        %1004 = vmatpush1.msra.mxu0 %v688
        %1005 = vmatprep.subr.mxu0 %v685
        %1006 = vmatpush1.msra.mxu0 %v684
        %1007 = vmatprep.subr.mxu0 %v681
        %1008 = vmatpush1.msra.mxu0 %v680
        %1009 = vmatprep.subr.mxu0 %v677
        %1010 = vmatpush1.msra.mxu0 %v676
        %1011 = vmatprep.subr.mxu0 %v673
        %1012 = vmatpush1.msra.mxu0 %v672
        %1013 = vmatprep.subr.mxu0 %v669
        %1014 = vmatpush1.msra.mxu0 %v668
        %1015 = vmatprep.subr.mxu0 %v665
        %1016 = vmatpush1.msra.mxu0 %v664
        %1017 = vmatprep.subr.mxu0 0.0
        %1018 = vmatpush2.msra.mxu0 0.0
        %1019 = vmatprep.subr.mxu0 0.0
        %1020 = vmatpush2.msra.mxu0 0.0
        %1021 = vmatprep.subr.mxu0 0.0
        %1022 = vmatpush2.msra.mxu0 0.0
        %1023 = vmatprep.subr.mxu0 0.0
        %1024 = vmatpush2.msra.mxu0 0.0
        %1025 = vmatprep.subr.mxu0 0.0
        %1026 = vmatpush2.msra.mxu0 0.0
        %1027 = vmatprep.subr.mxu0 0.0
        %1028 = vmatpush2.msra.mxu0 0.0
        %1029 = vmatprep.subr.mxu0 0.0
        %1030 = vmatpush2.msra.mxu0 0.0
        %1031 = vmatprep.subr.mxu0 0.0
        %1032 = vmatpush2.msra.mxu0 0.0
        %1033 = vmatprep.subr.mxu0 0.0
        %1034 = vmatpush2.msra.mxu0 0.0
        %1035 = vmatprep.subr.mxu0 0.0
        %1036 = vmatpush2.msra.mxu0 0.0
        %1037 = vmatprep.subr.mxu0 0.0
        %1038 = vmatpush2.msra.mxu0 0.0
        %1039 = vmatprep.subr.mxu0 0.0
        %1040 = vmatpush2.msra.mxu0 0.0
        %1041 = vmatprep.subr.mxu0 0.0
        %1042 = vmatpush2.msra.mxu0 0.0
        %1043 = vmatprep.subr.mxu0 0.0
        %1044 = vmatpush2.msra.mxu0 0.0
        %1045 = vmatprep.subr.mxu0 0.0
        %1046 = vmatpush2.msra.mxu0 0.0
        %1047 = vmatprep.subr.mxu0 0.0
        %1048 = vmatpush2.msra.mxu0 0.0
        %1049 = vmatprep.mubr.f32.mxu0 0.0
        %1050 = vmatmul.mubr.f32.gmra.mxu0 %v504
        %v1051 = vpop.f32.mrf.mxu0
        %v1052 = vadd.f32 %v795, %v1051
        %v1053 = vpop.f32.mrf.mxu0
        %v1054 = vadd.f32 %v797, %v1053
        %1055 = vmatprep.mubr.f32.mxu0 0.0
        %1056 = vmatmul.mubr.f32.gmra.mxu0 %v505
        %v1057 = vpop.f32.mrf.mxu0
        %v1058 = vadd.f32 %v801, %v1057
        %v1059 = vpop.f32.mrf.mxu0
        %v1060 = vadd.f32 %v803, %v1059
        %1061 = vmatprep.mubr.f32.mxu0 0.0
        %1062 = vmatmul.mubr.f32.gmra.mxu0 %v506
        %v1063 = vpop.f32.mrf.mxu0
        %v1064 = vadd.f32 %v807, %v1063
        %v1065 = vpop.f32.mrf.mxu0
        %v1066 = vadd.f32 %v809, %v1065
        %1067 = vmatprep.mubr.f32.mxu0 0.0
        %1068 = vmatmul.mubr.f32.gmra.mxu0 %v507
        %v1069 = vpop.f32.mrf.mxu0
        %v1070 = vadd.f32 %v813, %v1069
        %v1071 = vpop.f32.mrf.mxu0
        %v1072 = vadd.f32 %v815, %v1071
        %1073 = vmatprep.mubr.f32.mxu0 0.0
        %1074 = vmatmul.mubr.f32.gmra.mxu0 %v508
        %v1075 = vpop.f32.mrf.mxu0
        %v1076 = vadd.f32 %v819, %v1075
        %v1077 = vpop.f32.mrf.mxu0
        %v1078 = vadd.f32 %v821, %v1077
        %1079 = vmatprep.mubr.f32.mxu0 0.0
        %1080 = vmatmul.mubr.f32.gmra.mxu0 %v509
        %v1081 = vpop.f32.mrf.mxu0
        %v1082 = vadd.f32 %v825, %v1081
        %v1083 = vpop.f32.mrf.mxu0
        %v1084 = vadd.f32 %v827, %v1083
        %1085 = vmatprep.mubr.f32.mxu0 0.0
        %1086 = vmatmul.mubr.f32.gmra.mxu0 %v510
        %v1087 = vpop.f32.mrf.mxu0
        %v1088 = vadd.f32 %v831, %v1087
        %v1089 = vpop.f32.mrf.mxu0
        %v1090 = vadd.f32 %v833, %v1089
        %1091 = vmatprep.mubr.f32.mxu0 0.0
        %1092 = vmatmul.mubr.f32.gmra.mxu0 %v511
        %v1093 = vpop.f32.mrf.mxu0
        %v1094 = vadd.f32 %v837, %v1093
        %v1095 = vpop.f32.mrf.mxu0
        %v1096 = vadd.f32 %v839, %v1095
        %1097 = vmatprep.mubr.f32.mxu0 0.0
        %1098 = vmatmul.mubr.f32.gmra.mxu0 %v512
        %v1099 = vpop.f32.mrf.mxu0
        %v1100 = vadd.f32 %v843, %v1099
        %v1101 = vpop.f32.mrf.mxu0
        %v1102 = vadd.f32 %v845, %v1101
        %1103 = vmatprep.mubr.f32.mxu0 0.0
        %1104 = vmatmul.mubr.f32.gmra.mxu0 %v513
        %v1105 = vpop.f32.mrf.mxu0
        %v1106 = vadd.f32 %v849, %v1105
        %v1107 = vpop.f32.mrf.mxu0
        %v1108 = vadd.f32 %v851, %v1107
        %1109 = vmatprep.mubr.f32.mxu0 0.0
        %1110 = vmatmul.mubr.f32.gmra.mxu0 %v514
        %v1111 = vpop.f32.mrf.mxu0
        %v1112 = vadd.f32 %v855, %v1111
        %v1113 = vpop.f32.mrf.mxu0
        %v1114 = vadd.f32 %v857, %v1113
        %1115 = vmatprep.mubr.f32.mxu0 0.0
        %1116 = vmatmul.mubr.f32.gmra.mxu0 %v515
        %v1117 = vpop.f32.mrf.mxu0
        %v1118 = vadd.f32 %v861, %v1117
        %v1119 = vpop.f32.mrf.mxu0
        %v1120 = vadd.f32 %v863, %v1119
        %1121 = vmatprep.mubr.f32.mxu0 0.0
        %1122 = vmatmul.mubr.f32.gmra.mxu0 %v516
        %v1123 = vpop.f32.mrf.mxu0
        %v1124 = vadd.f32 %v867, %v1123
        %v1125 = vpop.f32.mrf.mxu0
        %v1126 = vadd.f32 %v869, %v1125
        %1127 = vmatprep.mubr.f32.mxu0 0.0
        %1128 = vmatmul.mubr.f32.gmra.mxu0 %v517
        %v1129 = vpop.f32.mrf.mxu0
        %v1130 = vadd.f32 %v873, %v1129
        %v1131 = vpop.f32.mrf.mxu0
        %v1132 = vadd.f32 %v875, %v1131
        %1133 = vmatprep.mubr.f32.mxu0 0.0
        %1134 = vmatmul.mubr.f32.gmra.mxu0 %v518
        %v1135 = vpop.f32.mrf.mxu0
        %v1136 = vadd.f32 %v879, %v1135
        %v1137 = vpop.f32.mrf.mxu0
        %v1138 = vadd.f32 %v881, %v1137
        %1139 = vmatprep.mubr.f32.mxu0 0.0
        %1140 = vmatmul.mubr.f32.gmra.mxu0 %v519
        %v1141 = vpop.f32.mrf.mxu0
        %v1142 = vadd.f32 %v885, %v1141
        %v1143 = vpop.f32.mrf.mxu0
        %v1144 = vadd.f32 %v887, %v1143
        %1145 = vmatprep.mubr.f32.mxu0 0.0
        %1146 = vmatmul.mubr.f32.gmra.mxu0 %v520
        %v1147 = vpop.f32.mrf.mxu0
        %v1148 = vadd.f32 %v891, %v1147
        %v1149 = vpop.f32.mrf.mxu0
        %v1150 = vadd.f32 %v893, %v1149
        %1151 = vmatprep.mubr.f32.mxu0 0.0
        %1152 = vmatmul.mubr.f32.gmra.mxu0 %v521
        %v1153 = vpop.f32.mrf.mxu0
        %v1154 = vadd.f32 %v897, %v1153
        %v1155 = vpop.f32.mrf.mxu0
        %v1156 = vadd.f32 %v899, %v1155
        %1157 = vmatprep.mubr.f32.mxu0 0.0
        %1158 = vmatmul.mubr.f32.gmra.mxu0 %v522
        %v1159 = vpop.f32.mrf.mxu0
        %v1160 = vadd.f32 %v903, %v1159
        %v1161 = vpop.f32.mrf.mxu0
        %v1162 = vadd.f32 %v905, %v1161
        %1163 = vmatprep.mubr.f32.mxu0 0.0
        %1164 = vmatmul.mubr.f32.gmra.mxu0 %v523
        %v1165 = vpop.f32.mrf.mxu0
        %v1166 = vadd.f32 %v909, %v1165
        %v1167 = vpop.f32.mrf.mxu0
        %v1168 = vadd.f32 %v911, %v1167
        %1169 = vmatprep.mubr.f32.mxu0 0.0
        %1170 = vmatmul.mubr.f32.gmra.mxu0 %v524
        %v1171 = vpop.f32.mrf.mxu0
        %v1172 = vadd.f32 %v915, %v1171
        %v1173 = vpop.f32.mrf.mxu0
        %v1174 = vadd.f32 %v917, %v1173
        %1175 = vmatprep.mubr.f32.mxu0 0.0
        %1176 = vmatmul.mubr.f32.gmra.mxu0 %v525
        %v1177 = vpop.f32.mrf.mxu0
        %v1178 = vadd.f32 %v921, %v1177
        %v1179 = vpop.f32.mrf.mxu0
        %v1180 = vadd.f32 %v923, %v1179
        %1181 = vmatprep.mubr.f32.mxu0 0.0
        %1182 = vmatmul.mubr.f32.gmra.mxu0 %v526
        %v1183 = vpop.f32.mrf.mxu0
        %v1184 = vadd.f32 %v927, %v1183
        %v1185 = vpop.f32.mrf.mxu0
        %v1186 = vadd.f32 %v929, %v1185
        %1187 = vmatprep.mubr.f32.mxu0 0.0
        %1188 = vmatmul.mubr.f32.gmra.mxu0 %v527
        %v1189 = vpop.f32.mrf.mxu0
        %v1190 = vadd.f32 %v933, %v1189
        %v1191 = vpop.f32.mrf.mxu0
        %v1192 = vadd.f32 %v935, %v1191
        %1193 = vmatprep.mubr.f32.mxu0 0.0
        %1194 = vmatmul.mubr.f32.gmra.mxu0 %v528
        %v1195 = vpop.f32.mrf.mxu0
        %v1196 = vadd.f32 %v939, %v1195
        %v1197 = vpop.f32.mrf.mxu0
        %v1198 = vadd.f32 %v941, %v1197
        %1199 = vmatprep.mubr.f32.mxu0 0.0
        %1200 = vmatmul.mubr.f32.gmra.mxu0 %v529
        %v1201 = vpop.f32.mrf.mxu0
        %v1202 = vadd.f32 %v945, %v1201
        %v1203 = vpop.f32.mrf.mxu0
        %v1204 = vadd.f32 %v947, %v1203
        %1205 = vmatprep.mubr.f32.mxu0 0.0
        %1206 = vmatmul.mubr.f32.gmra.mxu0 %v530
        %v1207 = vpop.f32.mrf.mxu0
        %v1208 = vadd.f32 %v951, %v1207
        %v1209 = vpop.f32.mrf.mxu0
        %v1210 = vadd.f32 %v953, %v1209
        %1211 = vmatprep.mubr.f32.mxu0 0.0
        %1212 = vmatmul.mubr.f32.gmra.mxu0 %v531
        %v1213 = vpop.f32.mrf.mxu0
        %v1214 = vadd.f32 %v957, %v1213
        %v1215 = vpop.f32.mrf.mxu0
        %v1216 = vadd.f32 %v959, %v1215
        %1217 = vmatprep.mubr.f32.mxu0 0.0
        %1218 = vmatmul.mubr.f32.gmra.mxu0 %v532
        %v1219 = vpop.f32.mrf.mxu0
        %v1220 = vadd.f32 %v963, %v1219
        %v1221 = vpop.f32.mrf.mxu0
        %v1222 = vadd.f32 %v965, %v1221
        %1223 = vmatprep.mubr.f32.mxu0 0.0
        %1224 = vmatmul.mubr.f32.gmra.mxu0 %v533
        %v1225 = vpop.f32.mrf.mxu0
        %v1226 = vadd.f32 %v969, %v1225
        %v1227 = vpop.f32.mrf.mxu0
        %v1228 = vadd.f32 %v971, %v1227
        %1229 = vmatprep.mubr.f32.mxu0 0.0
        %1230 = vmatmul.mubr.f32.gmra.mxu0 %v534
        %v1231 = vpop.f32.mrf.mxu0
        %v1232 = vadd.f32 %v975, %v1231
        %v1233 = vpop.f32.mrf.mxu0
        %v1234 = vadd.f32 %v977, %v1233
        %1235 = vmatprep.mubr.f32.mxu0 0.0
        %1236 = vmatmul.mubr.f32.gmra.mxu0 %v535
        %v1237 = vpop.f32.mrf.mxu0
        %v1238 = vadd.f32 %v981, %v1237
        %v1239 = vpop.f32.mrf.mxu0
        %v1240 = vadd.f32 %v983, %v1239
        %1241 = vdwg.mxu0
        %1242 = vmatprep.subr.mxu0 %v599
        %1243 = vmatpush1.msra.mxu0 %v598
        %1244 = vmatprep.subr.mxu0 %v595
        %1245 = vmatpush1.msra.mxu0 %v594
        %1246 = vmatprep.subr.mxu0 %v591
        %1247 = vmatpush1.msra.mxu0 %v590
        %1248 = vmatprep.subr.mxu0 %v587
        %1249 = vmatpush1.msra.mxu0 %v586
        %1250 = vmatprep.subr.mxu0 %v583
        %1251 = vmatpush1.msra.mxu0 %v582
        %1252 = vmatprep.subr.mxu0 %v579
        %1253 = vmatpush1.msra.mxu0 %v578
        %1254 = vmatprep.subr.mxu0 %v575
        %1255 = vmatpush1.msra.mxu0 %v574
        %1256 = vmatprep.subr.mxu0 %v571
        %1257 = vmatpush1.msra.mxu0 %v570
        %1258 = vmatprep.subr.mxu0 %v567
        %1259 = vmatpush1.msra.mxu0 %v566
        %1260 = vmatprep.subr.mxu0 %v563
        %1261 = vmatpush1.msra.mxu0 %v562
        %1262 = vmatprep.subr.mxu0 %v559
        %1263 = vmatpush1.msra.mxu0 %v558
        %1264 = vmatprep.subr.mxu0 %v555
        %1265 = vmatpush1.msra.mxu0 %v554
        %1266 = vmatprep.subr.mxu0 %v551
        %1267 = vmatpush1.msra.mxu0 %v550
        %1268 = vmatprep.subr.mxu0 %v547
        %1269 = vmatpush1.msra.mxu0 %v546
        %1270 = vmatprep.subr.mxu0 %v543
        %1271 = vmatpush1.msra.mxu0 %v542
        %1272 = vmatprep.subr.mxu0 %v539
        %1273 = vmatpush1.msra.mxu0 %v538
        %1274 = vmatprep.subr.mxu0 %v663
        %1275 = vmatpush2.msra.mxu0 %v662
        %1276 = vmatprep.subr.mxu0 %v659
        %1277 = vmatpush2.msra.mxu0 %v658
        %1278 = vmatprep.subr.mxu0 %v655
        %1279 = vmatpush2.msra.mxu0 %v654
        %1280 = vmatprep.subr.mxu0 %v651
        %1281 = vmatpush2.msra.mxu0 %v650
        %1282 = vmatprep.subr.mxu0 %v647
        %1283 = vmatpush2.msra.mxu0 %v646
        %1284 = vmatprep.subr.mxu0 %v643
        %1285 = vmatpush2.msra.mxu0 %v642
        %1286 = vmatprep.subr.mxu0 %v639
        %1287 = vmatpush2.msra.mxu0 %v638
        %1288 = vmatprep.subr.mxu0 %v635
        %1289 = vmatpush2.msra.mxu0 %v634
        %1290 = vmatprep.subr.mxu0 %v631
        %1291 = vmatpush2.msra.mxu0 %v630
        %1292 = vmatprep.subr.mxu0 %v627
        %1293 = vmatpush2.msra.mxu0 %v626
        %1294 = vmatprep.subr.mxu0 %v623
        %1295 = vmatpush2.msra.mxu0 %v622
        %1296 = vmatprep.subr.mxu0 %v619
        %1297 = vmatpush2.msra.mxu0 %v618
        %1298 = vmatprep.subr.mxu0 %v615
        %1299 = vmatpush2.msra.mxu0 %v614
        %1300 = vmatprep.subr.mxu0 %v611
        %1301 = vmatpush2.msra.mxu0 %v610
        %1302 = vmatprep.subr.mxu0 %v607
        %1303 = vmatpush2.msra.mxu0 %v606
        %1304 = vmatprep.subr.mxu0 %v603
        %1305 = vmatpush2.msra.mxu0 %v602
        %1306 = vmatprep.mubr.f32.mxu0 %v215
        %1307 = vmatmul.mubr.f32.gmra.mxu0 %v376
        %v1308 = vpop.f32.mrf.mxu0
        %v1309 = vadd.f32 0.0, %v1308
        %v1310 = vpop.f32.mrf.mxu0
        %v1311 = vadd.f32 0.0, %v1310
        %1312 = vmatprep.mubr.f32.mxu0 %v216
        %1313 = vmatmul.mubr.f32.gmra.mxu0 %v377
        %v1314 = vpop.f32.mrf.mxu0
        %v1315 = vadd.f32 0.0, %v1314
        %v1316 = vpop.f32.mrf.mxu0
        %v1317 = vadd.f32 0.0, %v1316
        %1318 = vmatprep.mubr.f32.mxu0 %v217
        %1319 = vmatmul.mubr.f32.gmra.mxu0 %v378
        %v1320 = vpop.f32.mrf.mxu0
        %v1321 = vadd.f32 0.0, %v1320
        %v1322 = vpop.f32.mrf.mxu0
        %v1323 = vadd.f32 0.0, %v1322
        %1324 = vmatprep.mubr.f32.mxu0 %v218
        %1325 = vmatmul.mubr.f32.gmra.mxu0 %v379
        %v1326 = vpop.f32.mrf.mxu0
        %v1327 = vadd.f32 0.0, %v1326
        %v1328 = vpop.f32.mrf.mxu0
        %v1329 = vadd.f32 0.0, %v1328
        %1330 = vmatprep.mubr.f32.mxu0 %v219
        %1331 = vmatmul.mubr.f32.gmra.mxu0 %v380
        %v1332 = vpop.f32.mrf.mxu0
        %v1333 = vadd.f32 0.0, %v1332
        %v1334 = vpop.f32.mrf.mxu0
        %v1335 = vadd.f32 0.0, %v1334
        %1336 = vmatprep.mubr.f32.mxu0 %v220
        %1337 = vmatmul.mubr.f32.gmra.mxu0 %v381
        %v1338 = vpop.f32.mrf.mxu0
        %v1339 = vadd.f32 0.0, %v1338
        %v1340 = vpop.f32.mrf.mxu0
        %v1341 = vadd.f32 0.0, %v1340
        %1342 = vmatprep.mubr.f32.mxu0 %v221
        %1343 = vmatmul.mubr.f32.gmra.mxu0 %v382
        %v1344 = vpop.f32.mrf.mxu0
        %v1345 = vadd.f32 0.0, %v1344
        %v1346 = vpop.f32.mrf.mxu0
        %v1347 = vadd.f32 0.0, %v1346
        %1348 = vmatprep.mubr.f32.mxu0 %v222
        %1349 = vmatmul.mubr.f32.gmra.mxu0 %v383
        %v1350 = vpop.f32.mrf.mxu0
        %v1351 = vadd.f32 0.0, %v1350
        %v1352 = vpop.f32.mrf.mxu0
        %v1353 = vadd.f32 0.0, %v1352
        %1354 = vmatprep.mubr.f32.mxu0 %v223
        %1355 = vmatmul.mubr.f32.gmra.mxu0 %v384
        %v1356 = vpop.f32.mrf.mxu0
        %v1357 = vadd.f32 0.0, %v1356
        %v1358 = vpop.f32.mrf.mxu0
        %v1359 = vadd.f32 0.0, %v1358
        %1360 = vmatprep.mubr.f32.mxu0 %v224
        %1361 = vmatmul.mubr.f32.gmra.mxu0 %v385
        %v1362 = vpop.f32.mrf.mxu0
        %v1363 = vadd.f32 0.0, %v1362
        %v1364 = vpop.f32.mrf.mxu0
        %v1365 = vadd.f32 0.0, %v1364
        %1366 = vmatprep.mubr.f32.mxu0 %v225
        %1367 = vmatmul.mubr.f32.gmra.mxu0 %v386
        %v1368 = vpop.f32.mrf.mxu0
        %v1369 = vadd.f32 0.0, %v1368
        %v1370 = vpop.f32.mrf.mxu0
        %v1371 = vadd.f32 0.0, %v1370
        %1372 = vmatprep.mubr.f32.mxu0 %v226
        %1373 = vmatmul.mubr.f32.gmra.mxu0 %v387
        %v1374 = vpop.f32.mrf.mxu0
        %v1375 = vadd.f32 0.0, %v1374
        %v1376 = vpop.f32.mrf.mxu0
        %v1377 = vadd.f32 0.0, %v1376
        %1378 = vmatprep.mubr.f32.mxu0 %v227
        %1379 = vmatmul.mubr.f32.gmra.mxu0 %v388
        %v1380 = vpop.f32.mrf.mxu0
        %v1381 = vadd.f32 0.0, %v1380
        %v1382 = vpop.f32.mrf.mxu0
        %v1383 = vadd.f32 0.0, %v1382
        %1384 = vmatprep.mubr.f32.mxu0 %v228
        %1385 = vmatmul.mubr.f32.gmra.mxu0 %v389
        %v1386 = vpop.f32.mrf.mxu0
        %v1387 = vadd.f32 0.0, %v1386
        %v1388 = vpop.f32.mrf.mxu0
        %v1389 = vadd.f32 0.0, %v1388
        %1390 = vmatprep.mubr.f32.mxu0 %v229
        %1391 = vmatmul.mubr.f32.gmra.mxu0 %v390
        %v1392 = vpop.f32.mrf.mxu0
        %v1393 = vadd.f32 0.0, %v1392
        %v1394 = vpop.f32.mrf.mxu0
        %v1395 = vadd.f32 0.0, %v1394
        %1396 = vmatprep.mubr.f32.mxu0 %v230
        %1397 = vmatmul.mubr.f32.gmra.mxu0 %v391
        %v1398 = vpop.f32.mrf.mxu0
        %v1399 = vadd.f32 0.0, %v1398
        %v1400 = vpop.f32.mrf.mxu0
        %v1401 = vadd.f32 0.0, %v1400
        %1402 = vmatprep.mubr.f32.mxu0 %v231
        %1403 = vmatmul.mubr.f32.gmra.mxu0 %v392
        %v1404 = vpop.f32.mrf.mxu0
        %v1405 = vadd.f32 0.0, %v1404
        %v1406 = vpop.f32.mrf.mxu0
        %v1407 = vadd.f32 0.0, %v1406
        %1408 = vmatprep.mubr.f32.mxu0 %v232
        %1409 = vmatmul.mubr.f32.gmra.mxu0 %v393
        %v1410 = vpop.f32.mrf.mxu0
        %v1411 = vadd.f32 0.0, %v1410
        %v1412 = vpop.f32.mrf.mxu0
        %v1413 = vadd.f32 0.0, %v1412
        %1414 = vmatprep.mubr.f32.mxu0 %v233
        %1415 = vmatmul.mubr.f32.gmra.mxu0 %v394
        %v1416 = vpop.f32.mrf.mxu0
        %v1417 = vadd.f32 0.0, %v1416
        %v1418 = vpop.f32.mrf.mxu0
        %v1419 = vadd.f32 0.0, %v1418
        %1420 = vmatprep.mubr.f32.mxu0 %v234
        %1421 = vmatmul.mubr.f32.gmra.mxu0 %v395
        %v1422 = vpop.f32.mrf.mxu0
        %v1423 = vadd.f32 0.0, %v1422
        %v1424 = vpop.f32.mrf.mxu0
        %v1425 = vadd.f32 0.0, %v1424
        %1426 = vmatprep.mubr.f32.mxu0 %v235
        %1427 = vmatmul.mubr.f32.gmra.mxu0 %v396
        %v1428 = vpop.f32.mrf.mxu0
        %v1429 = vadd.f32 0.0, %v1428
        %v1430 = vpop.f32.mrf.mxu0
        %v1431 = vadd.f32 0.0, %v1430
        %1432 = vmatprep.mubr.f32.mxu0 %v236
        %1433 = vmatmul.mubr.f32.gmra.mxu0 %v397
        %v1434 = vpop.f32.mrf.mxu0
        %v1435 = vadd.f32 0.0, %v1434
        %v1436 = vpop.f32.mrf.mxu0
        %v1437 = vadd.f32 0.0, %v1436
        %1438 = vmatprep.mubr.f32.mxu0 %v237
        %1439 = vmatmul.mubr.f32.gmra.mxu0 %v398
        %v1440 = vpop.f32.mrf.mxu0
        %v1441 = vadd.f32 0.0, %v1440
        %v1442 = vpop.f32.mrf.mxu0
        %v1443 = vadd.f32 0.0, %v1442
        %1444 = vmatprep.mubr.f32.mxu0 %v238
        %1445 = vmatmul.mubr.f32.gmra.mxu0 %v399
        %v1446 = vpop.f32.mrf.mxu0
        %v1447 = vadd.f32 0.0, %v1446
        %v1448 = vpop.f32.mrf.mxu0
        %v1449 = vadd.f32 0.0, %v1448
        %1450 = vmatprep.mubr.f32.mxu0 %v239
        %1451 = vmatmul.mubr.f32.gmra.mxu0 %v400
        %v1452 = vpop.f32.mrf.mxu0
        %v1453 = vadd.f32 0.0, %v1452
        %v1454 = vpop.f32.mrf.mxu0
        %v1455 = vadd.f32 0.0, %v1454
        %1456 = vmatprep.mubr.f32.mxu0 %v240
        %1457 = vmatmul.mubr.f32.gmra.mxu0 %v401
        %v1458 = vpop.f32.mrf.mxu0
        %v1459 = vadd.f32 0.0, %v1458
        %v1460 = vpop.f32.mrf.mxu0
        %v1461 = vadd.f32 0.0, %v1460
        %1462 = vmatprep.mubr.f32.mxu0 %v241
        %1463 = vmatmul.mubr.f32.gmra.mxu0 %v402
        %v1464 = vpop.f32.mrf.mxu0
        %v1465 = vadd.f32 0.0, %v1464
        %v1466 = vpop.f32.mrf.mxu0
        %v1467 = vadd.f32 0.0, %v1466
        %1468 = vmatprep.mubr.f32.mxu0 %v242
        %1469 = vmatmul.mubr.f32.gmra.mxu0 %v403
        %v1470 = vpop.f32.mrf.mxu0
        %v1471 = vadd.f32 0.0, %v1470
        %v1472 = vpop.f32.mrf.mxu0
        %v1473 = vadd.f32 0.0, %v1472
        %1474 = vmatprep.mubr.f32.mxu0 %v243
        %1475 = vmatmul.mubr.f32.gmra.mxu0 %v404
        %v1476 = vpop.f32.mrf.mxu0
        %v1477 = vadd.f32 0.0, %v1476
        %v1478 = vpop.f32.mrf.mxu0
        %v1479 = vadd.f32 0.0, %v1478
        %1480 = vmatprep.mubr.f32.mxu0 %v244
        %1481 = vmatmul.mubr.f32.gmra.mxu0 %v405
        %v1482 = vpop.f32.mrf.mxu0
        %v1483 = vadd.f32 0.0, %v1482
        %v1484 = vpop.f32.mrf.mxu0
        %v1485 = vadd.f32 0.0, %v1484
        %1486 = vmatprep.mubr.f32.mxu0 %v245
        %1487 = vmatmul.mubr.f32.gmra.mxu0 %v406
        %v1488 = vpop.f32.mrf.mxu0
        %v1489 = vadd.f32 0.0, %v1488
        %v1490 = vpop.f32.mrf.mxu0
        %v1491 = vadd.f32 0.0, %v1490
        %1492 = vmatprep.mubr.f32.mxu0 %v246
        %1493 = vmatmul.mubr.f32.gmra.mxu0 %v407
        %v1494 = vpop.f32.mrf.mxu0
        %v1495 = vadd.f32 0.0, %v1494
        %v1496 = vpop.f32.mrf.mxu0
        %v1497 = vadd.f32 0.0, %v1496
        %1498 = vdwg.mxu0
        %1499 = vmatprep.subr.mxu0 %v727
        %1500 = vmatpush1.msra.mxu0 %v726
        %1501 = vmatprep.subr.mxu0 %v723
        %1502 = vmatpush1.msra.mxu0 %v722
        %1503 = vmatprep.subr.mxu0 %v719
        %1504 = vmatpush1.msra.mxu0 %v718
        %1505 = vmatprep.subr.mxu0 %v715
        %1506 = vmatpush1.msra.mxu0 %v714
        %1507 = vmatprep.subr.mxu0 %v711
        %1508 = vmatpush1.msra.mxu0 %v710
        %1509 = vmatprep.subr.mxu0 %v707
        %1510 = vmatpush1.msra.mxu0 %v706
        %1511 = vmatprep.subr.mxu0 %v703
        %1512 = vmatpush1.msra.mxu0 %v702
        %1513 = vmatprep.subr.mxu0 %v699
        %1514 = vmatpush1.msra.mxu0 %v698
        %1515 = vmatprep.subr.mxu0 %v695
        %1516 = vmatpush1.msra.mxu0 %v694
        %1517 = vmatprep.subr.mxu0 %v691
        %1518 = vmatpush1.msra.mxu0 %v690
        %1519 = vmatprep.subr.mxu0 %v687
        %1520 = vmatpush1.msra.mxu0 %v686
        %1521 = vmatprep.subr.mxu0 %v683
        %1522 = vmatpush1.msra.mxu0 %v682
        %1523 = vmatprep.subr.mxu0 %v679
        %1524 = vmatpush1.msra.mxu0 %v678
        %1525 = vmatprep.subr.mxu0 %v675
        %1526 = vmatpush1.msra.mxu0 %v674
        %1527 = vmatprep.subr.mxu0 %v671
        %1528 = vmatpush1.msra.mxu0 %v670
        %1529 = vmatprep.subr.mxu0 %v667
        %1530 = vmatpush1.msra.mxu0 %v666
        %1531 = vmatprep.subr.mxu0 0.0
        %1532 = vmatpush2.msra.mxu0 0.0
        %1533 = vmatprep.subr.mxu0 0.0
        %1534 = vmatpush2.msra.mxu0 0.0
        %1535 = vmatprep.subr.mxu0 0.0
        %1536 = vmatpush2.msra.mxu0 0.0
        %1537 = vmatprep.subr.mxu0 0.0
        %1538 = vmatpush2.msra.mxu0 0.0
        %1539 = vmatprep.subr.mxu0 0.0
        %1540 = vmatpush2.msra.mxu0 0.0
        %1541 = vmatprep.subr.mxu0 0.0
        %1542 = vmatpush2.msra.mxu0 0.0
        %1543 = vmatprep.subr.mxu0 0.0
        %1544 = vmatpush2.msra.mxu0 0.0
        %1545 = vmatprep.subr.mxu0 0.0
        %1546 = vmatpush2.msra.mxu0 0.0
        %1547 = vmatprep.subr.mxu0 0.0
        %1548 = vmatpush2.msra.mxu0 0.0
        %1549 = vmatprep.subr.mxu0 0.0
        %1550 = vmatpush2.msra.mxu0 0.0
        %1551 = vmatprep.subr.mxu0 0.0
        %1552 = vmatpush2.msra.mxu0 0.0
        %1553 = vmatprep.subr.mxu0 0.0
        %1554 = vmatpush2.msra.mxu0 0.0
        %1555 = vmatprep.subr.mxu0 0.0
        %1556 = vmatpush2.msra.mxu0 0.0
        %1557 = vmatprep.subr.mxu0 0.0
        %1558 = vmatpush2.msra.mxu0 0.0
        %1559 = vmatprep.subr.mxu0 0.0
        %1560 = vmatpush2.msra.mxu0 0.0
        %1561 = vmatprep.subr.mxu0 0.0
        %1562 = vmatpush2.msra.mxu0 0.0
        %1563 = vmatprep.mubr.f32.mxu0 0.0
        %1564 = vmatmul.mubr.f32.gmra.mxu0 %v504
        %v1565 = vpop.f32.mrf.mxu0
        %v1566 = vadd.f32 %v1309, %v1565
        %v1567 = vpop.f32.mrf.mxu0
        %v1568 = vadd.f32 %v1311, %v1567
        %1569 = vmatprep.mubr.f32.mxu0 0.0
        %1570 = vmatmul.mubr.f32.gmra.mxu0 %v505
        %v1571 = vpop.f32.mrf.mxu0
        %v1572 = vadd.f32 %v1315, %v1571
        %v1573 = vpop.f32.mrf.mxu0
        %v1574 = vadd.f32 %v1317, %v1573
        %1575 = vmatprep.mubr.f32.mxu0 0.0
        %1576 = vmatmul.mubr.f32.gmra.mxu0 %v506
        %v1577 = vpop.f32.mrf.mxu0
        %v1578 = vadd.f32 %v1321, %v1577
        %v1579 = vpop.f32.mrf.mxu0
        %v1580 = vadd.f32 %v1323, %v1579
        %1581 = vmatprep.mubr.f32.mxu0 0.0
        %1582 = vmatmul.mubr.f32.gmra.mxu0 %v507
        %v1583 = vpop.f32.mrf.mxu0
        %v1584 = vadd.f32 %v1327, %v1583
        %v1585 = vpop.f32.mrf.mxu0
        %v1586 = vadd.f32 %v1329, %v1585
        %1587 = vmatprep.mubr.f32.mxu0 0.0
        %1588 = vmatmul.mubr.f32.gmra.mxu0 %v508
        %v1589 = vpop.f32.mrf.mxu0
        %v1590 = vadd.f32 %v1333, %v1589
        %v1591 = vpop.f32.mrf.mxu0
        %v1592 = vadd.f32 %v1335, %v1591
        %1593 = vmatprep.mubr.f32.mxu0 0.0
        %1594 = vmatmul.mubr.f32.gmra.mxu0 %v509
        %v1595 = vpop.f32.mrf.mxu0
        %v1596 = vadd.f32 %v1339, %v1595
        %v1597 = vpop.f32.mrf.mxu0
        %v1598 = vadd.f32 %v1341, %v1597
        %1599 = vmatprep.mubr.f32.mxu0 0.0
        %1600 = vmatmul.mubr.f32.gmra.mxu0 %v510
        %v1601 = vpop.f32.mrf.mxu0
        %v1602 = vadd.f32 %v1345, %v1601
        %v1603 = vpop.f32.mrf.mxu0
        %v1604 = vadd.f32 %v1347, %v1603
        %1605 = vmatprep.mubr.f32.mxu0 0.0
        %1606 = vmatmul.mubr.f32.gmra.mxu0 %v511
        %v1607 = vpop.f32.mrf.mxu0
        %v1608 = vadd.f32 %v1351, %v1607
        %v1609 = vpop.f32.mrf.mxu0
        %v1610 = vadd.f32 %v1353, %v1609
        %1611 = vmatprep.mubr.f32.mxu0 0.0
        %1612 = vmatmul.mubr.f32.gmra.mxu0 %v512
        %v1613 = vpop.f32.mrf.mxu0
        %v1614 = vadd.f32 %v1357, %v1613
        %v1615 = vpop.f32.mrf.mxu0
        %v1616 = vadd.f32 %v1359, %v1615
        %1617 = vmatprep.mubr.f32.mxu0 0.0
        %1618 = vmatmul.mubr.f32.gmra.mxu0 %v513
        %v1619 = vpop.f32.mrf.mxu0
        %v1620 = vadd.f32 %v1363, %v1619
        %v1621 = vpop.f32.mrf.mxu0
        %v1622 = vadd.f32 %v1365, %v1621
        %1623 = vmatprep.mubr.f32.mxu0 0.0
        %1624 = vmatmul.mubr.f32.gmra.mxu0 %v514
        %v1625 = vpop.f32.mrf.mxu0
        %v1626 = vadd.f32 %v1369, %v1625
        %v1627 = vpop.f32.mrf.mxu0
        %v1628 = vadd.f32 %v1371, %v1627
        %1629 = vmatprep.mubr.f32.mxu0 0.0
        %1630 = vmatmul.mubr.f32.gmra.mxu0 %v515
        %v1631 = vpop.f32.mrf.mxu0
        %v1632 = vadd.f32 %v1375, %v1631
        %v1633 = vpop.f32.mrf.mxu0
        %v1634 = vadd.f32 %v1377, %v1633
        %1635 = vmatprep.mubr.f32.mxu0 0.0
        %1636 = vmatmul.mubr.f32.gmra.mxu0 %v516
        %v1637 = vpop.f32.mrf.mxu0
        %v1638 = vadd.f32 %v1381, %v1637
        %v1639 = vpop.f32.mrf.mxu0
        %v1640 = vadd.f32 %v1383, %v1639
        %1641 = vmatprep.mubr.f32.mxu0 0.0
        %1642 = vmatmul.mubr.f32.gmra.mxu0 %v517
        %v1643 = vpop.f32.mrf.mxu0
        %v1644 = vadd.f32 %v1387, %v1643
        %v1645 = vpop.f32.mrf.mxu0
        %v1646 = vadd.f32 %v1389, %v1645
        %1647 = vmatprep.mubr.f32.mxu0 0.0
        %1648 = vmatmul.mubr.f32.gmra.mxu0 %v518
        %v1649 = vpop.f32.mrf.mxu0
        %v1650 = vadd.f32 %v1393, %v1649
        %v1651 = vpop.f32.mrf.mxu0
        %v1652 = vadd.f32 %v1395, %v1651
        %1653 = vmatprep.mubr.f32.mxu0 0.0
        %1654 = vmatmul.mubr.f32.gmra.mxu0 %v519
        %v1655 = vpop.f32.mrf.mxu0
        %v1656 = vadd.f32 %v1399, %v1655
        %v1657 = vpop.f32.mrf.mxu0
        %v1658 = vadd.f32 %v1401, %v1657
        %1659 = vmatprep.mubr.f32.mxu0 0.0
        %1660 = vmatmul.mubr.f32.gmra.mxu0 %v520
        %v1661 = vpop.f32.mrf.mxu0
        %v1662 = vadd.f32 %v1405, %v1661
        %v1663 = vpop.f32.mrf.mxu0
        %v1664 = vadd.f32 %v1407, %v1663
        %1665 = vmatprep.mubr.f32.mxu0 0.0
        %1666 = vmatmul.mubr.f32.gmra.mxu0 %v521
        %v1667 = vpop.f32.mrf.mxu0
        %v1668 = vadd.f32 %v1411, %v1667
        %v1669 = vpop.f32.mrf.mxu0
        %v1670 = vadd.f32 %v1413, %v1669
        %1671 = vmatprep.mubr.f32.mxu0 0.0
        %1672 = vmatmul.mubr.f32.gmra.mxu0 %v522
        %v1673 = vpop.f32.mrf.mxu0
        %v1674 = vadd.f32 %v1417, %v1673
        %v1675 = vpop.f32.mrf.mxu0
        %v1676 = vadd.f32 %v1419, %v1675
        %1677 = vmatprep.mubr.f32.mxu0 0.0
        %1678 = vmatmul.mubr.f32.gmra.mxu0 %v523
        %v1679 = vpop.f32.mrf.mxu0
        %v1680 = vadd.f32 %v1423, %v1679
        %v1681 = vpop.f32.mrf.mxu0
        %v1682 = vadd.f32 %v1425, %v1681
        %1683 = vmatprep.mubr.f32.mxu0 0.0
        %1684 = vmatmul.mubr.f32.gmra.mxu0 %v524
        %v1685 = vpop.f32.mrf.mxu0
        %v1686 = vadd.f32 %v1429, %v1685
        %v1687 = vpop.f32.mrf.mxu0
        %v1688 = vadd.f32 %v1431, %v1687
        %1689 = vmatprep.mubr.f32.mxu0 0.0
        %1690 = vmatmul.mubr.f32.gmra.mxu0 %v525
        %v1691 = vpop.f32.mrf.mxu0
        %v1692 = vadd.f32 %v1435, %v1691
        %v1693 = vpop.f32.mrf.mxu0
        %v1694 = vadd.f32 %v1437, %v1693
        %1695 = vmatprep.mubr.f32.mxu0 0.0
        %1696 = vmatmul.mubr.f32.gmra.mxu0 %v526
        %v1697 = vpop.f32.mrf.mxu0
        %v1698 = vadd.f32 %v1441, %v1697
        %v1699 = vpop.f32.mrf.mxu0
        %v1700 = vadd.f32 %v1443, %v1699
        %1701 = vmatprep.mubr.f32.mxu0 0.0
        %1702 = vmatmul.mubr.f32.gmra.mxu0 %v527
        %v1703 = vpop.f32.mrf.mxu0
        %v1704 = vadd.f32 %v1447, %v1703
        %v1705 = vpop.f32.mrf.mxu0
        %v1706 = vadd.f32 %v1449, %v1705
        %1707 = vmatprep.mubr.f32.mxu0 0.0
        %1708 = vmatmul.mubr.f32.gmra.mxu0 %v528
        %v1709 = vpop.f32.mrf.mxu0
        %v1710 = vadd.f32 %v1453, %v1709
        %v1711 = vpop.f32.mrf.mxu0
        %v1712 = vadd.f32 %v1455, %v1711
        %1713 = vmatprep.mubr.f32.mxu0 0.0
        %1714 = vmatmul.mubr.f32.gmra.mxu0 %v529
        %v1715 = vpop.f32.mrf.mxu0
        %v1716 = vadd.f32 %v1459, %v1715
        %v1717 = vpop.f32.mrf.mxu0
        %v1718 = vadd.f32 %v1461, %v1717
        %1719 = vmatprep.mubr.f32.mxu0 0.0
        %1720 = vmatmul.mubr.f32.gmra.mxu0 %v530
        %v1721 = vpop.f32.mrf.mxu0
        %v1722 = vadd.f32 %v1465, %v1721
        %v1723 = vpop.f32.mrf.mxu0
        %v1724 = vadd.f32 %v1467, %v1723
        %1725 = vmatprep.mubr.f32.mxu0 0.0
        %1726 = vmatmul.mubr.f32.gmra.mxu0 %v531
        %v1727 = vpop.f32.mrf.mxu0
        %v1728 = vadd.f32 %v1471, %v1727
        %v1729 = vpop.f32.mrf.mxu0
        %v1730 = vadd.f32 %v1473, %v1729
        %1731 = vmatprep.mubr.f32.mxu0 0.0
        %1732 = vmatmul.mubr.f32.gmra.mxu0 %v532
        %v1733 = vpop.f32.mrf.mxu0
        %v1734 = vadd.f32 %v1477, %v1733
        %v1735 = vpop.f32.mrf.mxu0
        %v1736 = vadd.f32 %v1479, %v1735
        %1737 = vmatprep.mubr.f32.mxu0 0.0
        %1738 = vmatmul.mubr.f32.gmra.mxu0 %v533
        %v1739 = vpop.f32.mrf.mxu0
        %v1740 = vadd.f32 %v1483, %v1739
        %v1741 = vpop.f32.mrf.mxu0
        %v1742 = vadd.f32 %v1485, %v1741
        %1743 = vmatprep.mubr.f32.mxu0 0.0
        %1744 = vmatmul.mubr.f32.gmra.mxu0 %v534
        %v1745 = vpop.f32.mrf.mxu0
        %v1746 = vadd.f32 %v1489, %v1745
        %v1747 = vpop.f32.mrf.mxu0
        %v1748 = vadd.f32 %v1491, %v1747
        %1749 = vmatprep.mubr.f32.mxu0 0.0
        %1750 = vmatmul.mubr.f32.gmra.mxu0 %v535
        %v1751 = vpop.f32.mrf.mxu0
        %v1752 = vadd.f32 %v1495, %v1751
        %v1753 = vpop.f32.mrf.mxu0
        %v1754 = vadd.f32 %v1497, %v1753
        %1755 = vdwg.mxu0
        %vm1756 = vcmp.lt.s32.totalorder %v248, 0
        %v1757 = vsub.s32 0, %v248
        %v1758 = vsel %vm1756, %v1757, %v248
        %v1759 = vshrl.u32 %v1758, 4
        %v1760 = vand.u32 %v1758, 15
        %v1761 = vsub.s32 0, %v1760
        %v1762 = vsel %vm1756, %v1761, %v1760
        %vm1763 = vcmp.lt.s32.totalorder %v249, 0
        %v1764 = vsub.s32 0, %v249
        %v1765 = vsel %vm1763, %v1764, %v249
        %v1766 = vshrl.u32 %v1765, 4
        %v1767 = vand.u32 %v1765, 15
        %v1768 = vsub.s32 0, %v1767
        %v1769 = vsel %vm1763, %v1768, %v1767
        %vm1770 = vcmp.lt.s32.totalorder %v250, 0
        %v1771 = vsub.s32 0, %v250
        %v1772 = vsel %vm1770, %v1771, %v250
        %v1773 = vshrl.u32 %v1772, 4
        %v1774 = vand.u32 %v1772, 15
        %v1775 = vsub.s32 0, %v1774
        %v1776 = vsel %vm1770, %v1775, %v1774
        %vm1777 = vcmp.lt.s32.totalorder %v251, 0
        %v1778 = vsub.s32 0, %v251
        %v1779 = vsel %vm1777, %v1778, %v251
        %v1780 = vshrl.u32 %v1779, 4
        %v1781 = vand.u32 %v1779, 15
        %v1782 = vsub.s32 0, %v1781
        %v1783 = vsel %vm1777, %v1782, %v1781
        %vm1784 = vcmp.lt.s32.totalorder %v252, 0
        %v1785 = vsub.s32 0, %v252
        %v1786 = vsel %vm1784, %v1785, %v252
        %v1787 = vshrl.u32 %v1786, 4
        %v1788 = vand.u32 %v1786, 15
        %v1789 = vsub.s32 0, %v1788
        %v1790 = vsel %vm1784, %v1789, %v1788
        %vm1791 = vcmp.lt.s32.totalorder %v253, 0
        %v1792 = vsub.s32 0, %v253
        %v1793 = vsel %vm1791, %v1792, %v253
        %v1794 = vshrl.u32 %v1793, 4
        %v1795 = vand.u32 %v1793, 15
        %v1796 = vsub.s32 0, %v1795
        %v1797 = vsel %vm1791, %v1796, %v1795
        %vm1798 = vcmp.lt.s32.totalorder %v254, 0
        %v1799 = vsub.s32 0, %v254
        %v1800 = vsel %vm1798, %v1799, %v254
        %v1801 = vshrl.u32 %v1800, 4
        %v1802 = vand.u32 %v1800, 15
        %v1803 = vsub.s32 0, %v1802
        %v1804 = vsel %vm1798, %v1803, %v1802
        %vm1805 = vcmp.lt.s32.totalorder %v255, 0
        %v1806 = vsub.s32 0, %v255
        %v1807 = vsel %vm1805, %v1806, %v255
        %v1808 = vshrl.u32 %v1807, 4
        %v1809 = vand.u32 %v1807, 15
        %v1810 = vsub.s32 0, %v1809
        %v1811 = vsel %vm1805, %v1810, %v1809
        %vm1812 = vcmp.lt.s32.totalorder %v256, 0
        %v1813 = vsub.s32 0, %v256
        %v1814 = vsel %vm1812, %v1813, %v256
        %v1815 = vshrl.u32 %v1814, 4
        %v1816 = vand.u32 %v1814, 15
        %v1817 = vsub.s32 0, %v1816
        %v1818 = vsel %vm1812, %v1817, %v1816
        %vm1819 = vcmp.lt.s32.totalorder %v257, 0
        %v1820 = vsub.s32 0, %v257
        %v1821 = vsel %vm1819, %v1820, %v257
        %v1822 = vshrl.u32 %v1821, 4
        %v1823 = vand.u32 %v1821, 15
        %v1824 = vsub.s32 0, %v1823
        %v1825 = vsel %vm1819, %v1824, %v1823
        %vm1826 = vcmp.lt.s32.totalorder %v258, 0
        %v1827 = vsub.s32 0, %v258
        %v1828 = vsel %vm1826, %v1827, %v258
        %v1829 = vshrl.u32 %v1828, 4
        %v1830 = vand.u32 %v1828, 15
        %v1831 = vsub.s32 0, %v1830
        %v1832 = vsel %vm1826, %v1831, %v1830
        %vm1833 = vcmp.lt.s32.totalorder %v259, 0
        %v1834 = vsub.s32 0, %v259
        %v1835 = vsel %vm1833, %v1834, %v259
        %v1836 = vshrl.u32 %v1835, 4
        %v1837 = vand.u32 %v1835, 15
        %v1838 = vsub.s32 0, %v1837
        %v1839 = vsel %vm1833, %v1838, %v1837
        %vm1840 = vcmp.lt.s32.totalorder %v260, 0
        %v1841 = vsub.s32 0, %v260
        %v1842 = vsel %vm1840, %v1841, %v260
        %v1843 = vshrl.u32 %v1842, 4
        %v1844 = vand.u32 %v1842, 15
        %v1845 = vsub.s32 0, %v1844
        %v1846 = vsel %vm1840, %v1845, %v1844
        %vm1847 = vcmp.lt.s32.totalorder %v261, 0
        %v1848 = vsub.s32 0, %v261
        %v1849 = vsel %vm1847, %v1848, %v261
        %v1850 = vshrl.u32 %v1849, 4
        %v1851 = vand.u32 %v1849, 15
        %v1852 = vsub.s32 0, %v1851
        %v1853 = vsel %vm1847, %v1852, %v1851
        %vm1854 = vcmp.lt.s32.totalorder %v262, 0
        %v1855 = vsub.s32 0, %v262
        %v1856 = vsel %vm1854, %v1855, %v262
        %v1857 = vshrl.u32 %v1856, 4
        %v1858 = vand.u32 %v1856, 15
        %v1859 = vsub.s32 0, %v1858
        %v1860 = vsel %vm1854, %v1859, %v1858
        %vm1861 = vcmp.lt.s32.totalorder %v263, 0
        %v1862 = vsub.s32 0, %v263
        %v1863 = vsel %vm1861, %v1862, %v263
        %v1864 = vshrl.u32 %v1863, 4
        %v1865 = vand.u32 %v1863, 15
        %v1866 = vsub.s32 0, %v1865
        %v1867 = vsel %vm1861, %v1866, %v1865
        %vm1868 = vcmp.lt.s32.totalorder %v264, 0
        %v1869 = vsub.s32 0, %v264
        %v1870 = vsel %vm1868, %v1869, %v264
        %v1871 = vshrl.u32 %v1870, 4
        %v1872 = vand.u32 %v1870, 15
        %v1873 = vsub.s32 0, %v1872
        %v1874 = vsel %vm1868, %v1873, %v1872
        %vm1875 = vcmp.lt.s32.totalorder %v265, 0
        %v1876 = vsub.s32 0, %v265
        %v1877 = vsel %vm1875, %v1876, %v265
        %v1878 = vshrl.u32 %v1877, 4
        %v1879 = vand.u32 %v1877, 15
        %v1880 = vsub.s32 0, %v1879
        %v1881 = vsel %vm1875, %v1880, %v1879
        %vm1882 = vcmp.lt.s32.totalorder %v266, 0
        %v1883 = vsub.s32 0, %v266
        %v1884 = vsel %vm1882, %v1883, %v266
        %v1885 = vshrl.u32 %v1884, 4
        %v1886 = vand.u32 %v1884, 15
        %v1887 = vsub.s32 0, %v1886
        %v1888 = vsel %vm1882, %v1887, %v1886
        %vm1889 = vcmp.lt.s32.totalorder %v267, 0
        %v1890 = vsub.s32 0, %v267
        %v1891 = vsel %vm1889, %v1890, %v267
        %v1892 = vshrl.u32 %v1891, 4
        %v1893 = vand.u32 %v1891, 15
        %v1894 = vsub.s32 0, %v1893
        %v1895 = vsel %vm1889, %v1894, %v1893
        %vm1896 = vcmp.lt.s32.totalorder %v268, 0
        %v1897 = vsub.s32 0, %v268
        %v1898 = vsel %vm1896, %v1897, %v268
        %v1899 = vshrl.u32 %v1898, 4
        %v1900 = vand.u32 %v1898, 15
        %v1901 = vsub.s32 0, %v1900
        %v1902 = vsel %vm1896, %v1901, %v1900
        %vm1903 = vcmp.lt.s32.totalorder %v269, 0
        %v1904 = vsub.s32 0, %v269
        %v1905 = vsel %vm1903, %v1904, %v269
        %v1906 = vshrl.u32 %v1905, 4
        %v1907 = vand.u32 %v1905, 15
        %v1908 = vsub.s32 0, %v1907
        %v1909 = vsel %vm1903, %v1908, %v1907
        %vm1910 = vcmp.lt.s32.totalorder %v270, 0
        %v1911 = vsub.s32 0, %v270
        %v1912 = vsel %vm1910, %v1911, %v270
        %v1913 = vshrl.u32 %v1912, 4
        %v1914 = vand.u32 %v1912, 15
        %v1915 = vsub.s32 0, %v1914
        %v1916 = vsel %vm1910, %v1915, %v1914
        %vm1917 = vcmp.lt.s32.totalorder %v271, 0
        %v1918 = vsub.s32 0, %v271
        %v1919 = vsel %vm1917, %v1918, %v271
        %v1920 = vshrl.u32 %v1919, 4
        %v1921 = vand.u32 %v1919, 15
        %v1922 = vsub.s32 0, %v1921
        %v1923 = vsel %vm1917, %v1922, %v1921
        %vm1924 = vcmp.lt.s32.totalorder %v272, 0
        %v1925 = vsub.s32 0, %v272
        %v1926 = vsel %vm1924, %v1925, %v272
        %v1927 = vshrl.u32 %v1926, 4
        %v1928 = vand.u32 %v1926, 15
        %v1929 = vsub.s32 0, %v1928
        %v1930 = vsel %vm1924, %v1929, %v1928
        %vm1931 = vcmp.lt.s32.totalorder %v273, 0
        %v1932 = vsub.s32 0, %v273
        %v1933 = vsel %vm1931, %v1932, %v273
        %v1934 = vshrl.u32 %v1933, 4
        %v1935 = vand.u32 %v1933, 15
        %v1936 = vsub.s32 0, %v1935
        %v1937 = vsel %vm1931, %v1936, %v1935
        %vm1938 = vcmp.lt.s32.totalorder %v274, 0
        %v1939 = vsub.s32 0, %v274
        %v1940 = vsel %vm1938, %v1939, %v274
        %v1941 = vshrl.u32 %v1940, 4
        %v1942 = vand.u32 %v1940, 15
        %v1943 = vsub.s32 0, %v1942
        %v1944 = vsel %vm1938, %v1943, %v1942
        %vm1945 = vcmp.lt.s32.totalorder %v275, 0
        %v1946 = vsub.s32 0, %v275
        %v1947 = vsel %vm1945, %v1946, %v275
        %v1948 = vshrl.u32 %v1947, 4
        %v1949 = vand.u32 %v1947, 15
        %v1950 = vsub.s32 0, %v1949
        %v1951 = vsel %vm1945, %v1950, %v1949
        %vm1952 = vcmp.lt.s32.totalorder %v276, 0
        %v1953 = vsub.s32 0, %v276
        %v1954 = vsel %vm1952, %v1953, %v276
        %v1955 = vshrl.u32 %v1954, 4
        %v1956 = vand.u32 %v1954, 15
        %v1957 = vsub.s32 0, %v1956
        %v1958 = vsel %vm1952, %v1957, %v1956
        %vm1959 = vcmp.lt.s32.totalorder %v277, 0
        %v1960 = vsub.s32 0, %v277
        %v1961 = vsel %vm1959, %v1960, %v277
        %v1962 = vshrl.u32 %v1961, 4
        %v1963 = vand.u32 %v1961, 15
        %v1964 = vsub.s32 0, %v1963
        %v1965 = vsel %vm1959, %v1964, %v1963
        %vm1966 = vcmp.lt.s32.totalorder %v278, 0
        %v1967 = vsub.s32 0, %v278
        %v1968 = vsel %vm1966, %v1967, %v278
        %v1969 = vshrl.u32 %v1968, 4
        %v1970 = vand.u32 %v1968, 15
        %v1971 = vsub.s32 0, %v1970
        %v1972 = vsel %vm1966, %v1971, %v1970
        %vm1973 = vcmp.lt.s32.totalorder %v279, 0
        %v1974 = vsub.s32 0, %v279
        %v1975 = vsel %vm1973, %v1974, %v279
        %v1976 = vshrl.u32 %v1975, 4
        %v1977 = vand.u32 %v1975, 15
        %v1978 = vsub.s32 0, %v1977
        %v1979 = vsel %vm1973, %v1978, %v1977
        %vm1980 = vcmp.ne.s32.totalorder %v1762, 0
        %vm1981 = vcmp.ne.s32.totalorder %v1769, 0
        %vm1982 = vcmp.ne.s32.totalorder %v1776, 0
        %vm1983 = vcmp.ne.s32.totalorder %v1783, 0
        %vm1984 = vcmp.ne.s32.totalorder %v1790, 0
        %vm1985 = vcmp.ne.s32.totalorder %v1797, 0
        %vm1986 = vcmp.ne.s32.totalorder %v1804, 0
        %vm1987 = vcmp.ne.s32.totalorder %v1811, 0
        %vm1988 = vcmp.ne.s32.totalorder %v1818, 0
        %vm1989 = vcmp.ne.s32.totalorder %v1825, 0
        %vm1990 = vcmp.ne.s32.totalorder %v1832, 0
        %vm1991 = vcmp.ne.s32.totalorder %v1839, 0
        %vm1992 = vcmp.ne.s32.totalorder %v1846, 0
        %vm1993 = vcmp.ne.s32.totalorder %v1853, 0
        %vm1994 = vcmp.ne.s32.totalorder %v1860, 0
        %vm1995 = vcmp.ne.s32.totalorder %v1867, 0
        %vm1996 = vcmp.ne.s32.totalorder %v1874, 0
        %vm1997 = vcmp.ne.s32.totalorder %v1881, 0
        %vm1998 = vcmp.ne.s32.totalorder %v1888, 0
        %vm1999 = vcmp.ne.s32.totalorder %v1895, 0
        %vm2000 = vcmp.ne.s32.totalorder %v1902, 0
        %vm2001 = vcmp.ne.s32.totalorder %v1909, 0
        %vm2002 = vcmp.ne.s32.totalorder %v1916, 0
        %vm2003 = vcmp.ne.s32.totalorder %v1923, 0
        %vm2004 = vcmp.ne.s32.totalorder %v1930, 0
        %vm2005 = vcmp.ne.s32.totalorder %v1937, 0
        %vm2006 = vcmp.ne.s32.totalorder %v1944, 0
        %vm2007 = vcmp.ne.s32.totalorder %v1951, 0
        %vm2008 = vcmp.ne.s32.totalorder %v1958, 0
        %vm2009 = vcmp.ne.s32.totalorder %v1965, 0
        %vm2010 = vcmp.ne.s32.totalorder %v1972, 0
        %vm2011 = vcmp.ne.s32.totalorder %v1979, 0
        %vm2012 = vcmp.lt.s32.totalorder %v1762, 0
        %vm2013 = vcmp.lt.s32.totalorder %v1769, 0
        %vm2014 = vcmp.lt.s32.totalorder %v1776, 0
        %vm2015 = vcmp.lt.s32.totalorder %v1783, 0
        %vm2016 = vcmp.lt.s32.totalorder %v1790, 0
        %vm2017 = vcmp.lt.s32.totalorder %v1797, 0
        %vm2018 = vcmp.lt.s32.totalorder %v1804, 0
        %vm2019 = vcmp.lt.s32.totalorder %v1811, 0
        %vm2020 = vcmp.lt.s32.totalorder %v1818, 0
        %vm2021 = vcmp.lt.s32.totalorder %v1825, 0
        %vm2022 = vcmp.lt.s32.totalorder %v1832, 0
        %vm2023 = vcmp.lt.s32.totalorder %v1839, 0
        %vm2024 = vcmp.lt.s32.totalorder %v1846, 0
        %vm2025 = vcmp.lt.s32.totalorder %v1853, 0
        %vm2026 = vcmp.lt.s32.totalorder %v1860, 0
        %vm2027 = vcmp.lt.s32.totalorder %v1867, 0
        %vm2028 = vcmp.lt.s32.totalorder %v1874, 0
        %vm2029 = vcmp.lt.s32.totalorder %v1881, 0
        %vm2030 = vcmp.lt.s32.totalorder %v1888, 0
        %vm2031 = vcmp.lt.s32.totalorder %v1895, 0
        %vm2032 = vcmp.lt.s32.totalorder %v1902, 0
        %vm2033 = vcmp.lt.s32.totalorder %v1909, 0
        %vm2034 = vcmp.lt.s32.totalorder %v1916, 0
        %vm2035 = vcmp.lt.s32.totalorder %v1923, 0
        %vm2036 = vcmp.lt.s32.totalorder %v1930, 0
        %vm2037 = vcmp.lt.s32.totalorder %v1937, 0
        %vm2038 = vcmp.lt.s32.totalorder %v1944, 0
        %vm2039 = vcmp.lt.s32.totalorder %v1951, 0
        %vm2040 = vcmp.lt.s32.totalorder %v1958, 0
        %vm2041 = vcmp.lt.s32.totalorder %v1965, 0
        %vm2042 = vcmp.lt.s32.totalorder %v1972, 0
        %vm2043 = vcmp.lt.s32.totalorder %v1979, 0
        %vm2044 = vmand %vm2012, %vm1980
        %vm2045 = vmand %vm2013, %vm1981
        %vm2046 = vmand %vm2014, %vm1982
        %vm2047 = vmand %vm2015, %vm1983
        %vm2048 = vmand %vm2016, %vm1984
        %vm2049 = vmand %vm2017, %vm1985
        %vm2050 = vmand %vm2018, %vm1986
        %vm2051 = vmand %vm2019, %vm1987
        %vm2052 = vmand %vm2020, %vm1988
        %vm2053 = vmand %vm2021, %vm1989
        %vm2054 = vmand %vm2022, %vm1990
        %vm2055 = vmand %vm2023, %vm1991
        %vm2056 = vmand %vm2024, %vm1992
        %vm2057 = vmand %vm2025, %vm1993
        %vm2058 = vmand %vm2026, %vm1994
        %vm2059 = vmand %vm2027, %vm1995
        %vm2060 = vmand %vm2028, %vm1996
        %vm2061 = vmand %vm2029, %vm1997
        %vm2062 = vmand %vm2030, %vm1998
        %vm2063 = vmand %vm2031, %vm1999
        %vm2064 = vmand %vm2032, %vm2000
        %vm2065 = vmand %vm2033, %vm2001
        %vm2066 = vmand %vm2034, %vm2002
        %vm2067 = vmand %vm2035, %vm2003
        %vm2068 = vmand %vm2036, %vm2004
        %vm2069 = vmand %vm2037, %vm2005
        %vm2070 = vmand %vm2038, %vm2006
        %vm2071 = vmand %vm2039, %vm2007
        %vm2072 = vmand %vm2040, %vm2008
        %vm2073 = vmand %vm2041, %vm2009
        %vm2074 = vmand %vm2042, %vm2010
        %vm2075 = vmand %vm2043, %vm2011
        %v2076 = vadd.s32 %v1762, 16
        %v2077 = vadd.s32 %v1769, 16
        %v2078 = vadd.s32 %v1776, 16
        %v2079 = vadd.s32 %v1783, 16
        %v2080 = vadd.s32 %v1790, 16
        %v2081 = vadd.s32 %v1797, 16
        %v2082 = vadd.s32 %v1804, 16
        %v2083 = vadd.s32 %v1811, 16
        %v2084 = vadd.s32 %v1818, 16
        %v2085 = vadd.s32 %v1825, 16
        %v2086 = vadd.s32 %v1832, 16
        %v2087 = vadd.s32 %v1839, 16
        %v2088 = vadd.s32 %v1846, 16
        %v2089 = vadd.s32 %v1853, 16
        %v2090 = vadd.s32 %v1860, 16
        %v2091 = vadd.s32 %v1867, 16
        %v2092 = vadd.s32 %v1874, 16
        %v2093 = vadd.s32 %v1881, 16
        %v2094 = vadd.s32 %v1888, 16
        %v2095 = vadd.s32 %v1895, 16
        %v2096 = vadd.s32 %v1902, 16
        %v2097 = vadd.s32 %v1909, 16
        %v2098 = vadd.s32 %v1916, 16
        %v2099 = vadd.s32 %v1923, 16
        %v2100 = vadd.s32 %v1930, 16
        %v2101 = vadd.s32 %v1937, 16
        %v2102 = vadd.s32 %v1944, 16
        %v2103 = vadd.s32 %v1951, 16
        %v2104 = vadd.s32 %v1958, 16
        %v2105 = vadd.s32 %v1965, 16
        %v2106 = vadd.s32 %v1972, 16
        %v2107 = vadd.s32 %v1979, 16
        %v2108 = vsel %vm2044, %v2076, %v1762
        %v2109 = vsel %vm2045, %v2077, %v1769
        %v2110 = vsel %vm2046, %v2078, %v1776
        %v2111 = vsel %vm2047, %v2079, %v1783
        %v2112 = vsel %vm2048, %v2080, %v1790
        %v2113 = vsel %vm2049, %v2081, %v1797
        %v2114 = vsel %vm2050, %v2082, %v1804
        %v2115 = vsel %vm2051, %v2083, %v1811
        %v2116 = vsel %vm2052, %v2084, %v1818
        %v2117 = vsel %vm2053, %v2085, %v1825
        %v2118 = vsel %vm2054, %v2086, %v1832
        %v2119 = vsel %vm2055, %v2087, %v1839
        %v2120 = vsel %vm2056, %v2088, %v1846
        %v2121 = vsel %vm2057, %v2089, %v1853
        %v2122 = vsel %vm2058, %v2090, %v1860
        %v2123 = vsel %vm2059, %v2091, %v1867
        %v2124 = vsel %vm2060, %v2092, %v1874
        %v2125 = vsel %vm2061, %v2093, %v1881
        %v2126 = vsel %vm2062, %v2094, %v1888
        %v2127 = vsel %vm2063, %v2095, %v1895
        %v2128 = vsel %vm2064, %v2096, %v1902
        %v2129 = vsel %vm2065, %v2097, %v1909
        %v2130 = vsel %vm2066, %v2098, %v1916
        %v2131 = vsel %vm2067, %v2099, %v1923
        %v2132 = vsel %vm2068, %v2100, %v1930
        %v2133 = vsel %vm2069, %v2101, %v1937
        %v2134 = vsel %vm2070, %v2102, %v1944
        %v2135 = vsel %vm2071, %v2103, %v1951
        %v2136 = vsel %vm2072, %v2104, %v1958
        %v2137 = vsel %vm2073, %v2105, %v1965
        %v2138 = vsel %vm2074, %v2106, %v1972
        %v2139 = vsel %vm2075, %v2107, %v1979
        %vm2140 = vcmp.ne.s32.totalorder %v2108, 0
        %vm2141 = vcmp.ne.s32.totalorder %v2109, 0
        %vm2142 = vcmp.ne.s32.totalorder %v2110, 0
        %vm2143 = vcmp.ne.s32.totalorder %v2111, 0
        %vm2144 = vcmp.ne.s32.totalorder %v2112, 0
        %vm2145 = vcmp.ne.s32.totalorder %v2113, 0
        %vm2146 = vcmp.ne.s32.totalorder %v2114, 0
        %vm2147 = vcmp.ne.s32.totalorder %v2115, 0
        %vm2148 = vcmp.ne.s32.totalorder %v2116, 0
        %vm2149 = vcmp.ne.s32.totalorder %v2117, 0
        %vm2150 = vcmp.ne.s32.totalorder %v2118, 0
        %vm2151 = vcmp.ne.s32.totalorder %v2119, 0
        %vm2152 = vcmp.ne.s32.totalorder %v2120, 0
        %vm2153 = vcmp.ne.s32.totalorder %v2121, 0
        %vm2154 = vcmp.ne.s32.totalorder %v2122, 0
        %vm2155 = vcmp.ne.s32.totalorder %v2123, 0
        %vm2156 = vcmp.ne.s32.totalorder %v2124, 0
        %vm2157 = vcmp.ne.s32.totalorder %v2125, 0
        %vm2158 = vcmp.ne.s32.totalorder %v2126, 0
        %vm2159 = vcmp.ne.s32.totalorder %v2127, 0
        %vm2160 = vcmp.ne.s32.totalorder %v2128, 0
        %vm2161 = vcmp.ne.s32.totalorder %v2129, 0
        %vm2162 = vcmp.ne.s32.totalorder %v2130, 0
        %vm2163 = vcmp.ne.s32.totalorder %v2131, 0
        %vm2164 = vcmp.ne.s32.totalorder %v2132, 0
        %vm2165 = vcmp.ne.s32.totalorder %v2133, 0
        %vm2166 = vcmp.ne.s32.totalorder %v2134, 0
        %vm2167 = vcmp.ne.s32.totalorder %v2135, 0
        %vm2168 = vcmp.ne.s32.totalorder %v2136, 0
        %vm2169 = vcmp.ne.s32.totalorder %v2137, 0
        %vm2170 = vcmp.ne.s32.totalorder %v2138, 0
        %vm2171 = vcmp.ne.s32.totalorder %v2139, 0
        %v2172 = vrot.slane %v1052, 7
        %v2173 = vrot.slane %v1058, 7
        %v2174 = vrot.slane %v1064, 7
        %v2175 = vrot.slane %v1070, 7
        %v2176 = vrot.slane %v1076, 7
        %v2177 = vrot.slane %v1082, 7
        %v2178 = vrot.slane %v1088, 7
        %v2179 = vrot.slane %v1094, 7
        %v2180 = vrot.slane %v1100, 7
        %v2181 = vrot.slane %v1106, 7
        %v2182 = vrot.slane %v1112, 7
        %v2183 = vrot.slane %v1118, 7
        %v2184 = vrot.slane %v1124, 7
        %v2185 = vrot.slane %v1130, 7
        %v2186 = vrot.slane %v1136, 7
        %v2187 = vrot.slane %v1142, 7
        %v2188 = vrot.slane %v1148, 7
        %v2189 = vrot.slane %v1154, 7
        %v2190 = vrot.slane %v1160, 7
        %v2191 = vrot.slane %v1166, 7
        %v2192 = vrot.slane %v1172, 7
        %v2193 = vrot.slane %v1178, 7
        %v2194 = vrot.slane %v1184, 7
        %v2195 = vrot.slane %v1190, 7
        %v2196 = vrot.slane %v1196, 7
        %v2197 = vrot.slane %v1202, 7
        %v2198 = vrot.slane %v1208, 7
        %v2199 = vrot.slane %v1214, 7
        %v2200 = vrot.slane %v1220, 7
        %v2201 = vrot.slane %v1226, 7
        %v2202 = vrot.slane %v1232, 7
        %v2203 = vrot.slane %v1238, 7
        %vm2204 = vcmp.lt.s32.totalorder %v248, 1
        %v2205 = vsel %vm2204, %v2202, %v2203
        %v2206 = vsel %vm2204, %v2201, %v2202
        %v2207 = vsel %vm2204, %v2200, %v2201
        %v2208 = vsel %vm2204, %v2199, %v2200
        %v2209 = vsel %vm2204, %v2198, %v2199
        %v2210 = vsel %vm2204, %v2197, %v2198
        %v2211 = vsel %vm2204, %v2196, %v2197
        %v2212 = vsel %vm2204, %v2195, %v2196
        %v2213 = vsel %vm2204, %v2194, %v2195
        %v2214 = vsel %vm2204, %v2193, %v2194
        %v2215 = vsel %vm2204, %v2192, %v2193
        %v2216 = vsel %vm2204, %v2191, %v2192
        %v2217 = vsel %vm2204, %v2190, %v2191
        %v2218 = vsel %vm2204, %v2189, %v2190
        %v2219 = vsel %vm2204, %v2188, %v2189
        %v2220 = vsel %vm2204, %v2187, %v2188
        %v2221 = vsel %vm2204, %v2186, %v2187
        %v2222 = vsel %vm2204, %v2185, %v2186
        %v2223 = vsel %vm2204, %v2184, %v2185
        %v2224 = vsel %vm2204, %v2183, %v2184
        %v2225 = vsel %vm2204, %v2182, %v2183
        %v2226 = vsel %vm2204, %v2181, %v2182
        %v2227 = vsel %vm2204, %v2180, %v2181
        %v2228 = vsel %vm2204, %v2179, %v2180
        %v2229 = vsel %vm2204, %v2178, %v2179
        %v2230 = vsel %vm2204, %v2177, %v2178
        %v2231 = vsel %vm2204, %v2176, %v2177
        %v2232 = vsel %vm2204, %v2175, %v2176
        %v2233 = vsel %vm2204, %v2174, %v2175
        %v2234 = vsel %vm2204, %v2173, %v2174
        %v2235 = vsel %vm2204, %v2172, %v2173
        %v2236 = vsel %vm2204, %v2203, %v2172
        %v2237 = vsel %vm2140, 1, 0
        %v2238 = vsel %vm2141, 1, 0
        %v2239 = vsel %vm2142, 1, 0
        %v2240 = vsel %vm2143, 1, 0
        %v2241 = vsel %vm2144, 1, 0
        %v2242 = vsel %vm2145, 1, 0
        %v2243 = vsel %vm2146, 1, 0
        %v2244 = vsel %vm2147, 1, 0
        %v2245 = vsel %vm2148, 1, 0
        %v2246 = vsel %vm2149, 1, 0
        %v2247 = vsel %vm2150, 1, 0
        %v2248 = vsel %vm2151, 1, 0
        %v2249 = vsel %vm2152, 1, 0
        %v2250 = vsel %vm2153, 1, 0
        %v2251 = vsel %vm2154, 1, 0
        %v2252 = vsel %vm2155, 1, 0
        %v2253 = vsel %vm2156, 1, 0
        %v2254 = vsel %vm2157, 1, 0
        %v2255 = vsel %vm2158, 1, 0
        %v2256 = vsel %vm2159, 1, 0
        %v2257 = vsel %vm2160, 1, 0
        %v2258 = vsel %vm2161, 1, 0
        %v2259 = vsel %vm2162, 1, 0
        %v2260 = vsel %vm2163, 1, 0
        %v2261 = vsel %vm2164, 1, 0
        %v2262 = vsel %vm2165, 1, 0
        %v2263 = vsel %vm2166, 1, 0
        %v2264 = vsel %vm2167, 1, 0
        %v2265 = vsel %vm2168, 1, 0
        %v2266 = vsel %vm2169, 1, 0
        %v2267 = vsel %vm2170, 1, 0
        %v2268 = vsel %vm2171, 1, 0
        %vm2269 = vcmp.eq.s32.totalorder %v2237, 1
        %vm2270 = vcmp.eq.s32.totalorder %v2238, 1
        %vm2271 = vcmp.eq.s32.totalorder %v2239, 1
        %vm2272 = vcmp.eq.s32.totalorder %v2240, 1
        %vm2273 = vcmp.eq.s32.totalorder %v2241, 1
        %vm2274 = vcmp.eq.s32.totalorder %v2242, 1
        %vm2275 = vcmp.eq.s32.totalorder %v2243, 1
        %vm2276 = vcmp.eq.s32.totalorder %v2244, 1
        %vm2277 = vcmp.eq.s32.totalorder %v2245, 1
        %vm2278 = vcmp.eq.s32.totalorder %v2246, 1
        %vm2279 = vcmp.eq.s32.totalorder %v2247, 1
        %vm2280 = vcmp.eq.s32.totalorder %v2248, 1
        %vm2281 = vcmp.eq.s32.totalorder %v2249, 1
        %vm2282 = vcmp.eq.s32.totalorder %v2250, 1
        %vm2283 = vcmp.eq.s32.totalorder %v2251, 1
        %vm2284 = vcmp.eq.s32.totalorder %v2252, 1
        %vm2285 = vcmp.eq.s32.totalorder %v2253, 1
        %vm2286 = vcmp.eq.s32.totalorder %v2254, 1
        %vm2287 = vcmp.eq.s32.totalorder %v2255, 1
        %vm2288 = vcmp.eq.s32.totalorder %v2256, 1
        %vm2289 = vcmp.eq.s32.totalorder %v2257, 1
        %vm2290 = vcmp.eq.s32.totalorder %v2258, 1
        %vm2291 = vcmp.eq.s32.totalorder %v2259, 1
        %vm2292 = vcmp.eq.s32.totalorder %v2260, 1
        %vm2293 = vcmp.eq.s32.totalorder %v2261, 1
        %vm2294 = vcmp.eq.s32.totalorder %v2262, 1
        %vm2295 = vcmp.eq.s32.totalorder %v2263, 1
        %vm2296 = vcmp.eq.s32.totalorder %v2264, 1
        %vm2297 = vcmp.eq.s32.totalorder %v2265, 1
        %vm2298 = vcmp.eq.s32.totalorder %v2266, 1
        %vm2299 = vcmp.eq.s32.totalorder %v2267, 1
        %vm2300 = vcmp.eq.s32.totalorder %v2268, 1
        %v2301 = vsel %vm2269, %v2236, 0.0
        %v2302 = vsel %vm2270, %v2235, 0.0
        %v2303 = vsel %vm2271, %v2234, 0.0
        %v2304 = vsel %vm2272, %v2233, 0.0
        %v2305 = vsel %vm2273, %v2232, 0.0
        %v2306 = vsel %vm2274, %v2231, 0.0
        %v2307 = vsel %vm2275, %v2230, 0.0
        %v2308 = vsel %vm2276, %v2229, 0.0
        %v2309 = vsel %vm2277, %v2228, 0.0
        %v2310 = vsel %vm2278, %v2227, 0.0
        %v2311 = vsel %vm2279, %v2226, 0.0
        %v2312 = vsel %vm2280, %v2225, 0.0
        %v2313 = vsel %vm2281, %v2224, 0.0
        %v2314 = vsel %vm2282, %v2223, 0.0
        %v2315 = vsel %vm2283, %v2222, 0.0
        %v2316 = vsel %vm2284, %v2221, 0.0
        %v2317 = vsel %vm2285, %v2220, 0.0
        %v2318 = vsel %vm2286, %v2219, 0.0
        %v2319 = vsel %vm2287, %v2218, 0.0
        %v2320 = vsel %vm2288, %v2217, 0.0
        %v2321 = vsel %vm2289, %v2216, 0.0
        %v2322 = vsel %vm2290, %v2215, 0.0
        %v2323 = vsel %vm2291, %v2214, 0.0
        %v2324 = vsel %vm2292, %v2213, 0.0
        %v2325 = vsel %vm2293, %v2212, 0.0
        %v2326 = vsel %vm2294, %v2211, 0.0
        %v2327 = vsel %vm2295, %v2210, 0.0
        %v2328 = vsel %vm2296, %v2209, 0.0
        %v2329 = vsel %vm2297, %v2208, 0.0
        %v2330 = vsel %vm2298, %v2207, 0.0
        %v2331 = vsel %vm2299, %v2206, 0.0
        %v2332 = vsel %vm2300, %v2205, 0.0
        %vm2333 = vcmp.ne.s32.totalorder %v2108, 15
        %vm2334 = vcmp.ne.s32.totalorder %v2109, 15
        %vm2335 = vcmp.ne.s32.totalorder %v2110, 15
        %vm2336 = vcmp.ne.s32.totalorder %v2111, 15
        %vm2337 = vcmp.ne.s32.totalorder %v2112, 15
        %vm2338 = vcmp.ne.s32.totalorder %v2113, 15
        %vm2339 = vcmp.ne.s32.totalorder %v2114, 15
        %vm2340 = vcmp.ne.s32.totalorder %v2115, 15
        %vm2341 = vcmp.ne.s32.totalorder %v2116, 15
        %vm2342 = vcmp.ne.s32.totalorder %v2117, 15
        %vm2343 = vcmp.ne.s32.totalorder %v2118, 15
        %vm2344 = vcmp.ne.s32.totalorder %v2119, 15
        %vm2345 = vcmp.ne.s32.totalorder %v2120, 15
        %vm2346 = vcmp.ne.s32.totalorder %v2121, 15
        %vm2347 = vcmp.ne.s32.totalorder %v2122, 15
        %vm2348 = vcmp.ne.s32.totalorder %v2123, 15
        %vm2349 = vcmp.ne.s32.totalorder %v2124, 15
        %vm2350 = vcmp.ne.s32.totalorder %v2125, 15
        %vm2351 = vcmp.ne.s32.totalorder %v2126, 15
        %vm2352 = vcmp.ne.s32.totalorder %v2127, 15
        %vm2353 = vcmp.ne.s32.totalorder %v2128, 15
        %vm2354 = vcmp.ne.s32.totalorder %v2129, 15
        %vm2355 = vcmp.ne.s32.totalorder %v2130, 15
        %vm2356 = vcmp.ne.s32.totalorder %v2131, 15
        %vm2357 = vcmp.ne.s32.totalorder %v2132, 15
        %vm2358 = vcmp.ne.s32.totalorder %v2133, 15
        %vm2359 = vcmp.ne.s32.totalorder %v2134, 15
        %vm2360 = vcmp.ne.s32.totalorder %v2135, 15
        %vm2361 = vcmp.ne.s32.totalorder %v2136, 15
        %vm2362 = vcmp.ne.s32.totalorder %v2137, 15
        %vm2363 = vcmp.ne.s32.totalorder %v2138, 15
        %vm2364 = vcmp.ne.s32.totalorder %v2139, 15
        %v2365 = vrot.slane %v1566, 1
        %v2366 = vrot.slane %v1572, 1
        %v2367 = vrot.slane %v1578, 1
        %v2368 = vrot.slane %v1584, 1
        %v2369 = vrot.slane %v1590, 1
        %v2370 = vrot.slane %v1596, 1
        %v2371 = vrot.slane %v1602, 1
        %v2372 = vrot.slane %v1608, 1
        %v2373 = vrot.slane %v1614, 1
        %v2374 = vrot.slane %v1620, 1
        %v2375 = vrot.slane %v1626, 1
        %v2376 = vrot.slane %v1632, 1
        %v2377 = vrot.slane %v1638, 1
        %v2378 = vrot.slane %v1644, 1
        %v2379 = vrot.slane %v1650, 1
        %v2380 = vrot.slane %v1656, 1
        %v2381 = vrot.slane %v1662, 1
        %v2382 = vrot.slane %v1668, 1
        %v2383 = vrot.slane %v1674, 1
        %v2384 = vrot.slane %v1680, 1
        %v2385 = vrot.slane %v1686, 1
        %v2386 = vrot.slane %v1692, 1
        %v2387 = vrot.slane %v1698, 1
        %v2388 = vrot.slane %v1704, 1
        %v2389 = vrot.slane %v1710, 1
        %v2390 = vrot.slane %v1716, 1
        %v2391 = vrot.slane %v1722, 1
        %v2392 = vrot.slane %v1728, 1
        %v2393 = vrot.slane %v1734, 1
        %v2394 = vrot.slane %v1740, 1
        %v2395 = vrot.slane %v1746, 1
        %v2396 = vrot.slane %v1752, 1
        %vm2397 = vcmp.lt.s32.totalorder %v248, 7
        %v2398 = vsel %vm2397, %v2395, %v2396
        %v2399 = vsel %vm2397, %v2394, %v2395
        %v2400 = vsel %vm2397, %v2393, %v2394
        %v2401 = vsel %vm2397, %v2392, %v2393
        %v2402 = vsel %vm2397, %v2391, %v2392
        %v2403 = vsel %vm2397, %v2390, %v2391
        %v2404 = vsel %vm2397, %v2389, %v2390
        %v2405 = vsel %vm2397, %v2388, %v2389
        %v2406 = vsel %vm2397, %v2387, %v2388
        %v2407 = vsel %vm2397, %v2386, %v2387
        %v2408 = vsel %vm2397, %v2385, %v2386
        %v2409 = vsel %vm2397, %v2384, %v2385
        %v2410 = vsel %vm2397, %v2383, %v2384
        %v2411 = vsel %vm2397, %v2382, %v2383
        %v2412 = vsel %vm2397, %v2381, %v2382
        %v2413 = vsel %vm2397, %v2380, %v2381
        %v2414 = vsel %vm2397, %v2379, %v2380
        %v2415 = vsel %vm2397, %v2378, %v2379
        %v2416 = vsel %vm2397, %v2377, %v2378
        %v2417 = vsel %vm2397, %v2376, %v2377
        %v2418 = vsel %vm2397, %v2375, %v2376
        %v2419 = vsel %vm2397, %v2374, %v2375
        %v2420 = vsel %vm2397, %v2373, %v2374
        %v2421 = vsel %vm2397, %v2372, %v2373
        %v2422 = vsel %vm2397, %v2371, %v2372
        %v2423 = vsel %vm2397, %v2370, %v2371
        %v2424 = vsel %vm2397, %v2369, %v2370
        %v2425 = vsel %vm2397, %v2368, %v2369
        %v2426 = vsel %vm2397, %v2367, %v2368
        %v2427 = vsel %vm2397, %v2366, %v2367
        %v2428 = vsel %vm2397, %v2365, %v2366
        %v2429 = vsel %vm2397, %v2396, %v2365
        %v2430 = vsel %vm2333, 1, 0
        %v2431 = vsel %vm2334, 1, 0
        %v2432 = vsel %vm2335, 1, 0
        %v2433 = vsel %vm2336, 1, 0
        %v2434 = vsel %vm2337, 1, 0
        %v2435 = vsel %vm2338, 1, 0
        %v2436 = vsel %vm2339, 1, 0
        %v2437 = vsel %vm2340, 1, 0
        %v2438 = vsel %vm2341, 1, 0
        %v2439 = vsel %vm2342, 1, 0
        %v2440 = vsel %vm2343, 1, 0
        %v2441 = vsel %vm2344, 1, 0
        %v2442 = vsel %vm2345, 1, 0
        %v2443 = vsel %vm2346, 1, 0
        %v2444 = vsel %vm2347, 1, 0
        %v2445 = vsel %vm2348, 1, 0
        %v2446 = vsel %vm2349, 1, 0
        %v2447 = vsel %vm2350, 1, 0
        %v2448 = vsel %vm2351, 1, 0
        %v2449 = vsel %vm2352, 1, 0
        %v2450 = vsel %vm2353, 1, 0
        %v2451 = vsel %vm2354, 1, 0
        %v2452 = vsel %vm2355, 1, 0
        %v2453 = vsel %vm2356, 1, 0
        %v2454 = vsel %vm2357, 1, 0
        %v2455 = vsel %vm2358, 1, 0
        %v2456 = vsel %vm2359, 1, 0
        %v2457 = vsel %vm2360, 1, 0
        %v2458 = vsel %vm2361, 1, 0
        %v2459 = vsel %vm2362, 1, 0
        %v2460 = vsel %vm2363, 1, 0
        %v2461 = vsel %vm2364, 1, 0
        %vm2462 = vcmp.eq.s32.totalorder %v2430, 1
        %vm2463 = vcmp.eq.s32.totalorder %v2431, 1
        %vm2464 = vcmp.eq.s32.totalorder %v2432, 1
        %vm2465 = vcmp.eq.s32.totalorder %v2433, 1
        %vm2466 = vcmp.eq.s32.totalorder %v2434, 1
        %vm2467 = vcmp.eq.s32.totalorder %v2435, 1
        %vm2468 = vcmp.eq.s32.totalorder %v2436, 1
        %vm2469 = vcmp.eq.s32.totalorder %v2437, 1
        %vm2470 = vcmp.eq.s32.totalorder %v2438, 1
        %vm2471 = vcmp.eq.s32.totalorder %v2439, 1
        %vm2472 = vcmp.eq.s32.totalorder %v2440, 1
        %vm2473 = vcmp.eq.s32.totalorder %v2441, 1
        %vm2474 = vcmp.eq.s32.totalorder %v2442, 1
        %vm2475 = vcmp.eq.s32.totalorder %v2443, 1
        %vm2476 = vcmp.eq.s32.totalorder %v2444, 1
        %vm2477 = vcmp.eq.s32.totalorder %v2445, 1
        %vm2478 = vcmp.eq.s32.totalorder %v2446, 1
        %vm2479 = vcmp.eq.s32.totalorder %v2447, 1
        %vm2480 = vcmp.eq.s32.totalorder %v2448, 1
        %vm2481 = vcmp.eq.s32.totalorder %v2449, 1
        %vm2482 = vcmp.eq.s32.totalorder %v2450, 1
        %vm2483 = vcmp.eq.s32.totalorder %v2451, 1
        %vm2484 = vcmp.eq.s32.totalorder %v2452, 1
        %vm2485 = vcmp.eq.s32.totalorder %v2453, 1
        %vm2486 = vcmp.eq.s32.totalorder %v2454, 1
        %vm2487 = vcmp.eq.s32.totalorder %v2455, 1
        %vm2488 = vcmp.eq.s32.totalorder %v2456, 1
        %vm2489 = vcmp.eq.s32.totalorder %v2457, 1
        %vm2490 = vcmp.eq.s32.totalorder %v2458, 1
        %vm2491 = vcmp.eq.s32.totalorder %v2459, 1
        %vm2492 = vcmp.eq.s32.totalorder %v2460, 1
        %vm2493 = vcmp.eq.s32.totalorder %v2461, 1
        %v2494 = vsel %vm2462, %v2428, 0.0
        %v2495 = vsel %vm2463, %v2427, 0.0
        %v2496 = vsel %vm2464, %v2426, 0.0
        %v2497 = vsel %vm2465, %v2425, 0.0
        %v2498 = vsel %vm2466, %v2424, 0.0
        %v2499 = vsel %vm2467, %v2423, 0.0
        %v2500 = vsel %vm2468, %v2422, 0.0
        %v2501 = vsel %vm2469, %v2421, 0.0
        %v2502 = vsel %vm2470, %v2420, 0.0
        %v2503 = vsel %vm2471, %v2419, 0.0
        %v2504 = vsel %vm2472, %v2418, 0.0
        %v2505 = vsel %vm2473, %v2417, 0.0
        %v2506 = vsel %vm2474, %v2416, 0.0
        %v2507 = vsel %vm2475, %v2415, 0.0
        %v2508 = vsel %vm2476, %v2414, 0.0
        %v2509 = vsel %vm2477, %v2413, 0.0
        %v2510 = vsel %vm2478, %v2412, 0.0
        %v2511 = vsel %vm2479, %v2411, 0.0
        %v2512 = vsel %vm2480, %v2410, 0.0
        %v2513 = vsel %vm2481, %v2409, 0.0
        %v2514 = vsel %vm2482, %v2408, 0.0
        %v2515 = vsel %vm2483, %v2407, 0.0
        %v2516 = vsel %vm2484, %v2406, 0.0
        %v2517 = vsel %vm2485, %v2405, 0.0
        %v2518 = vsel %vm2486, %v2404, 0.0
        %v2519 = vsel %vm2487, %v2403, 0.0
        %v2520 = vsel %vm2488, %v2402, 0.0
        %v2521 = vsel %vm2489, %v2401, 0.0
        %v2522 = vsel %vm2490, %v2400, 0.0
        %v2523 = vsel %vm2491, %v2399, 0.0
        %v2524 = vsel %vm2492, %v2398, 0.0
        %v2525 = vsel %vm2493, %v2429, 0.0
        %v2526 = vadd.f32 %v1054, %v2301
        %v2527 = vadd.f32 %v1060, %v2302
        %v2528 = vadd.f32 %v1066, %v2303
        %v2529 = vadd.f32 %v1072, %v2304
        %v2530 = vadd.f32 %v1078, %v2305
        %v2531 = vadd.f32 %v1084, %v2306
        %v2532 = vadd.f32 %v1090, %v2307
        %v2533 = vadd.f32 %v1096, %v2308
        %v2534 = vadd.f32 %v1102, %v2309
        %v2535 = vadd.f32 %v1108, %v2310
        %v2536 = vadd.f32 %v1114, %v2311
        %v2537 = vadd.f32 %v1120, %v2312
        %v2538 = vadd.f32 %v1126, %v2313
        %v2539 = vadd.f32 %v1132, %v2314
        %v2540 = vadd.f32 %v1138, %v2315
        %v2541 = vadd.f32 %v1144, %v2316
        %v2542 = vadd.f32 %v1150, %v2317
        %v2543 = vadd.f32 %v1156, %v2318
        %v2544 = vadd.f32 %v1162, %v2319
        %v2545 = vadd.f32 %v1168, %v2320
        %v2546 = vadd.f32 %v1174, %v2321
        %v2547 = vadd.f32 %v1180, %v2322
        %v2548 = vadd.f32 %v1186, %v2323
        %v2549 = vadd.f32 %v1192, %v2324
        %v2550 = vadd.f32 %v1198, %v2325
        %v2551 = vadd.f32 %v1204, %v2326
        %v2552 = vadd.f32 %v1210, %v2327
        %v2553 = vadd.f32 %v1216, %v2328
        %v2554 = vadd.f32 %v1222, %v2329
        %v2555 = vadd.f32 %v1228, %v2330
        %v2556 = vadd.f32 %v1234, %v2331
        %v2557 = vadd.f32 %v1240, %v2332
        %v2558 = vadd.f32 %v2526, %v2494
        %v2559 = vadd.f32 %v2527, %v2495
        %v2560 = vadd.f32 %v2528, %v2496
        %v2561 = vadd.f32 %v2529, %v2497
        %v2562 = vadd.f32 %v2530, %v2498
        %v2563 = vadd.f32 %v2531, %v2499
        %v2564 = vadd.f32 %v2532, %v2500
        %v2565 = vadd.f32 %v2533, %v2501
        %v2566 = vadd.f32 %v2534, %v2502
        %v2567 = vadd.f32 %v2535, %v2503
        %v2568 = vadd.f32 %v2536, %v2504
        %v2569 = vadd.f32 %v2537, %v2505
        %v2570 = vadd.f32 %v2538, %v2506
        %v2571 = vadd.f32 %v2539, %v2507
        %v2572 = vadd.f32 %v2540, %v2508
        %v2573 = vadd.f32 %v2541, %v2509
        %v2574 = vadd.f32 %v2542, %v2510
        %v2575 = vadd.f32 %v2543, %v2511
        %v2576 = vadd.f32 %v2544, %v2512
        %v2577 = vadd.f32 %v2545, %v2513
        %v2578 = vadd.f32 %v2546, %v2514
        %v2579 = vadd.f32 %v2547, %v2515
        %v2580 = vadd.f32 %v2548, %v2516
        %v2581 = vadd.f32 %v2549, %v2517
        %v2582 = vadd.f32 %v2550, %v2518
        %v2583 = vadd.f32 %v2551, %v2519
        %v2584 = vadd.f32 %v2552, %v2520
        %v2585 = vadd.f32 %v2553, %v2521
        %v2586 = vadd.f32 %v2554, %v2522
        %v2587 = vadd.f32 %v2555, %v2523
        %v2588 = vadd.f32 %v2556, %v2524
        %v2589 = vadd.f32 %v2557, %v2525
        %2590 = vst [vmem:[%s207] sm:$0xff] %v2558
        %2591 = vst [vmem:[%s207 + $0x8] sm:$0xff] %v1568
        %2592 = vst [vmem:[%s207 + $0x10] sm:$0xff] %v2559
        %2593 = vst [vmem:[%s207 + $0x18] sm:$0xff] %v1574
        %2594 = vst [vmem:[%s207 + $0x20] sm:$0xff] %v2560
        %2595 = vst [vmem:[%s207 + $0x28] sm:$0xff] %v1580
        %2596 = vst [vmem:[%s207 + $0x30] sm:$0xff] %v2561
        %2597 = vst [vmem:[%s207 + $0x38] sm:$0xff] %v1586
        %2598 = vst [vmem:[%s207 + $0x40] sm:$0xff] %v2562
        %2599 = vst [vmem:[%s207 + $0x48] sm:$0xff] %v1592
        %2600 = vst [vmem:[%s207 + $0x50] sm:$0xff] %v2563
        %2601 = vst [vmem:[%s207 + $0x58] sm:$0xff] %v1598
        %2602 = vst [vmem:[%s207 + $0x60] sm:$0xff] %v2564
        %2603 = vst [vmem:[%s207 + $0x68] sm:$0xff] %v1604
        %2604 = vst [vmem:[%s207 + $0x70] sm:$0xff] %v2565
        %2605 = vst [vmem:[%s207 + $0x78] sm:$0xff] %v1610
        %2606 = vst [vmem:[%s207 + $0x80] sm:$0xff] %v2566
        %2607 = vst [vmem:[%s207 + $0x88] sm:$0xff] %v1616
        %2608 = vst [vmem:[%s207 + $0x90] sm:$0xff] %v2567
        %2609 = vst [vmem:[%s207 + $0x98] sm:$0xff] %v1622
        %2610 = vst [vmem:[%s207 + $0xa0] sm:$0xff] %v2568
        %2611 = vst [vmem:[%s207 + $0xa8] sm:$0xff] %v1628
        %2612 = vst [vmem:[%s207 + $0xb0] sm:$0xff] %v2569
        %2613 = vst [vmem:[%s207 + $0xb8] sm:$0xff] %v1634
        %2614 = vst [vmem:[%s207 + $0xc0] sm:$0xff] %v2570
        %2615 = vst [vmem:[%s207 + $0xc8] sm:$0xff] %v1640
        %2616 = vst [vmem:[%s207 + $0xd0] sm:$0xff] %v2571
        %2617 = vst [vmem:[%s207 + $0xd8] sm:$0xff] %v1646
        %2618 = vst [vmem:[%s207 + $0xe0] sm:$0xff] %v2572
        %2619 = vst [vmem:[%s207 + $0xe8] sm:$0xff] %v1652
        %2620 = vst [vmem:[%s207 + $0xf0] sm:$0xff] %v2573
        %2621 = vst [vmem:[%s207 + $0xf8] sm:$0xff] %v1658
        %2622 = vst [vmem:[%s207 + $0x100] sm:$0xff] %v2574
        %2623 = vst [vmem:[%s207 + $0x108] sm:$0xff] %v1664
        %2624 = vst [vmem:[%s207 + $0x110] sm:$0xff] %v2575
        %2625 = vst [vmem:[%s207 + $0x118] sm:$0xff] %v1670
        %2626 = vst [vmem:[%s207 + $0x120] sm:$0xff] %v2576
        %2627 = vst [vmem:[%s207 + $0x128] sm:$0xff] %v1676
        %2628 = vst [vmem:[%s207 + $0x130] sm:$0xff] %v2577
        %2629 = vst [vmem:[%s207 + $0x138] sm:$0xff] %v1682
        %2630 = vst [vmem:[%s207 + $0x140] sm:$0xff] %v2578
        %2631 = vst [vmem:[%s207 + $0x148] sm:$0xff] %v1688
        %2632 = vst [vmem:[%s207 + $0x150] sm:$0xff] %v2579
        %2633 = vst [vmem:[%s207 + $0x158] sm:$0xff] %v1694
        %2634 = vst [vmem:[%s207 + $0x160] sm:$0xff] %v2580
        %2635 = vst [vmem:[%s207 + $0x168] sm:$0xff] %v1700
        %2636 = vst [vmem:[%s207 + $0x170] sm:$0xff] %v2581
        %2637 = vst [vmem:[%s207 + $0x178] sm:$0xff] %v1706
        %2638 = vst [vmem:[%s207 + $0x180] sm:$0xff] %v2582
        %2639 = vst [vmem:[%s207 + $0x188] sm:$0xff] %v1712
        %2640 = vst [vmem:[%s207 + $0x190] sm:$0xff] %v2583
        %2641 = vst [vmem:[%s207 + $0x198] sm:$0xff] %v1718
        %2642 = vst [vmem:[%s207 + $0x1a0] sm:$0xff] %v2584
        %2643 = vst [vmem:[%s207 + $0x1a8] sm:$0xff] %v1724
        %2644 = vst [vmem:[%s207 + $0x1b0] sm:$0xff] %v2585
        %2645 = vst [vmem:[%s207 + $0x1b8] sm:$0xff] %v1730
        %2646 = vst [vmem:[%s207 + $0x1c0] sm:$0xff] %v2586
        %2647 = vst [vmem:[%s207 + $0x1c8] sm:$0xff] %v1736
        %2648 = vst [vmem:[%s207 + $0x1d0] sm:$0xff] %v2587
        %2649 = vst [vmem:[%s207 + $0x1d8] sm:$0xff] %v1742
        %2650 = vst [vmem:[%s207 + $0x1e0] sm:$0xff] %v2588
        %2651 = vst [vmem:[%s207 + $0x1e8] sm:$0xff] %v1748
        %2652 = vst [vmem:[%s207 + $0x1f0] sm:$0xff] %v2589
        %2653 = vst [vmem:[%s207 + $0x1f8] sm:$0xff] %v1754
        %v2654 = vadd.f32 %v2558, %v2559
        %v2655 = vadd.f32 %v2654, %v2560
        %v2656 = vadd.f32 %v2655, %v2561
        %v2657 = vadd.f32 %v2656, %v2562
        %v2658 = vadd.f32 %v2657, %v2563
        %v2659 = vadd.f32 %v2658, %v2564
        %v2660 = vadd.f32 %v2659, %v2565
        %v2661 = vadd.f32 %v2660, %v2566
        %v2662 = vadd.f32 %v2661, %v2567
        %v2663 = vadd.f32 %v2662, %v2568
        %v2664 = vadd.f32 %v2663, %v2569
        %v2665 = vadd.f32 %v2664, %v2570
        %v2666 = vadd.f32 %v2665, %v2571
        %v2667 = vadd.f32 %v2666, %v2572
        %v2668 = vadd.f32 %v2667, %v2573
        %v2669 = vadd.f32 %v2668, %v2574
        %v2670 = vadd.f32 %v2669, %v2575
        %v2671 = vadd.f32 %v2670, %v2576
        %v2672 = vadd.f32 %v2671, %v2577
        %v2673 = vadd.f32 %v2672, %v2578
        %v2674 = vadd.f32 %v2673, %v2579
        %v2675 = vadd.f32 %v2674, %v2580
        %v2676 = vadd.f32 %v2675, %v2581
        %v2677 = vadd.f32 %v2676, %v2582
        %v2678 = vadd.f32 %v2677, %v2583
        %v2679 = vadd.f32 %v2678, %v2584
        %v2680 = vadd.f32 %v2679, %v2585
        %v2681 = vadd.f32 %v2680, %v2586
        %v2682 = vadd.f32 %v2681, %v2587
        %v2683 = vadd.f32 %v2682, %v2588
        %v2684 = vadd.f32 %v2683, %v2589
        %v2685 = vrot.slane %v2684, 4
        %v2686 = vadd.f32 %v2684, %v2685
        %v2687 = vrot.slane %v2686, 2
        %v2688 = vadd.f32 %v2686, %v2687
        %v2689 = vrot.slane %v2688, 1
        %v2690 = vadd.f32 %v2688, %v2689
        %v2691 = vadd.f32 %v1568, %v1574
        %v2692 = vadd.f32 %v2691, %v1580
        %v2693 = vadd.f32 %v2692, %v1586
        %v2694 = vadd.f32 %v2693, %v1592
        %v2695 = vadd.f32 %v2694, %v1598
        %v2696 = vadd.f32 %v2695, %v1604
        %v2697 = vadd.f32 %v2696, %v1610
        %v2698 = vadd.f32 %v2697, %v1616
        %v2699 = vadd.f32 %v2698, %v1622
        %v2700 = vadd.f32 %v2699, %v1628
        %v2701 = vadd.f32 %v2700, %v1634
        %v2702 = vadd.f32 %v2701, %v1640
        %v2703 = vadd.f32 %v2702, %v1646
        %v2704 = vadd.f32 %v2703, %v1652
        %v2705 = vadd.f32 %v2704, %v1658
        %v2706 = vadd.f32 %v2705, %v1664
        %v2707 = vadd.f32 %v2706, %v1670
        %v2708 = vadd.f32 %v2707, %v1676
        %v2709 = vadd.f32 %v2708, %v1682
        %v2710 = vadd.f32 %v2709, %v1688
        %v2711 = vadd.f32 %v2710, %v1694
        %v2712 = vadd.f32 %v2711, %v1700
        %v2713 = vadd.f32 %v2712, %v1706
        %v2714 = vadd.f32 %v2713, %v1712
        %v2715 = vadd.f32 %v2714, %v1718
        %v2716 = vadd.f32 %v2715, %v1724
        %v2717 = vadd.f32 %v2716, %v1730
        %v2718 = vadd.f32 %v2717, %v1736
        %v2719 = vadd.f32 %v2718, %v1742
        %v2720 = vadd.f32 %v2719, %v1748
        %v2721 = vadd.f32 %v2720, %v1754
        %v2722 = vrot.slane %v2721, 4
        %v2723 = vadd.f32 %v2721, %v2722
        %v2724 = vrot.slane %v2723, 2
        %v2725 = vadd.f32 %v2723, %v2724
        %v2726 = vrot.slane %v2725, 1
        %v2727 = vadd.f32 %v2725, %v2726
        %v2728 = vmul.f32 %v2558, %v2558
        %v2729 = vmul.f32 %v1568, %v1568
        %v2730 = vmul.f32 %v2559, %v2559
        %v2731 = vmul.f32 %v1574, %v1574
        %v2732 = vmul.f32 %v2560, %v2560
        %v2733 = vmul.f32 %v1580, %v1580
        %v2734 = vmul.f32 %v2561, %v2561
        %v2735 = vmul.f32 %v1586, %v1586
        %v2736 = vmul.f32 %v2562, %v2562
        %v2737 = vmul.f32 %v1592, %v1592
        %v2738 = vmul.f32 %v2563, %v2563
        %v2739 = vmul.f32 %v1598, %v1598
        %v2740 = vmul.f32 %v2564, %v2564
        %v2741 = vmul.f32 %v1604, %v1604
        %v2742 = vmul.f32 %v2565, %v2565
        %v2743 = vmul.f32 %v1610, %v1610
        %v2744 = vmul.f32 %v2566, %v2566
        %v2745 = vmul.f32 %v1616, %v1616
        %v2746 = vmul.f32 %v2567, %v2567
        %v2747 = vmul.f32 %v1622, %v1622
        %v2748 = vmul.f32 %v2568, %v2568
        %v2749 = vmul.f32 %v1628, %v1628
        %v2750 = vmul.f32 %v2569, %v2569
        %v2751 = vmul.f32 %v1634, %v1634
        %v2752 = vmul.f32 %v2570, %v2570
        %v2753 = vmul.f32 %v1640, %v1640
        %v2754 = vmul.f32 %v2571, %v2571
        %v2755 = vmul.f32 %v1646, %v1646
        %v2756 = vmul.f32 %v2572, %v2572
        %v2757 = vmul.f32 %v1652, %v1652
        %v2758 = vmul.f32 %v2573, %v2573
        %v2759 = vmul.f32 %v1658, %v1658
        %v2760 = vmul.f32 %v2574, %v2574
        %v2761 = vmul.f32 %v1664, %v1664
        %v2762 = vmul.f32 %v2575, %v2575
        %v2763 = vmul.f32 %v1670, %v1670
        %v2764 = vmul.f32 %v2576, %v2576
        %v2765 = vmul.f32 %v1676, %v1676
        %v2766 = vmul.f32 %v2577, %v2577
        %v2767 = vmul.f32 %v1682, %v1682
        %v2768 = vmul.f32 %v2578, %v2578
        %v2769 = vmul.f32 %v1688, %v1688
        %v2770 = vmul.f32 %v2579, %v2579
        %v2771 = vmul.f32 %v1694, %v1694
        %v2772 = vmul.f32 %v2580, %v2580
        %v2773 = vmul.f32 %v1700, %v1700
        %v2774 = vmul.f32 %v2581, %v2581
        %v2775 = vmul.f32 %v1706, %v1706
        %v2776 = vmul.f32 %v2582, %v2582
        %v2777 = vmul.f32 %v1712, %v1712
        %v2778 = vmul.f32 %v2583, %v2583
        %v2779 = vmul.f32 %v1718, %v1718
        %v2780 = vmul.f32 %v2584, %v2584
        %v2781 = vmul.f32 %v1724, %v1724
        %v2782 = vmul.f32 %v2585, %v2585
        %v2783 = vmul.f32 %v1730, %v1730
        %v2784 = vmul.f32 %v2586, %v2586
        %v2785 = vmul.f32 %v1736, %v1736
        %v2786 = vmul.f32 %v2587, %v2587
        %v2787 = vmul.f32 %v1742, %v1742
        %v2788 = vmul.f32 %v2588, %v2588
        %v2789 = vmul.f32 %v1748, %v1748
        %v2790 = vmul.f32 %v2589, %v2589
        %v2791 = vmul.f32 %v1754, %v1754
        %v2792 = vadd.f32 %v2728, %v2730
        %v2793 = vadd.f32 %v2792, %v2732
        %v2794 = vadd.f32 %v2793, %v2734
        %v2795 = vadd.f32 %v2794, %v2736
        %v2796 = vadd.f32 %v2795, %v2738
        %v2797 = vadd.f32 %v2796, %v2740
        %v2798 = vadd.f32 %v2797, %v2742
        %v2799 = vadd.f32 %v2798, %v2744
        %v2800 = vadd.f32 %v2799, %v2746
        %v2801 = vadd.f32 %v2800, %v2748
        %v2802 = vadd.f32 %v2801, %v2750
        %v2803 = vadd.f32 %v2802, %v2752
        %v2804 = vadd.f32 %v2803, %v2754
        %v2805 = vadd.f32 %v2804, %v2756
        %v2806 = vadd.f32 %v2805, %v2758
        %v2807 = vadd.f32 %v2806, %v2760
        %v2808 = vadd.f32 %v2807, %v2762
        %v2809 = vadd.f32 %v2808, %v2764
        %v2810 = vadd.f32 %v2809, %v2766
        %v2811 = vadd.f32 %v2810, %v2768
        %v2812 = vadd.f32 %v2811, %v2770
        %v2813 = vadd.f32 %v2812, %v2772
        %v2814 = vadd.f32 %v2813, %v2774
        %v2815 = vadd.f32 %v2814, %v2776
        %v2816 = vadd.f32 %v2815, %v2778
        %v2817 = vadd.f32 %v2816, %v2780
        %v2818 = vadd.f32 %v2817, %v2782
        %v2819 = vadd.f32 %v2818, %v2784
        %v2820 = vadd.f32 %v2819, %v2786
        %v2821 = vadd.f32 %v2820, %v2788
        %v2822 = vadd.f32 %v2821, %v2790
        %v2823 = vrot.slane %v2822, 4
        %v2824 = vadd.f32 %v2822, %v2823
        %v2825 = vrot.slane %v2824, 2
        %v2826 = vadd.f32 %v2824, %v2825
        %v2827 = vrot.slane %v2826, 1
        %v2828 = vadd.f32 %v2826, %v2827
        %v2829 = vadd.f32 %v2729, %v2731
        %v2830 = vadd.f32 %v2829, %v2733
        %v2831 = vadd.f32 %v2830, %v2735
        %v2832 = vadd.f32 %v2831, %v2737
        %v2833 = vadd.f32 %v2832, %v2739
        %v2834 = vadd.f32 %v2833, %v2741
        %v2835 = vadd.f32 %v2834, %v2743
        %v2836 = vadd.f32 %v2835, %v2745
        %v2837 = vadd.f32 %v2836, %v2747
        %v2838 = vadd.f32 %v2837, %v2749
        %v2839 = vadd.f32 %v2838, %v2751
        %v2840 = vadd.f32 %v2839, %v2753
        %v2841 = vadd.f32 %v2840, %v2755
        %v2842 = vadd.f32 %v2841, %v2757
        %v2843 = vadd.f32 %v2842, %v2759
        %v2844 = vadd.f32 %v2843, %v2761
        %v2845 = vadd.f32 %v2844, %v2763
        %v2846 = vadd.f32 %v2845, %v2765
        %v2847 = vadd.f32 %v2846, %v2767
        %v2848 = vadd.f32 %v2847, %v2769
        %v2849 = vadd.f32 %v2848, %v2771
        %v2850 = vadd.f32 %v2849, %v2773
        %v2851 = vadd.f32 %v2850, %v2775
        %v2852 = vadd.f32 %v2851, %v2777
        %v2853 = vadd.f32 %v2852, %v2779
        %v2854 = vadd.f32 %v2853, %v2781
        %v2855 = vadd.f32 %v2854, %v2783
        %v2856 = vadd.f32 %v2855, %v2785
        %v2857 = vadd.f32 %v2856, %v2787
        %v2858 = vadd.f32 %v2857, %v2789
        %v2859 = vadd.f32 %v2858, %v2791
        %v2860 = vrot.slane %v2859, 4
        %v2861 = vadd.f32 %v2859, %v2860
        %v2862 = vrot.slane %v2861, 2
        %v2863 = vadd.f32 %v2861, %v2862
        %v2864 = vrot.slane %v2863, 1
        %v2865 = vadd.f32 %v2863, %v2864
        %vm2866 = vcmask 1040384
        %v2867 = vsel %vm2866, %v2690, %v2828
        %v2868 = vsel %vm2866, %v2727, %v2865
        %vm2869 = vcmask 1041408
        %v2870 = vsel %vm2869, %v2867, 0.0
        %v2871 = vsel %vm2869, %v2868, 0.0
        %2872 = vst [vmem:[%s214] sm:$0xff] %v2870
        %2873 = vst [vmem:[%s214 + $0x8] sm:$0xff] %v2871
        %s2874 = sand.u32 %s80, 1
        %s2875 = scalar_lea.sflag [#allocation4], %s2874
        %s2876 = sand.u32 %s80, 1
        %s2877 = smul.addr %s2876, 512
        %s2878 = scalar_lea.vmem [#allocation7], %s2877
        %s2879 = sand.u32 %s106, 1
        %s2880 = scalar_lea.sflag [#allocation9], %s2879
        %s2881 = sand.u32 %s106, 1
        %s2882 = smul.addr %s2881, 16
        %s2883 = scalar_lea.vmem [#allocation8], %s2882
        // Predicated region
        $region37: #{tpu_custom_call.1} parent=27 // pred_check
          %p2884 = pneg %p90
        $region38: #{tpu_custom_call.1} parent=27 // pred_check_branch
          %2886 = sbr.rel (%p2884) target = $region40
        $region39: #{tpu_custom_call.1} parent=27 // pred_region
          %s2888 = ssub.s32 8192, 8192
          %2889 = vsyncadd %s2875, %s2888
          %s2890 = smul.addr %s25, 64
          %s2891 = smul.addr %s2890, 128
          %s2892 = scalar_lea.hbm %s2, %s2891
          %s2893 = sshll.u32 %s2878, 4
          %s2894 = int_to_ptr.vmem [resolvable:$true] %s2893
          %2899 = dma.vmem_to_hbm [thread:$0]  %s2894, 8192, %s2892, %s2875, 256, 256, 16
        $region40: #{tpu_custom_call.1} parent=27 // pred_fallthru
          _
        // Predicated region
        $region41: #{tpu_custom_call.1} parent=27 // pred_check
          %p2900 = pneg %p116
        $region42: #{tpu_custom_call.1} parent=27 // pred_check_branch
          %2902 = sbr.rel (%p2900) target = $region44
        $region43: #{tpu_custom_call.1} parent=27 // pred_region
          %s2904 = ssub.s32 256, 256
          %2905 = vsyncadd %s2880, %s2904
          %s2906 = smul.addr %s25, 2
          %s2907 = smul.addr %s2906, 128
          %s2908 = scalar_lea.hbm %s3, %s2907
          %s2910 = sshll.u32 %s2883, 4
          %s2911 = int_to_ptr.vmem [resolvable:$true] %s2910
          %2913 = dma.vmem_to_hbm [thread:$0]  %s2911, 256, %s2908, %s2880
        $region44: #{tpu_custom_call.1} parent=27 // pred_fallthru
          _
      $region28: #{tpu_custom_call.1} parent=5 // pred_fallthru
        _
      %p2914 = scmp.le.s32.totalorder 2, %s20
      // Predicated region
      $region45: #{tpu_custom_call.1} parent=5 // pred_check
        %p2915 = pneg %p2914
      $region46: #{tpu_custom_call.1} parent=5 // pred_check_branch
        %2917 = sbr.rel (%p2915) target = $region48
      $region47: #{tpu_custom_call.1} parent=5 // pred_region
        %s2918 = ssub.s32 %s20, 2
        // Predicated region
        $region49: #{tpu_custom_call.1} parent=47 // pred_check
          %p2919 = pneg %p96
        $region50: #{tpu_custom_call.1} parent=47 // pred_check_branch
          %2921 = sbr.rel (%p2919) target = $region52
        $region51: #{tpu_custom_call.1} parent=47 // pred_region
          %s2922 = sand.u32 %s81, 1
          %s2923 = scalar_lea.sflag [#allocation4], %s2922
          %s2924 = sand.u32 %s81, 1
          %s2925 = smul.addr %s2924, 512
          %s2926 = scalar_lea.vmem [#allocation7], %s2925
          %2927 = dma.done %s2923, 8192
        $region52: #{tpu_custom_call.1} parent=47 // pred_fallthru
          _
        // Predicated region
        $region53: #{tpu_custom_call.1} parent=47 // pred_check
          %p2928 = pneg %p122
        $region54: #{tpu_custom_call.1} parent=47 // pred_check_branch
          %2930 = sbr.rel (%p2928) target = $region56
        $region55: #{tpu_custom_call.1} parent=47 // pred_region
          %s2931 = sand.u32 %s107, 1
          %s2932 = scalar_lea.sflag [#allocation9], %s2931
          %s2933 = sand.u32 %s107, 1
          %s2934 = smul.addr %s2933, 16
          %s2935 = scalar_lea.vmem [#allocation8], %s2934
          %2936 = dma.done %s2932, 256
        $region56: #{tpu_custom_call.1} parent=47 // pred_fallthru
          _
      $region48: #{tpu_custom_call.1} parent=5 // pred_fallthru
        _
    $region6: #{tpu_custom_call.1} parent=1 // loop_footer
      %s24 = sadd.s32 1, %s20
    $region7: #{tpu_custom_call.1} parent=1 // loop_footer_branch
      %19 = sbr.rel target = $region3
    $region8: #{tpu_custom_call.1} parent=1 // loop_exit
      _
    %2937 = vsyncpa [#allocation3], 1
    %s2938 = scalar_lea.sflag [#allocation3], 1
    %2939 = vsyncpa %s2938, 1
    %2940 = vsyncpa [#allocation6], 1
    %2941 = vsyncpa [#allocation4], 1
    %s2942 = scalar_lea.sflag [#allocation4], 1
    %2943 = vsyncpa %s2942, 1
    %2944 = vsyncpa [#allocation9], 1
    %s2945 = scalar_lea.sflag [#allocation9], 1
    %2946 = vsyncpa %s2945, 1

</llo_original>
